<compile_context>
chip_gen: v7x
topology: tpu7x:2x2x1
jax: 0.10.0
libtpu: 0.0.40
codegen_flags: <defaults>
</compile_context>

<pallas_src>
import math
import functools

import jax
import jax.numpy as jnp
from jax.experimental import pallas as pl
from jax.experimental.pallas import tpu as pltpu

_EPS = 1e-5     # nn.LayerNorm default eps
_LANE = 128


# ----------------------------------------------------------------------------
# small in-kernel math helpers (all f32)
# ----------------------------------------------------------------------------
def _layernorm(x, w, b):
    mu = jnp.mean(x, axis=-1, keepdims=True)
    var = jnp.mean((x - mu) ** 2, axis=-1, keepdims=True)
    return (x - mu) * jax.lax.rsqrt(var + _EPS) * w + b


def _erf(x):
    # Abramowitz & Stegun 7.1.26 rational approximation, |err| <= 1.5e-7.
    a1, a2, a3, a4, a5 = (0.254829592, -0.284496736, 1.421413741,
                          -1.453152027, 1.061405429)
    p = 0.3275911
    s = jnp.where(x >= 0.0, 1.0, -1.0)
    ax = jnp.abs(x)
    t = 1.0 / (1.0 + p * ax)
    poly = ((((a5 * t + a4) * t + a3) * t + a2) * t + a1) * t
    return s * (1.0 - poly * jnp.exp(-ax * ax))


def _gelu_exact(x):
    return 0.5 * x * (1.0 + _erf(x * (1.0 / math.sqrt(2.0))))


def _mlp_act(x, kind):
    if kind == "relu":          # OSI default (act_layer=nn.ReLU)
        return jnp.maximum(x, 0.0)
    return _gelu_exact(x)       # act_layer=nn.GELU configs


# ----------------------------------------------------------------------------
# Fused kernel: conv stem matmul -> depth x transformer block -> pooled head.
# One grid step = one sample.  Everything stays VMEM-resident.
# ----------------------------------------------------------------------------
def osi_fused_kernel(x_ref, cw_ref, pref_ref,
                     ln1w_ref, ln1b_ref, wqkv_ref, bqkv_ref, wop_ref, bop_ref,
                     ln2w_ref, ln2b_ref, w1_ref, b1_ref, w2_ref, b2_ref,
                     nw_ref, nb_ref, fw_ref, fb_ref, hw_ref, hb_ref,
                     o_ref, *, num_heads, mlp_act):
    C = wop_ref.shape[-1]
    depth = ln1w_ref.shape[0]
    hd = C // num_heads
    scale = 1.0 / math.sqrt(hd)

    # --- conv stem (im2col matmul).  Row 0 of x is all-zeros, so after the
    # matmul token 0 is exactly pref[0] = cls_token + pos[0]; rows 1..L are
    # conv(x) + pos[1:].
    tok = jnp.dot(x_ref[...], cw_ref[...],
                  preferred_element_type=jnp.float32) + pref_ref[...]   # (L1, C)

    # depth is small & static -> unroll statically.
    # TODO(synk): for deep configs switch to lax.fori_loop with dynamic
    # leading-axis ref indexing (ln1w_ref[d], ...) to bound code size.
    for d in range(depth):
        # ------------------ multi-head self-attention -------------------
        h = _layernorm(tok, ln1w_ref[d], ln1b_ref[d])
        qkv = jnp.dot(h, wqkv_ref[d],
                      preferred_element_type=jnp.float32) + bqkv_ref[d]  # (L1, 3C)
        heads = []
        for i in range(num_heads):
            q = qkv[:, i * hd:(i + 1) * hd] * scale
            k = qkv[:, C + i * hd:C + (i + 1) * hd]
            v = qkv[:, 2 * C + i * hd:2 * C + (i + 1) * hd]
            s = jax.lax.dot_general(q, k, (((1,), (1,)), ((), ())),
                                    preferred_element_type=jnp.float32)  # (L1, L1)
            s = s - jnp.max(s, axis=-1, keepdims=True)
            p = jnp.exp(s)
            p = p * pl.reciprocal(jnp.sum(p, axis=-1, keepdims=True), approx=True)
            heads.append(jnp.dot(p, v, preferred_element_type=jnp.float32))
        attn = jnp.concatenate(heads, axis=-1)                           # (L1, C)
        # MHA out_proj and the extra proj Linear folded into one (C, C) matmul.
        attn = jnp.dot(attn, wop_ref[d],
                       preferred_element_type=jnp.float32) + bop_ref[d]
        tok = tok + attn

        # ------------------------------ MLP ------------------------------
        h2 = _layernorm(tok, ln2w_ref[d], ln2b_ref[d])
        h2 = jnp.dot(h2, w1_ref[d], preferred_element_type=jnp.float32) + b1_ref[d]
        h2 = _mlp_act(h2, mlp_act)
        h2 = jnp.dot(h2, w2_ref[d], preferred_element_type=jnp.float32) + b2_ref[d]
        tok = tok + h2

    # ------------------------------ head ---------------------------------
    xn = _layernorm(tok, nw_ref[...], nb_ref[...])
    n_tok = xn.shape[0] - 1
    pooled = jnp.sum(xn[1:, :], axis=0, keepdims=True) * (1.0 / n_tok)   # (1, C)
    pooled = _layernorm(pooled, fw_ref[...], fb_ref[...])
    res = jnp.dot(pooled, hw_ref[...],
                  preferred_element_type=jnp.float32) + hb_ref[...]      # (1, NCP)
    # lane-dense (8, 128) tile write; wrapper reads row 0.
    o_ref[...] = jnp.broadcast_to(res, o_ref.shape)


# ----------------------------------------------------------------------------
# Parameter construction (PyTorch-like shapes) and folding/stacking for kernel.
# ----------------------------------------------------------------------------
def init_params(key, embed_dim, hidden_dim, num_heads, depth,
                mlp_ratio=4.0, num_classes=1, k=7):
    C = hidden_dim
    H = int(hidden_dim * mlp_ratio)
    keys = jax.random.split(key, 4 + depth)

    def xavier(kk, shape):
        fan_out, fan_in = shape[0], shape[1]
        lim = math.sqrt(6.0 / (fan_in + fan_out))
        return jax.random.uniform(kk, shape, jnp.float32, -lim, lim)

    params = dict(
        # nn.Conv1d weight layout (c_out, c_in, k), init N(0, sqrt(2/(k*c_out)))
        conv_w=jax.random.normal(keys[0], (C, embed_dim, k), jnp.float32)
               * math.sqrt(2.0 / (k * C)),
        cls_token=jax.random.normal(keys[1], (1, 1, C), jnp.float32) * 0.02,
        pos_embed=jax.random.normal(keys[2], (1, 201, C), jnp.float32) * 0.02,
    )
    blocks = []
    for d in range(depth):
        bk = jax.random.split(keys[3 + d], 5)
        blocks.append(dict(
            ln1w=jnp.ones((C,), jnp.float32), ln1b=jnp.zeros((C,), jnp.float32),
            in_proj_w=xavier(bk[0], (3 * C, C)),            # MHA in_proj (3C, C)
            in_proj_b=jnp.zeros((3 * C,), jnp.float32),
            out_proj_w=xavier(bk[1], (C, C)), out_proj_b=jnp.zeros((C,), jnp.float32),
            proj_w=xavier(bk[2], (C, C)), proj_b=jnp.zeros((C,), jnp.float32),
            ln2w=jnp.ones((C,), jnp.float32), ln2b=jnp.zeros((C,), jnp.float32),
            fc1_w=xavier(bk[3], (H, C)), fc1_b=jnp.zeros((H,), jnp.float32),
            fc2_w=xavier(bk[4], (C, H)), fc2_b=jnp.zeros((C,), jnp.float32),
        ))
    params['blocks'] = blocks
    hk = keys[3 + depth]
    params.update(
        norm_w=jnp.ones((C,), jnp.float32), norm_b=jnp.zeros((C,), jnp.float32),
        fcn_w=jnp.ones((C,), jnp.float32), fcn_b=jnp.zeros((C,), jnp.float32),
        head_w=xavier(hk, (num_classes, C)),
        head_b=jnp.zeros((num_classes,), jnp.float32),
    )
    return params


def prepare_params(params, *, num_classes):
    """Fold / stack / pad PyTorch-layout params into kernel-friendly tensors."""
    C = params['pos_embed'].shape[-1]
    blocks = params['blocks']

    def stack(f):
        return jnp.stack([f(b) for b in blocks], axis=0)

    ncp = ((num_classes + _LANE - 1) // _LANE) * _LANE
    ncp = max(ncp, _LANE)
    head_w = jnp.zeros((C, ncp), jnp.float32).at[:, :num_classes].set(params['head_w'].T)
    head_b = jnp.zeros((1, ncp), jnp.float32).at[:, :num_classes].set(params['head_b'][None, :])

    prep = dict(
        # (c_out, c_in, k) -> (k*c_in, c_out) for the im2col matmul
        conv_w2d=jnp.transpose(params['conv_w'], (2, 1, 0)).reshape(-1, C),
        conv_k=int(params['conv_w'].shape[-1]),
        cls_token=params['cls_token'][0],                   # (1, C)
        pos_embed=params['pos_embed'][0],                   # (201, C)
        ln1w=stack(lambda b: b['ln1w'].reshape(1, C)),
        ln1b=stack(lambda b: b['ln1b'].reshape(1, C)),
        wqkv=stack(lambda b: b['in_proj_w'].T),             # (D, C, 3C)
        bqkv=stack(lambda b: b['in_proj_b'].reshape(1, -1)),
        # fold MHA out_proj and the extra proj Linear:
        #   y = a @ Wo^T @ Wp^T + (bo @ Wp^T + bp)
        wop=stack(lambda b: b['out_proj_w'].T @ b['proj_w'].T),
        bop=stack(lambda b: (b['out_proj_b'] @ b['proj_w'].T + b['proj_b']).reshape(1, C)),
        ln2w=stack(lambda b: b['ln2w'].reshape(1, C)),
        ln2b=stack(lambda b: b['ln2b'].reshape(1, C)),
        w1=stack(lambda b: b['fc1_w'].T),                   # (D, C, H)
        b1=stack(lambda b: b['fc1_b'].reshape(1, -1)),
        w2=stack(lambda b: b['fc2_w'].T),                   # (D, H, C)
        b2=stack(lambda b: b['fc2_b'].reshape(1, C)),
        norm_w=params['norm_w'].reshape(1, C), norm_b=params['norm_b'].reshape(1, C),
        fcn_w=params['fcn_w'].reshape(1, C), fcn_b=params['fcn_b'].reshape(1, C),
        head_w=head_w, head_b=head_b,
        num_classes=num_classes, ncp=ncp,
    )
    return prep


# ----------------------------------------------------------------------------
# Wrapper
# ----------------------------------------------------------------------------
def _im2col(x, k):
    # x: (B, L, c_in) -> (B, L, k*c_in) with 'same' (k//2) zero padding
    pad = k // 2
    L = x.shape[1]
    xp = jnp.pad(x, ((0, 0), (pad, pad), (0, 0)))
    cols = [xp[:, t:t + L, :] for t in range(k)]
    return jnp.concatenate(cols, axis=-1)


def _run_group(x, prep, *, embed_dim, hidden_dim, num_heads, mlp_act):
    """x: (G, L, embed_dim) stack of same-length samples -> (G, num_classes)."""
    G, L, _ = x.shape
    L1 = L + 1

    if embed_dim != hidden_dim:
        cols = _im2col(x, prep['conv_k'])                   # (G, L, k*c_in)
        cw = prep['conv_w2d']
    else:
        # no conv stem in the module; identity matmul keeps one kernel variant
        cols = x
        cw = jnp.eye(embed_dim, dtype=jnp.float32)
    kci = cols.shape[-1]
    # prepend a zero row so the stem matmul yields a zero token-0 slot
    cols = jnp.concatenate([jnp.zeros((G, 1, kci), cols.dtype), cols], axis=1)

    # F.interpolate(pos_embed, size=L1, mode='nearest'): src = floor(dst*201/L1)
    idx = (jnp.arange(L1) * 201) // L1
    pos = prep['pos_embed'][idx]                            # (L1, C)
    pref = jnp.concatenate([pos[0:1] + prep['cls_token'], pos[1:]], axis=0)

    weight_args = (cw, pref,
                   prep['ln1w'], prep['ln1b'], prep['wqkv'], prep['bqkv'],
                   prep['wop'], prep['bop'], prep['ln2w'], prep['ln2b'],
                   prep['w1'], prep['b1'], prep['w2'], prep['b2'],
                   prep['norm_w'], prep['norm_b'], prep['fcn_w'], prep['fcn_b'],
                   prep['head_w'], prep['head_b'])

    in_specs = [pl.BlockSpec((None, L1, kci), lambda g: (g, 0, 0))]
    for w in weight_args:   # full-array blocks, grid-invariant (fetched once)
        in_specs.append(pl.BlockSpec(w.shape, lambda g, _n=w.ndim: (0,) * _n))

    ncp = prep['ncp']
    out = pl.pallas_call(
        functools.partial(osi_fused_kernel, num_heads=num_heads, mlp_act=mlp_act),
        out_shape=jax.ShapeDtypeStruct((G, 8, ncp), jnp.float32),
        grid=(G,),
        in_specs=in_specs,
        out_specs=pl.BlockSpec((None, 8, ncp), lambda g: (g, 0, 0)),
        compiler_params=pltpu.CompilerParams(
            dimension_semantics=("parallel",)),
    )(cols, *weight_args)

    return out[:, 0, :prep['num_classes']]                  # (G, num_classes)


def osi_forward(seq_a, seq_b, prep, *, embed_dim, hidden_dim, num_heads,
                mlp_act="relu"):
    """Matches OSI.forward with add_a=add_b=None (eval mode)."""
    n = len(seq_a)
    # group samples by total length so each group runs as one batched kernel
    groups = {}
    for i in range(n):
        L = int(seq_a[i].shape[0] + seq_b[i].shape[0])
        groups.setdefault(L, []).append(i)

    outs = [None] * n
    for L, idxs in groups.items():
        x = jnp.stack([jnp.concatenate([seq_a[i], seq_b[i]], axis=0) for i in idxs], axis=0)
        res = _run_group(x, prep, embed_dim=embed_dim, hidden_dim=hidden_dim,
                         num_heads=num_heads, mlp_act=mlp_act)
        for j, i in enumerate(idxs):
            outs[i] = res[j]
    return jnp.stack(outs, axis=0)                          # (batch, num_classes)


if __name__ == "__main__":
    embed_dim, hidden_dim, num_heads, depth = 8, 32, 4, 2
    len_a, len_b, batch = 8, 8, 2
    num_classes = 1

    key = jax.random.PRNGKey(0)
    pkey, dkey = jax.random.split(key)
    params = init_params(pkey, embed_dim, hidden_dim, num_heads, depth,
                         num_classes=num_classes)
    prep = prepare_params(params, num_classes=num_classes)

    dks = jax.random.split(dkey, 2 * batch)
    seq_a = [jax.random.normal(dks[2 * i], (len_a, embed_dim), jnp.float32)
             for i in range(batch)]
    seq_b = [jax.random.normal(dks[2 * i + 1], (len_b, embed_dim), jnp.float32)
             for i in range(batch)]

    out = osi_forward(seq_a, seq_b, prep, embed_dim=embed_dim,
                      hidden_dim=hidden_dim, num_heads=num_heads)
    out = jax.block_until_ready(out)
    assert out.shape == (batch, num_classes)
    assert bool(jnp.all(jnp.isfinite(out)))
    print("KERNEL_OK")
</pallas_src>

<mosaic_0001>
module attributes {stable_mosaic.version = 11 : i64} {
  func.func @osi_fused_kernel(%arg0: i32, %arg1: memref<1x17x56xf32, #tpu.memory_space<vmem>>, %arg2: memref<56x32xf32, #tpu.memory_space<vmem>>, %arg3: memref<17x32xf32, #tpu.memory_space<vmem>>, %arg4: memref<2x1x32xf32, #tpu.memory_space<vmem>>, %arg5: memref<2x1x32xf32, #tpu.memory_space<vmem>>, %arg6: memref<2x32x96xf32, #tpu.memory_space<vmem>>, %arg7: memref<2x1x96xf32, #tpu.memory_space<vmem>>, %arg8: memref<2x32x32xf32, #tpu.memory_space<vmem>>, %arg9: memref<2x1x32xf32, #tpu.memory_space<vmem>>, %arg10: memref<2x1x32xf32, #tpu.memory_space<vmem>>, %arg11: memref<2x1x32xf32, #tpu.memory_space<vmem>>, %arg12: memref<2x32x128xf32, #tpu.memory_space<vmem>>, %arg13: memref<2x1x128xf32, #tpu.memory_space<vmem>>, %arg14: memref<2x128x32xf32, #tpu.memory_space<vmem>>, %arg15: memref<2x1x32xf32, #tpu.memory_space<vmem>>, %arg16: memref<1x32xf32, #tpu.memory_space<vmem>>, %arg17: memref<1x32xf32, #tpu.memory_space<vmem>>, %arg18: memref<1x32xf32, #tpu.memory_space<vmem>>, %arg19: memref<1x32xf32, #tpu.memory_space<vmem>>, %arg20: memref<32x128xf32, #tpu.memory_space<vmem>>, %arg21: memref<1x128xf32, #tpu.memory_space<vmem>>, %arg22: memref<1x8x128xf32, #tpu.memory_space<vmem>>) attributes {dimension_semantics = [#tpu.dimension_semantics<parallel>], iteration_bounds = array<i64: 2>, scalar_prefetch = 0 : i64, scratch_operands = 0 : i64, tpu.core_type = #tpu.core_type<tc>, window_params = [{transform_indices = @transform_0, window_bounds = array<i64: 1, 17, 56>}, {pipeline_mode = #tpu.pipeline_mode<synchronous>, transform_indices = @transform_1, window_bounds = array<i64: 56, 32>}, {pipeline_mode = #tpu.pipeline_mode<synchronous>, transform_indices = @transform_2, window_bounds = array<i64: 17, 32>}, {pipeline_mode = #tpu.pipeline_mode<synchronous>, transform_indices = @transform_3, window_bounds = array<i64: 2, 1, 32>}, {pipeline_mode = #tpu.pipeline_mode<synchronous>, transform_indices = @transform_4, window_bounds = array<i64: 2, 1, 32>}, {pipeline_mode = #tpu.pipeline_mode<synchronous>, transform_indices = @transform_5, window_bounds = array<i64: 2, 32, 96>}, {pipeline_mode = #tpu.pipeline_mode<synchronous>, transform_indices = @transform_6, window_bounds = array<i64: 2, 1, 96>}, {pipeline_mode = #tpu.pipeline_mode<synchronous>, transform_indices = @transform_7, window_bounds = array<i64: 2, 32, 32>}, {pipeline_mode = #tpu.pipeline_mode<synchronous>, transform_indices = @transform_8, window_bounds = array<i64: 2, 1, 32>}, {pipeline_mode = #tpu.pipeline_mode<synchronous>, transform_indices = @transform_9, window_bounds = array<i64: 2, 1, 32>}, {pipeline_mode = #tpu.pipeline_mode<synchronous>, transform_indices = @transform_10, window_bounds = array<i64: 2, 1, 32>}, {pipeline_mode = #tpu.pipeline_mode<synchronous>, transform_indices = @transform_11, window_bounds = array<i64: 2, 32, 128>}, {pipeline_mode = #tpu.pipeline_mode<synchronous>, transform_indices = @transform_12, window_bounds = array<i64: 2, 1, 128>}, {pipeline_mode = #tpu.pipeline_mode<synchronous>, transform_indices = @transform_13, window_bounds = array<i64: 2, 128, 32>}, {pipeline_mode = #tpu.pipeline_mode<synchronous>, transform_indices = @transform_14, window_bounds = array<i64: 2, 1, 32>}, {pipeline_mode = #tpu.pipeline_mode<synchronous>, transform_indices = @transform_15, window_bounds = array<i64: 1, 32>}, {pipeline_mode = #tpu.pipeline_mode<synchronous>, transform_indices = @transform_16, window_bounds = array<i64: 1, 32>}, {pipeline_mode = #tpu.pipeline_mode<synchronous>, transform_indices = @transform_17, window_bounds = array<i64: 1, 32>}, {pipeline_mode = #tpu.pipeline_mode<synchronous>, transform_indices = @transform_18, window_bounds = array<i64: 1, 32>}, {pipeline_mode = #tpu.pipeline_mode<synchronous>, transform_indices = @transform_19, window_bounds = array<i64: 32, 128>}, {pipeline_mode = #tpu.pipeline_mode<synchronous>, transform_indices = @transform_20, window_bounds = array<i64: 1, 128>}, {transform_indices = @transform_21, window_bounds = array<i64: 1, 8, 128>}]} {
    %c0 = arith.constant 0 : index
    %c0_0 = arith.constant 0 : index
    %c0_1 = arith.constant 0 : index
    %0 = vector.load %arg1[%c0, %c0_0, %c0_1] : memref<1x17x56xf32, #tpu.memory_space<vmem>>, vector<1x17x56xf32>
    %1 = vector.shape_cast %0 : vector<1x17x56xf32> to vector<17x56xf32>
    %c0_2 = arith.constant 0 : index
    %c0_3 = arith.constant 0 : index
    %2 = vector.load %arg2[%c0_2, %c0_3] : memref<56x32xf32, #tpu.memory_space<vmem>>, vector<56x32xf32>
    %cst = arith.constant dense<0.000000e+00> : vector<17x32xf32>
    %3 = tpu.matmul %1, %2, %cst {dimension_numbers = #tpu.dot_dimension_numbers<[1], [0], [0], [1], [0, 0, 1, 1], [], []>} : vector<17x56xf32>, vector<56x32xf32>, vector<17x32xf32> -> vector<17x32xf32>
    %c0_4 = arith.constant 0 : index
    %c0_5 = arith.constant 0 : index
    %4 = vector.load %arg3[%c0_4, %c0_5] : memref<17x32xf32, #tpu.memory_space<vmem>>, vector<17x32xf32>
    %5 = arith.addf %3, %4 : vector<17x32xf32>
    %c0_6 = arith.constant 0 : index
    %c0_7 = arith.constant 0 : index
    %c0_8 = arith.constant 0 : index
    %6 = vector.load %arg4[%c0_6, %c0_7, %c0_8] : memref<2x1x32xf32, #tpu.memory_space<vmem>>, vector<1x1x32xf32>
    %7 = vector.shape_cast %6 : vector<1x1x32xf32> to vector<1x32xf32>
    %c0_9 = arith.constant 0 : index
    %c0_10 = arith.constant 0 : index
    %c0_11 = arith.constant 0 : index
    %8 = vector.load %arg5[%c0_9, %c0_10, %c0_11] : memref<2x1x32xf32, #tpu.memory_space<vmem>>, vector<1x1x32xf32>
    %9 = vector.shape_cast %8 : vector<1x1x32xf32> to vector<1x32xf32>
    %cst_12 = arith.constant dense<0.000000e+00> : vector<17xf32>
    %10 = vector.multi_reduction <add>, %5, %cst_12 [1] : vector<17x32xf32> to vector<17xf32>
    %11 = vector.shape_cast %10 : vector<17xf32> to vector<17x1xf32>
    %cst_13 = arith.constant 3.200000e+01 : f32
    %12 = vector.broadcast %cst_13 : f32 to vector<17x1xf32>
    %13 = arith.divf %11, %12 : vector<17x1xf32>
    %14 = vector.broadcast %13 : vector<17x1xf32> to vector<17x32xf32>
    %15 = arith.subf %5, %14 : vector<17x32xf32>
    %16 = arith.mulf %15, %15 : vector<17x32xf32>
    %cst_14 = arith.constant dense<0.000000e+00> : vector<17xf32>
    %17 = vector.multi_reduction <add>, %16, %cst_14 [1] : vector<17x32xf32> to vector<17xf32>
    %18 = vector.shape_cast %17 : vector<17xf32> to vector<17x1xf32>
    %cst_15 = arith.constant 3.200000e+01 : f32
    %19 = vector.broadcast %cst_15 : f32 to vector<17x1xf32>
    %20 = arith.divf %18, %19 : vector<17x1xf32>
    %21 = vector.broadcast %13 : vector<17x1xf32> to vector<17x32xf32>
    %22 = arith.subf %5, %21 : vector<17x32xf32>
    %cst_16 = arith.constant 9.99999974E-6 : f32
    %23 = vector.broadcast %cst_16 : f32 to vector<17x1xf32>
    %24 = arith.addf %20, %23 : vector<17x1xf32>
    %25 = math.rsqrt %24 : vector<17x1xf32>
    %26 = vector.broadcast %25 : vector<17x1xf32> to vector<17x32xf32>
    %27 = arith.mulf %22, %26 : vector<17x32xf32>
    %28 = vector.broadcast %7 : vector<1x32xf32> to vector<17x32xf32>
    %29 = arith.mulf %27, %28 : vector<17x32xf32>
    %30 = vector.broadcast %9 : vector<1x32xf32> to vector<17x32xf32>
    %31 = arith.addf %29, %30 : vector<17x32xf32>
    %c0_17 = arith.constant 0 : index
    %c0_18 = arith.constant 0 : index
    %c0_19 = arith.constant 0 : index
    %32 = vector.load %arg6[%c0_17, %c0_18, %c0_19] : memref<2x32x96xf32, #tpu.memory_space<vmem>>, vector<1x32x96xf32>
    %33 = vector.shape_cast %32 : vector<1x32x96xf32> to vector<32x96xf32>
    %cst_20 = arith.constant dense<0.000000e+00> : vector<17x96xf32>
    %34 = tpu.matmul %31, %33, %cst_20 {dimension_numbers = #tpu.dot_dimension_numbers<[1], [0], [0], [1], [0, 0, 1, 1], [], []>} : vector<17x32xf32>, vector<32x96xf32>, vector<17x96xf32> -> vector<17x96xf32>
    %c0_21 = arith.constant 0 : index
    %c0_22 = arith.constant 0 : index
    %c0_23 = arith.constant 0 : index
    %35 = vector.load %arg7[%c0_21, %c0_22, %c0_23] : memref<2x1x96xf32, #tpu.memory_space<vmem>>, vector<1x1x96xf32>
    %36 = vector.shape_cast %35 : vector<1x1x96xf32> to vector<1x96xf32>
    %37 = vector.broadcast %36 : vector<1x96xf32> to vector<17x96xf32>
    %38 = arith.addf %34, %37 : vector<17x96xf32>
    %39 = vector.extract_strided_slice %38 {offsets = [0, 0], sizes = [17, 8], strides = [1, 1]} : vector<17x96xf32> to vector<17x8xf32>
    %cst_24 = arith.constant 0.353553385 : f32
    %40 = vector.broadcast %cst_24 : f32 to vector<17x8xf32>
    %41 = arith.mulf %39, %40 : vector<17x8xf32>
    %42 = vector.extract_strided_slice %38 {offsets = [0, 32], sizes = [17, 8], strides = [1, 1]} : vector<17x96xf32> to vector<17x8xf32>
    %43 = vector.extract_strided_slice %38 {offsets = [0, 64], sizes = [17, 8], strides = [1, 1]} : vector<17x96xf32> to vector<17x8xf32>
    %cst_25 = arith.constant dense<0.000000e+00> : vector<17x17xf32>
    %44 = tpu.matmul %41, %42, %cst_25 {dimension_numbers = #tpu.dot_dimension_numbers<[1], [1], [0], [0], [0, 0, 1, 0], [], []>} : vector<17x8xf32>, vector<17x8xf32>, vector<17x17xf32> -> vector<17x17xf32>
    %cst_26 = arith.constant dense<0xFF800000> : vector<17xf32>
    %45 = vector.multi_reduction <maximumf>, %44, %cst_26 [1] : vector<17x17xf32> to vector<17xf32>
    %46 = vector.shape_cast %45 : vector<17xf32> to vector<17x1xf32>
    %47 = vector.broadcast %46 : vector<17x1xf32> to vector<17x17xf32>
    %48 = arith.subf %44, %47 : vector<17x17xf32>
    %49 = math.exp %48 : vector<17x17xf32>
    %cst_27 = arith.constant dense<0.000000e+00> : vector<17xf32>
    %50 = vector.multi_reduction <add>, %49, %cst_27 [1] : vector<17x17xf32> to vector<17xf32>
    %51 = vector.shape_cast %50 : vector<17xf32> to vector<17x1xf32>
    %52 = tpu.reciprocal %51 {approx = true} : vector<17x1xf32> -> vector<17x1xf32>
    %53 = vector.broadcast %52 : vector<17x1xf32> to vector<17x17xf32>
    %54 = arith.mulf %49, %53 : vector<17x17xf32>
    %cst_28 = arith.constant dense<0.000000e+00> : vector<17x8xf32>
    %55 = tpu.matmul %54, %43, %cst_28 {dimension_numbers = #tpu.dot_dimension_numbers<[1], [0], [0], [1], [0, 0, 1, 1], [], []>} : vector<17x17xf32>, vector<17x8xf32>, vector<17x8xf32> -> vector<17x8xf32>
    %56 = vector.extract_strided_slice %38 {offsets = [0, 8], sizes = [17, 8], strides = [1, 1]} : vector<17x96xf32> to vector<17x8xf32>
    %cst_29 = arith.constant 0.353553385 : f32
    %57 = vector.broadcast %cst_29 : f32 to vector<17x8xf32>
    %58 = arith.mulf %56, %57 : vector<17x8xf32>
    %59 = vector.extract_strided_slice %38 {offsets = [0, 40], sizes = [17, 8], strides = [1, 1]} : vector<17x96xf32> to vector<17x8xf32>
    %60 = vector.extract_strided_slice %38 {offsets = [0, 72], sizes = [17, 8], strides = [1, 1]} : vector<17x96xf32> to vector<17x8xf32>
    %cst_30 = arith.constant dense<0.000000e+00> : vector<17x17xf32>
    %61 = tpu.matmul %58, %59, %cst_30 {dimension_numbers = #tpu.dot_dimension_numbers<[1], [1], [0], [0], [0, 0, 1, 0], [], []>} : vector<17x8xf32>, vector<17x8xf32>, vector<17x17xf32> -> vector<17x17xf32>
    %cst_31 = arith.constant dense<0xFF800000> : vector<17xf32>
    %62 = vector.multi_reduction <maximumf>, %61, %cst_31 [1] : vector<17x17xf32> to vector<17xf32>
    %63 = vector.shape_cast %62 : vector<17xf32> to vector<17x1xf32>
    %64 = vector.broadcast %63 : vector<17x1xf32> to vector<17x17xf32>
    %65 = arith.subf %61, %64 : vector<17x17xf32>
    %66 = math.exp %65 : vector<17x17xf32>
    %cst_32 = arith.constant dense<0.000000e+00> : vector<17xf32>
    %67 = vector.multi_reduction <add>, %66, %cst_32 [1] : vector<17x17xf32> to vector<17xf32>
    %68 = vector.shape_cast %67 : vector<17xf32> to vector<17x1xf32>
    %69 = tpu.reciprocal %68 {approx = true} : vector<17x1xf32> -> vector<17x1xf32>
    %70 = vector.broadcast %69 : vector<17x1xf32> to vector<17x17xf32>
    %71 = arith.mulf %66, %70 : vector<17x17xf32>
    %cst_33 = arith.constant dense<0.000000e+00> : vector<17x8xf32>
    %72 = tpu.matmul %71, %60, %cst_33 {dimension_numbers = #tpu.dot_dimension_numbers<[1], [0], [0], [1], [0, 0, 1, 1], [], []>} : vector<17x17xf32>, vector<17x8xf32>, vector<17x8xf32> -> vector<17x8xf32>
    %73 = vector.extract_strided_slice %38 {offsets = [0, 16], sizes = [17, 8], strides = [1, 1]} : vector<17x96xf32> to vector<17x8xf32>
    %cst_34 = arith.constant 0.353553385 : f32
    %74 = vector.broadcast %cst_34 : f32 to vector<17x8xf32>
    %75 = arith.mulf %73, %74 : vector<17x8xf32>
    %76 = vector.extract_strided_slice %38 {offsets = [0, 48], sizes = [17, 8], strides = [1, 1]} : vector<17x96xf32> to vector<17x8xf32>
    %77 = vector.extract_strided_slice %38 {offsets = [0, 80], sizes = [17, 8], strides = [1, 1]} : vector<17x96xf32> to vector<17x8xf32>
    %cst_35 = arith.constant dense<0.000000e+00> : vector<17x17xf32>
    %78 = tpu.matmul %75, %76, %cst_35 {dimension_numbers = #tpu.dot_dimension_numbers<[1], [1], [0], [0], [0, 0, 1, 0], [], []>} : vector<17x8xf32>, vector<17x8xf32>, vector<17x17xf32> -> vector<17x17xf32>
    %cst_36 = arith.constant dense<0xFF800000> : vector<17xf32>
    %79 = vector.multi_reduction <maximumf>, %78, %cst_36 [1] : vector<17x17xf32> to vector<17xf32>
    %80 = vector.shape_cast %79 : vector<17xf32> to vector<17x1xf32>
    %81 = vector.broadcast %80 : vector<17x1xf32> to vector<17x17xf32>
    %82 = arith.subf %78, %81 : vector<17x17xf32>
    %83 = math.exp %82 : vector<17x17xf32>
    %cst_37 = arith.constant dense<0.000000e+00> : vector<17xf32>
    %84 = vector.multi_reduction <add>, %83, %cst_37 [1] : vector<17x17xf32> to vector<17xf32>
    %85 = vector.shape_cast %84 : vector<17xf32> to vector<17x1xf32>
    %86 = tpu.reciprocal %85 {approx = true} : vector<17x1xf32> -> vector<17x1xf32>
    %87 = vector.broadcast %86 : vector<17x1xf32> to vector<17x17xf32>
    %88 = arith.mulf %83, %87 : vector<17x17xf32>
    %cst_38 = arith.constant dense<0.000000e+00> : vector<17x8xf32>
    %89 = tpu.matmul %88, %77, %cst_38 {dimension_numbers = #tpu.dot_dimension_numbers<[1], [0], [0], [1], [0, 0, 1, 1], [], []>} : vector<17x17xf32>, vector<17x8xf32>, vector<17x8xf32> -> vector<17x8xf32>
    %90 = vector.extract_strided_slice %38 {offsets = [0, 24], sizes = [17, 8], strides = [1, 1]} : vector<17x96xf32> to vector<17x8xf32>
    %cst_39 = arith.constant 0.353553385 : f32
    %91 = vector.broadcast %cst_39 : f32 to vector<17x8xf32>
    %92 = arith.mulf %90, %91 : vector<17x8xf32>
    %93 = vector.extract_strided_slice %38 {offsets = [0, 56], sizes = [17, 8], strides = [1, 1]} : vector<17x96xf32> to vector<17x8xf32>
    %94 = vector.extract_strided_slice %38 {offsets = [0, 88], sizes = [17, 8], strides = [1, 1]} : vector<17x96xf32> to vector<17x8xf32>
    %cst_40 = arith.constant dense<0.000000e+00> : vector<17x17xf32>
    %95 = tpu.matmul %92, %93, %cst_40 {dimension_numbers = #tpu.dot_dimension_numbers<[1], [1], [0], [0], [0, 0, 1, 0], [], []>} : vector<17x8xf32>, vector<17x8xf32>, vector<17x17xf32> -> vector<17x17xf32>
    %cst_41 = arith.constant dense<0xFF800000> : vector<17xf32>
    %96 = vector.multi_reduction <maximumf>, %95, %cst_41 [1] : vector<17x17xf32> to vector<17xf32>
    %97 = vector.shape_cast %96 : vector<17xf32> to vector<17x1xf32>
    %98 = vector.broadcast %97 : vector<17x1xf32> to vector<17x17xf32>
    %99 = arith.subf %95, %98 : vector<17x17xf32>
    %100 = math.exp %99 : vector<17x17xf32>
    %cst_42 = arith.constant dense<0.000000e+00> : vector<17xf32>
    %101 = vector.multi_reduction <add>, %100, %cst_42 [1] : vector<17x17xf32> to vector<17xf32>
    %102 = vector.shape_cast %101 : vector<17xf32> to vector<17x1xf32>
    %103 = tpu.reciprocal %102 {approx = true} : vector<17x1xf32> -> vector<17x1xf32>
    %104 = vector.broadcast %103 : vector<17x1xf32> to vector<17x17xf32>
    %105 = arith.mulf %100, %104 : vector<17x17xf32>
    %cst_43 = arith.constant dense<0.000000e+00> : vector<17x8xf32>
    %106 = tpu.matmul %105, %94, %cst_43 {dimension_numbers = #tpu.dot_dimension_numbers<[1], [0], [0], [1], [0, 0, 1, 1], [], []>} : vector<17x17xf32>, vector<17x8xf32>, vector<17x8xf32> -> vector<17x8xf32>
    %107 = tpu.concatenate %55, %72, %89, %106 in 1 : vector<17x8xf32>, vector<17x8xf32>, vector<17x8xf32>, vector<17x8xf32> -> vector<17x32xf32>
    %c0_44 = arith.constant 0 : index
    %c0_45 = arith.constant 0 : index
    %c0_46 = arith.constant 0 : index
    %108 = vector.load %arg8[%c0_44, %c0_45, %c0_46] : memref<2x32x32xf32, #tpu.memory_space<vmem>>, vector<1x32x32xf32>
    %109 = vector.shape_cast %108 : vector<1x32x32xf32> to vector<32x32xf32>
    %cst_47 = arith.constant dense<0.000000e+00> : vector<17x32xf32>
    %110 = tpu.matmul %107, %109, %cst_47 {dimension_numbers = #tpu.dot_dimension_numbers<[1], [0], [0], [1], [0, 0, 1, 1], [], []>} : vector<17x32xf32>, vector<32x32xf32>, vector<17x32xf32> -> vector<17x32xf32>
    %c0_48 = arith.constant 0 : index
    %c0_49 = arith.constant 0 : index
    %c0_50 = arith.constant 0 : index
    %111 = vector.load %arg9[%c0_48, %c0_49, %c0_50] : memref<2x1x32xf32, #tpu.memory_space<vmem>>, vector<1x1x32xf32>
    %112 = vector.shape_cast %111 : vector<1x1x32xf32> to vector<1x32xf32>
    %113 = vector.broadcast %112 : vector<1x32xf32> to vector<17x32xf32>
    %114 = arith.addf %110, %113 : vector<17x32xf32>
    %115 = arith.addf %5, %114 : vector<17x32xf32>
    %c0_51 = arith.constant 0 : index
    %c0_52 = arith.constant 0 : index
    %c0_53 = arith.constant 0 : index
    %116 = vector.load %arg10[%c0_51, %c0_52, %c0_53] : memref<2x1x32xf32, #tpu.memory_space<vmem>>, vector<1x1x32xf32>
    %117 = vector.shape_cast %116 : vector<1x1x32xf32> to vector<1x32xf32>
    %c0_54 = arith.constant 0 : index
    %c0_55 = arith.constant 0 : index
    %c0_56 = arith.constant 0 : index
    %118 = vector.load %arg11[%c0_54, %c0_55, %c0_56] : memref<2x1x32xf32, #tpu.memory_space<vmem>>, vector<1x1x32xf32>
    %119 = vector.shape_cast %118 : vector<1x1x32xf32> to vector<1x32xf32>
    %cst_57 = arith.constant dense<0.000000e+00> : vector<17xf32>
    %120 = vector.multi_reduction <add>, %115, %cst_57 [1] : vector<17x32xf32> to vector<17xf32>
    %121 = vector.shape_cast %120 : vector<17xf32> to vector<17x1xf32>
    %cst_58 = arith.constant 3.200000e+01 : f32
    %122 = vector.broadcast %cst_58 : f32 to vector<17x1xf32>
    %123 = arith.divf %121, %122 : vector<17x1xf32>
    %124 = vector.broadcast %123 : vector<17x1xf32> to vector<17x32xf32>
    %125 = arith.subf %115, %124 : vector<17x32xf32>
    %126 = arith.mulf %125, %125 : vector<17x32xf32>
    %cst_59 = arith.constant dense<0.000000e+00> : vector<17xf32>
    %127 = vector.multi_reduction <add>, %126, %cst_59 [1] : vector<17x32xf32> to vector<17xf32>
    %128 = vector.shape_cast %127 : vector<17xf32> to vector<17x1xf32>
    %cst_60 = arith.constant 3.200000e+01 : f32
    %129 = vector.broadcast %cst_60 : f32 to vector<17x1xf32>
    %130 = arith.divf %128, %129 : vector<17x1xf32>
    %131 = vector.broadcast %123 : vector<17x1xf32> to vector<17x32xf32>
    %132 = arith.subf %115, %131 : vector<17x32xf32>
    %cst_61 = arith.constant 9.99999974E-6 : f32
    %133 = vector.broadcast %cst_61 : f32 to vector<17x1xf32>
    %134 = arith.addf %130, %133 : vector<17x1xf32>
    %135 = math.rsqrt %134 : vector<17x1xf32>
    %136 = vector.broadcast %135 : vector<17x1xf32> to vector<17x32xf32>
    %137 = arith.mulf %132, %136 : vector<17x32xf32>
    %138 = vector.broadcast %117 : vector<1x32xf32> to vector<17x32xf32>
    %139 = arith.mulf %137, %138 : vector<17x32xf32>
    %140 = vector.broadcast %119 : vector<1x32xf32> to vector<17x32xf32>
    %141 = arith.addf %139, %140 : vector<17x32xf32>
    %c0_62 = arith.constant 0 : index
    %c0_63 = arith.constant 0 : index
    %c0_64 = arith.constant 0 : index
    %142 = vector.load %arg12[%c0_62, %c0_63, %c0_64] : memref<2x32x128xf32, #tpu.memory_space<vmem>>, vector<1x32x128xf32>
    %143 = vector.shape_cast %142 : vector<1x32x128xf32> to vector<32x128xf32>
    %cst_65 = arith.constant dense<0.000000e+00> : vector<17x128xf32>
    %144 = tpu.matmul %141, %143, %cst_65 {dimension_numbers = #tpu.dot_dimension_numbers<[1], [0], [0], [1], [0, 0, 1, 1], [], []>} : vector<17x32xf32>, vector<32x128xf32>, vector<17x128xf32> -> vector<17x128xf32>
    %c0_66 = arith.constant 0 : index
    %c0_67 = arith.constant 0 : index
    %c0_68 = arith.constant 0 : index
    %145 = vector.load %arg13[%c0_66, %c0_67, %c0_68] : memref<2x1x128xf32, #tpu.memory_space<vmem>>, vector<1x1x128xf32>
    %146 = vector.shape_cast %145 : vector<1x1x128xf32> to vector<1x128xf32>
    %147 = vector.broadcast %146 : vector<1x128xf32> to vector<17x128xf32>
    %148 = arith.addf %144, %147 : vector<17x128xf32>
    %cst_69 = arith.constant 0.000000e+00 : f32
    %149 = vector.broadcast %cst_69 : f32 to vector<17x128xf32>
    %150 = arith.maximumf %148, %149 : vector<17x128xf32>
    %c0_70 = arith.constant 0 : index
    %c0_71 = arith.constant 0 : index
    %c0_72 = arith.constant 0 : index
    %151 = vector.load %arg14[%c0_70, %c0_71, %c0_72] : memref<2x128x32xf32, #tpu.memory_space<vmem>>, vector<1x128x32xf32>
    %152 = vector.shape_cast %151 : vector<1x128x32xf32> to vector<128x32xf32>
    %cst_73 = arith.constant dense<0.000000e+00> : vector<17x32xf32>
    %153 = tpu.matmul %150, %152, %cst_73 {dimension_numbers = #tpu.dot_dimension_numbers<[1], [0], [0], [1], [0, 0, 1, 1], [], []>} : vector<17x128xf32>, vector<128x32xf32>, vector<17x32xf32> -> vector<17x32xf32>
    %c0_74 = arith.constant 0 : index
    %c0_75 = arith.constant 0 : index
    %c0_76 = arith.constant 0 : index
    %154 = vector.load %arg15[%c0_74, %c0_75, %c0_76] : memref<2x1x32xf32, #tpu.memory_space<vmem>>, vector<1x1x32xf32>
    %155 = vector.shape_cast %154 : vector<1x1x32xf32> to vector<1x32xf32>
    %156 = vector.broadcast %155 : vector<1x32xf32> to vector<17x32xf32>
    %157 = arith.addf %153, %156 : vector<17x32xf32>
    %158 = arith.addf %115, %157 : vector<17x32xf32>
    %c1 = arith.constant 1 : index
    %c0_77 = arith.constant 0 : index
    %c0_78 = arith.constant 0 : index
    %159 = vector.load %arg4[%c1, %c0_77, %c0_78] : memref<2x1x32xf32, #tpu.memory_space<vmem>>, vector<1x1x32xf32>
    %160 = vector.shape_cast %159 : vector<1x1x32xf32> to vector<1x32xf32>
    %c1_79 = arith.constant 1 : index
    %c0_80 = arith.constant 0 : index
    %c0_81 = arith.constant 0 : index
    %161 = vector.load %arg5[%c1_79, %c0_80, %c0_81] : memref<2x1x32xf32, #tpu.memory_space<vmem>>, vector<1x1x32xf32>
    %162 = vector.shape_cast %161 : vector<1x1x32xf32> to vector<1x32xf32>
    %cst_82 = arith.constant dense<0.000000e+00> : vector<17xf32>
    %163 = vector.multi_reduction <add>, %158, %cst_82 [1] : vector<17x32xf32> to vector<17xf32>
    %164 = vector.shape_cast %163 : vector<17xf32> to vector<17x1xf32>
    %cst_83 = arith.constant 3.200000e+01 : f32
    %165 = vector.broadcast %cst_83 : f32 to vector<17x1xf32>
    %166 = arith.divf %164, %165 : vector<17x1xf32>
    %167 = vector.broadcast %166 : vector<17x1xf32> to vector<17x32xf32>
    %168 = arith.subf %158, %167 : vector<17x32xf32>
    %169 = arith.mulf %168, %168 : vector<17x32xf32>
    %cst_84 = arith.constant dense<0.000000e+00> : vector<17xf32>
    %170 = vector.multi_reduction <add>, %169, %cst_84 [1] : vector<17x32xf32> to vector<17xf32>
    %171 = vector.shape_cast %170 : vector<17xf32> to vector<17x1xf32>
    %cst_85 = arith.constant 3.200000e+01 : f32
    %172 = vector.broadcast %cst_85 : f32 to vector<17x1xf32>
    %173 = arith.divf %171, %172 : vector<17x1xf32>
    %174 = vector.broadcast %166 : vector<17x1xf32> to vector<17x32xf32>
    %175 = arith.subf %158, %174 : vector<17x32xf32>
    %cst_86 = arith.constant 9.99999974E-6 : f32
    %176 = vector.broadcast %cst_86 : f32 to vector<17x1xf32>
    %177 = arith.addf %173, %176 : vector<17x1xf32>
    %178 = math.rsqrt %177 : vector<17x1xf32>
    %179 = vector.broadcast %178 : vector<17x1xf32> to vector<17x32xf32>
    %180 = arith.mulf %175, %179 : vector<17x32xf32>
    %181 = vector.broadcast %160 : vector<1x32xf32> to vector<17x32xf32>
    %182 = arith.mulf %180, %181 : vector<17x32xf32>
    %183 = vector.broadcast %162 : vector<1x32xf32> to vector<17x32xf32>
    %184 = arith.addf %182, %183 : vector<17x32xf32>
    %c1_87 = arith.constant 1 : index
    %c0_88 = arith.constant 0 : index
    %c0_89 = arith.constant 0 : index
    %185 = vector.load %arg6[%c1_87, %c0_88, %c0_89] : memref<2x32x96xf32, #tpu.memory_space<vmem>>, vector<1x32x96xf32>
    %186 = vector.shape_cast %185 : vector<1x32x96xf32> to vector<32x96xf32>
    %cst_90 = arith.constant dense<0.000000e+00> : vector<17x96xf32>
    %187 = tpu.matmul %184, %186, %cst_90 {dimension_numbers = #tpu.dot_dimension_numbers<[1], [0], [0], [1], [0, 0, 1, 1], [], []>} : vector<17x32xf32>, vector<32x96xf32>, vector<17x96xf32> -> vector<17x96xf32>
    %c1_91 = arith.constant 1 : index
    %c0_92 = arith.constant 0 : index
    %c0_93 = arith.constant 0 : index
    %188 = vector.load %arg7[%c1_91, %c0_92, %c0_93] : memref<2x1x96xf32, #tpu.memory_space<vmem>>, vector<1x1x96xf32>
    %189 = vector.shape_cast %188 : vector<1x1x96xf32> to vector<1x96xf32>
    %190 = vector.broadcast %189 : vector<1x96xf32> to vector<17x96xf32>
    %191 = arith.addf %187, %190 : vector<17x96xf32>
    %192 = vector.extract_strided_slice %191 {offsets = [0, 0], sizes = [17, 8], strides = [1, 1]} : vector<17x96xf32> to vector<17x8xf32>
    %cst_94 = arith.constant 0.353553385 : f32
    %193 = vector.broadcast %cst_94 : f32 to vector<17x8xf32>
    %194 = arith.mulf %192, %193 : vector<17x8xf32>
    %195 = vector.extract_strided_slice %191 {offsets = [0, 32], sizes = [17, 8], strides = [1, 1]} : vector<17x96xf32> to vector<17x8xf32>
    %196 = vector.extract_strided_slice %191 {offsets = [0, 64], sizes = [17, 8], strides = [1, 1]} : vector<17x96xf32> to vector<17x8xf32>
    %cst_95 = arith.constant dense<0.000000e+00> : vector<17x17xf32>
    %197 = tpu.matmul %194, %195, %cst_95 {dimension_numbers = #tpu.dot_dimension_numbers<[1], [1], [0], [0], [0, 0, 1, 0], [], []>} : vector<17x8xf32>, vector<17x8xf32>, vector<17x17xf32> -> vector<17x17xf32>
    %cst_96 = arith.constant dense<0xFF800000> : vector<17xf32>
    %198 = vector.multi_reduction <maximumf>, %197, %cst_96 [1] : vector<17x17xf32> to vector<17xf32>
    %199 = vector.shape_cast %198 : vector<17xf32> to vector<17x1xf32>
    %200 = vector.broadcast %199 : vector<17x1xf32> to vector<17x17xf32>
    %201 = arith.subf %197, %200 : vector<17x17xf32>
    %202 = math.exp %201 : vector<17x17xf32>
    %cst_97 = arith.constant dense<0.000000e+00> : vector<17xf32>
    %203 = vector.multi_reduction <add>, %202, %cst_97 [1] : vector<17x17xf32> to vector<17xf32>
    %204 = vector.shape_cast %203 : vector<17xf32> to vector<17x1xf32>
    %205 = tpu.reciprocal %204 {approx = true} : vector<17x1xf32> -> vector<17x1xf32>
    %206 = vector.broadcast %205 : vector<17x1xf32> to vector<17x17xf32>
    %207 = arith.mulf %202, %206 : vector<17x17xf32>
    %cst_98 = arith.constant dense<0.000000e+00> : vector<17x8xf32>
    %208 = tpu.matmul %207, %196, %cst_98 {dimension_numbers = #tpu.dot_dimension_numbers<[1], [0], [0], [1], [0, 0, 1, 1], [], []>} : vector<17x17xf32>, vector<17x8xf32>, vector<17x8xf32> -> vector<17x8xf32>
    %209 = vector.extract_strided_slice %191 {offsets = [0, 8], sizes = [17, 8], strides = [1, 1]} : vector<17x96xf32> to vector<17x8xf32>
    %cst_99 = arith.constant 0.353553385 : f32
    %210 = vector.broadcast %cst_99 : f32 to vector<17x8xf32>
    %211 = arith.mulf %209, %210 : vector<17x8xf32>
    %212 = vector.extract_strided_slice %191 {offsets = [0, 40], sizes = [17, 8], strides = [1, 1]} : vector<17x96xf32> to vector<17x8xf32>
    %213 = vector.extract_strided_slice %191 {offsets = [0, 72], sizes = [17, 8], strides = [1, 1]} : vector<17x96xf32> to vector<17x8xf32>
    %cst_100 = arith.constant dense<0.000000e+00> : vector<17x17xf32>
    %214 = tpu.matmul %211, %212, %cst_100 {dimension_numbers = #tpu.dot_dimension_numbers<[1], [1], [0], [0], [0, 0, 1, 0], [], []>} : vector<17x8xf32>, vector<17x8xf32>, vector<17x17xf32> -> vector<17x17xf32>
    %cst_101 = arith.constant dense<0xFF800000> : vector<17xf32>
    %215 = vector.multi_reduction <maximumf>, %214, %cst_101 [1] : vector<17x17xf32> to vector<17xf32>
    %216 = vector.shape_cast %215 : vector<17xf32> to vector<17x1xf32>
    %217 = vector.broadcast %216 : vector<17x1xf32> to vector<17x17xf32>
    %218 = arith.subf %214, %217 : vector<17x17xf32>
    %219 = math.exp %218 : vector<17x17xf32>
    %cst_102 = arith.constant dense<0.000000e+00> : vector<17xf32>
    %220 = vector.multi_reduction <add>, %219, %cst_102 [1] : vector<17x17xf32> to vector<17xf32>
    %221 = vector.shape_cast %220 : vector<17xf32> to vector<17x1xf32>
    %222 = tpu.reciprocal %221 {approx = true} : vector<17x1xf32> -> vector<17x1xf32>
    %223 = vector.broadcast %222 : vector<17x1xf32> to vector<17x17xf32>
    %224 = arith.mulf %219, %223 : vector<17x17xf32>
    %cst_103 = arith.constant dense<0.000000e+00> : vector<17x8xf32>
    %225 = tpu.matmul %224, %213, %cst_103 {dimension_numbers = #tpu.dot_dimension_numbers<[1], [0], [0], [1], [0, 0, 1, 1], [], []>} : vector<17x17xf32>, vector<17x8xf32>, vector<17x8xf32> -> vector<17x8xf32>
    %226 = vector.extract_strided_slice %191 {offsets = [0, 16], sizes = [17, 8], strides = [1, 1]} : vector<17x96xf32> to vector<17x8xf32>
    %cst_104 = arith.constant 0.353553385 : f32
    %227 = vector.broadcast %cst_104 : f32 to vector<17x8xf32>
    %228 = arith.mulf %226, %227 : vector<17x8xf32>
    %229 = vector.extract_strided_slice %191 {offsets = [0, 48], sizes = [17, 8], strides = [1, 1]} : vector<17x96xf32> to vector<17x8xf32>
    %230 = vector.extract_strided_slice %191 {offsets = [0, 80], sizes = [17, 8], strides = [1, 1]} : vector<17x96xf32> to vector<17x8xf32>
    %cst_105 = arith.constant dense<0.000000e+00> : vector<17x17xf32>
    %231 = tpu.matmul %228, %229, %cst_105 {dimension_numbers = #tpu.dot_dimension_numbers<[1], [1], [0], [0], [0, 0, 1, 0], [], []>} : vector<17x8xf32>, vector<17x8xf32>, vector<17x17xf32> -> vector<17x17xf32>
    %cst_106 = arith.constant dense<0xFF800000> : vector<17xf32>
    %232 = vector.multi_reduction <maximumf>, %231, %cst_106 [1] : vector<17x17xf32> to vector<17xf32>
    %233 = vector.shape_cast %232 : vector<17xf32> to vector<17x1xf32>
    %234 = vector.broadcast %233 : vector<17x1xf32> to vector<17x17xf32>
    %235 = arith.subf %231, %234 : vector<17x17xf32>
    %236 = math.exp %235 : vector<17x17xf32>
    %cst_107 = arith.constant dense<0.000000e+00> : vector<17xf32>
    %237 = vector.multi_reduction <add>, %236, %cst_107 [1] : vector<17x17xf32> to vector<17xf32>
    %238 = vector.shape_cast %237 : vector<17xf32> to vector<17x1xf32>
    %239 = tpu.reciprocal %238 {approx = true} : vector<17x1xf32> -> vector<17x1xf32>
    %240 = vector.broadcast %239 : vector<17x1xf32> to vector<17x17xf32>
    %241 = arith.mulf %236, %240 : vector<17x17xf32>
    %cst_108 = arith.constant dense<0.000000e+00> : vector<17x8xf32>
    %242 = tpu.matmul %241, %230, %cst_108 {dimension_numbers = #tpu.dot_dimension_numbers<[1], [0], [0], [1], [0, 0, 1, 1], [], []>} : vector<17x17xf32>, vector<17x8xf32>, vector<17x8xf32> -> vector<17x8xf32>
    %243 = vector.extract_strided_slice %191 {offsets = [0, 24], sizes = [17, 8], strides = [1, 1]} : vector<17x96xf32> to vector<17x8xf32>
    %cst_109 = arith.constant 0.353553385 : f32
    %244 = vector.broadcast %cst_109 : f32 to vector<17x8xf32>
    %245 = arith.mulf %243, %244 : vector<17x8xf32>
    %246 = vector.extract_strided_slice %191 {offsets = [0, 56], sizes = [17, 8], strides = [1, 1]} : vector<17x96xf32> to vector<17x8xf32>
    %247 = vector.extract_strided_slice %191 {offsets = [0, 88], sizes = [17, 8], strides = [1, 1]} : vector<17x96xf32> to vector<17x8xf32>
    %cst_110 = arith.constant dense<0.000000e+00> : vector<17x17xf32>
    %248 = tpu.matmul %245, %246, %cst_110 {dimension_numbers = #tpu.dot_dimension_numbers<[1], [1], [0], [0], [0, 0, 1, 0], [], []>} : vector<17x8xf32>, vector<17x8xf32>, vector<17x17xf32> -> vector<17x17xf32>
    %cst_111 = arith.constant dense<0xFF800000> : vector<17xf32>
    %249 = vector.multi_reduction <maximumf>, %248, %cst_111 [1] : vector<17x17xf32> to vector<17xf32>
    %250 = vector.shape_cast %249 : vector<17xf32> to vector<17x1xf32>
    %251 = vector.broadcast %250 : vector<17x1xf32> to vector<17x17xf32>
    %252 = arith.subf %248, %251 : vector<17x17xf32>
    %253 = math.exp %252 : vector<17x17xf32>
    %cst_112 = arith.constant dense<0.000000e+00> : vector<17xf32>
    %254 = vector.multi_reduction <add>, %253, %cst_112 [1] : vector<17x17xf32> to vector<17xf32>
    %255 = vector.shape_cast %254 : vector<17xf32> to vector<17x1xf32>
    %256 = tpu.reciprocal %255 {approx = true} : vector<17x1xf32> -> vector<17x1xf32>
    %257 = vector.broadcast %256 : vector<17x1xf32> to vector<17x17xf32>
    %258 = arith.mulf %253, %257 : vector<17x17xf32>
    %cst_113 = arith.constant dense<0.000000e+00> : vector<17x8xf32>
    %259 = tpu.matmul %258, %247, %cst_113 {dimension_numbers = #tpu.dot_dimension_numbers<[1], [0], [0], [1], [0, 0, 1, 1], [], []>} : vector<17x17xf32>, vector<17x8xf32>, vector<17x8xf32> -> vector<17x8xf32>
    %260 = tpu.concatenate %208, %225, %242, %259 in 1 : vector<17x8xf32>, vector<17x8xf32>, vector<17x8xf32>, vector<17x8xf32> -> vector<17x32xf32>
    %c1_114 = arith.constant 1 : index
    %c0_115 = arith.constant 0 : index
    %c0_116 = arith.constant 0 : index
    %261 = vector.load %arg8[%c1_114, %c0_115, %c0_116] : memref<2x32x32xf32, #tpu.memory_space<vmem>>, vector<1x32x32xf32>
    %262 = vector.shape_cast %261 : vector<1x32x32xf32> to vector<32x32xf32>
    %cst_117 = arith.constant dense<0.000000e+00> : vector<17x32xf32>
    %263 = tpu.matmul %260, %262, %cst_117 {dimension_numbers = #tpu.dot_dimension_numbers<[1], [0], [0], [1], [0, 0, 1, 1], [], []>} : vector<17x32xf32>, vector<32x32xf32>, vector<17x32xf32> -> vector<17x32xf32>
    %c1_118 = arith.constant 1 : index
    %c0_119 = arith.constant 0 : index
    %c0_120 = arith.constant 0 : index
    %264 = vector.load %arg9[%c1_118, %c0_119, %c0_120] : memref<2x1x32xf32, #tpu.memory_space<vmem>>, vector<1x1x32xf32>
    %265 = vector.shape_cast %264 : vector<1x1x32xf32> to vector<1x32xf32>
    %266 = vector.broadcast %265 : vector<1x32xf32> to vector<17x32xf32>
    %267 = arith.addf %263, %266 : vector<17x32xf32>
    %268 = arith.addf %158, %267 : vector<17x32xf32>
    %c1_121 = arith.constant 1 : index
    %c0_122 = arith.constant 0 : index
    %c0_123 = arith.constant 0 : index
    %269 = vector.load %arg10[%c1_121, %c0_122, %c0_123] : memref<2x1x32xf32, #tpu.memory_space<vmem>>, vector<1x1x32xf32>
    %270 = vector.shape_cast %269 : vector<1x1x32xf32> to vector<1x32xf32>
    %c1_124 = arith.constant 1 : index
    %c0_125 = arith.constant 0 : index
    %c0_126 = arith.constant 0 : index
    %271 = vector.load %arg11[%c1_124, %c0_125, %c0_126] : memref<2x1x32xf32, #tpu.memory_space<vmem>>, vector<1x1x32xf32>
    %272 = vector.shape_cast %271 : vector<1x1x32xf32> to vector<1x32xf32>
    %cst_127 = arith.constant dense<0.000000e+00> : vector<17xf32>
    %273 = vector.multi_reduction <add>, %268, %cst_127 [1] : vector<17x32xf32> to vector<17xf32>
    %274 = vector.shape_cast %273 : vector<17xf32> to vector<17x1xf32>
    %cst_128 = arith.constant 3.200000e+01 : f32
    %275 = vector.broadcast %cst_128 : f32 to vector<17x1xf32>
    %276 = arith.divf %274, %275 : vector<17x1xf32>
    %277 = vector.broadcast %276 : vector<17x1xf32> to vector<17x32xf32>
    %278 = arith.subf %268, %277 : vector<17x32xf32>
    %279 = arith.mulf %278, %278 : vector<17x32xf32>
    %cst_129 = arith.constant dense<0.000000e+00> : vector<17xf32>
    %280 = vector.multi_reduction <add>, %279, %cst_129 [1] : vector<17x32xf32> to vector<17xf32>
    %281 = vector.shape_cast %280 : vector<17xf32> to vector<17x1xf32>
    %cst_130 = arith.constant 3.200000e+01 : f32
    %282 = vector.broadcast %cst_130 : f32 to vector<17x1xf32>
    %283 = arith.divf %281, %282 : vector<17x1xf32>
    %284 = vector.broadcast %276 : vector<17x1xf32> to vector<17x32xf32>
    %285 = arith.subf %268, %284 : vector<17x32xf32>
    %cst_131 = arith.constant 9.99999974E-6 : f32
    %286 = vector.broadcast %cst_131 : f32 to vector<17x1xf32>
    %287 = arith.addf %283, %286 : vector<17x1xf32>
    %288 = math.rsqrt %287 : vector<17x1xf32>
    %289 = vector.broadcast %288 : vector<17x1xf32> to vector<17x32xf32>
    %290 = arith.mulf %285, %289 : vector<17x32xf32>
    %291 = vector.broadcast %270 : vector<1x32xf32> to vector<17x32xf32>
    %292 = arith.mulf %290, %291 : vector<17x32xf32>
    %293 = vector.broadcast %272 : vector<1x32xf32> to vector<17x32xf32>
    %294 = arith.addf %292, %293 : vector<17x32xf32>
    %c1_132 = arith.constant 1 : index
    %c0_133 = arith.constant 0 : index
    %c0_134 = arith.constant 0 : index
    %295 = vector.load %arg12[%c1_132, %c0_133, %c0_134] : memref<2x32x128xf32, #tpu.memory_space<vmem>>, vector<1x32x128xf32>
    %296 = vector.shape_cast %295 : vector<1x32x128xf32> to vector<32x128xf32>
    %cst_135 = arith.constant dense<0.000000e+00> : vector<17x128xf32>
    %297 = tpu.matmul %294, %296, %cst_135 {dimension_numbers = #tpu.dot_dimension_numbers<[1], [0], [0], [1], [0, 0, 1, 1], [], []>} : vector<17x32xf32>, vector<32x128xf32>, vector<17x128xf32> -> vector<17x128xf32>
    %c1_136 = arith.constant 1 : index
    %c0_137 = arith.constant 0 : index
    %c0_138 = arith.constant 0 : index
    %298 = vector.load %arg13[%c1_136, %c0_137, %c0_138] : memref<2x1x128xf32, #tpu.memory_space<vmem>>, vector<1x1x128xf32>
    %299 = vector.shape_cast %298 : vector<1x1x128xf32> to vector<1x128xf32>
    %300 = vector.broadcast %299 : vector<1x128xf32> to vector<17x128xf32>
    %301 = arith.addf %297, %300 : vector<17x128xf32>
    %cst_139 = arith.constant 0.000000e+00 : f32
    %302 = vector.broadcast %cst_139 : f32 to vector<17x128xf32>
    %303 = arith.maximumf %301, %302 : vector<17x128xf32>
    %c1_140 = arith.constant 1 : index
    %c0_141 = arith.constant 0 : index
    %c0_142 = arith.constant 0 : index
    %304 = vector.load %arg14[%c1_140, %c0_141, %c0_142] : memref<2x128x32xf32, #tpu.memory_space<vmem>>, vector<1x128x32xf32>
    %305 = vector.shape_cast %304 : vector<1x128x32xf32> to vector<128x32xf32>
    %cst_143 = arith.constant dense<0.000000e+00> : vector<17x32xf32>
    %306 = tpu.matmul %303, %305, %cst_143 {dimension_numbers = #tpu.dot_dimension_numbers<[1], [0], [0], [1], [0, 0, 1, 1], [], []>} : vector<17x128xf32>, vector<128x32xf32>, vector<17x32xf32> -> vector<17x32xf32>
    %c1_144 = arith.constant 1 : index
    %c0_145 = arith.constant 0 : index
    %c0_146 = arith.constant 0 : index
    %307 = vector.load %arg15[%c1_144, %c0_145, %c0_146] : memref<2x1x32xf32, #tpu.memory_space<vmem>>, vector<1x1x32xf32>
    %308 = vector.shape_cast %307 : vector<1x1x32xf32> to vector<1x32xf32>
    %309 = vector.broadcast %308 : vector<1x32xf32> to vector<17x32xf32>
    %310 = arith.addf %306, %309 : vector<17x32xf32>
    %311 = arith.addf %268, %310 : vector<17x32xf32>
    %c0_147 = arith.constant 0 : index
    %c0_148 = arith.constant 0 : index
    %312 = vector.load %arg16[%c0_147, %c0_148] : memref<1x32xf32, #tpu.memory_space<vmem>>, vector<1x32xf32>
    %c0_149 = arith.constant 0 : index
    %c0_150 = arith.constant 0 : index
    %313 = vector.load %arg17[%c0_149, %c0_150] : memref<1x32xf32, #tpu.memory_space<vmem>>, vector<1x32xf32>
    %cst_151 = arith.constant dense<0.000000e+00> : vector<17xf32>
    %314 = vector.multi_reduction <add>, %311, %cst_151 [1] : vector<17x32xf32> to vector<17xf32>
    %315 = vector.shape_cast %314 : vector<17xf32> to vector<17x1xf32>
    %cst_152 = arith.constant 3.200000e+01 : f32
    %316 = vector.broadcast %cst_152 : f32 to vector<17x1xf32>
    %317 = arith.divf %315, %316 : vector<17x1xf32>
    %318 = vector.broadcast %317 : vector<17x1xf32> to vector<17x32xf32>
    %319 = arith.subf %311, %318 : vector<17x32xf32>
    %320 = arith.mulf %319, %319 : vector<17x32xf32>
    %cst_153 = arith.constant dense<0.000000e+00> : vector<17xf32>
    %321 = vector.multi_reduction <add>, %320, %cst_153 [1] : vector<17x32xf32> to vector<17xf32>
    %322 = vector.shape_cast %321 : vector<17xf32> to vector<17x1xf32>
    %cst_154 = arith.constant 3.200000e+01 : f32
    %323 = vector.broadcast %cst_154 : f32 to vector<17x1xf32>
    %324 = arith.divf %322, %323 : vector<17x1xf32>
    %325 = vector.broadcast %317 : vector<17x1xf32> to vector<17x32xf32>
    %326 = arith.subf %311, %325 : vector<17x32xf32>
    %cst_155 = arith.constant 9.99999974E-6 : f32
    %327 = vector.broadcast %cst_155 : f32 to vector<17x1xf32>
    %328 = arith.addf %324, %327 : vector<17x1xf32>
    %329 = math.rsqrt %328 : vector<17x1xf32>
    %330 = vector.broadcast %329 : vector<17x1xf32> to vector<17x32xf32>
    %331 = arith.mulf %326, %330 : vector<17x32xf32>
    %332 = vector.broadcast %312 : vector<1x32xf32> to vector<17x32xf32>
    %333 = arith.mulf %331, %332 : vector<17x32xf32>
    %334 = vector.broadcast %313 : vector<1x32xf32> to vector<17x32xf32>
    %335 = arith.addf %333, %334 : vector<17x32xf32>
    %336 = vector.extract_strided_slice %335 {offsets = [1, 0], sizes = [16, 32], strides = [1, 1]} : vector<17x32xf32> to vector<16x32xf32>
    %cst_156 = arith.constant dense<0.000000e+00> : vector<32xf32>
    %337 = vector.multi_reduction <add>, %336, %cst_156 [0] : vector<16x32xf32> to vector<32xf32>
    %338 = vector.shape_cast %337 : vector<32xf32> to vector<1x32xf32>
    %cst_157 = arith.constant 6.250000e-02 : f32
    %339 = vector.broadcast %cst_157 : f32 to vector<1x32xf32>
    %340 = arith.mulf %338, %339 : vector<1x32xf32>
    %c0_158 = arith.constant 0 : index
    %c0_159 = arith.constant 0 : index
    %341 = vector.load %arg18[%c0_158, %c0_159] : memref<1x32xf32, #tpu.memory_space<vmem>>, vector<1x32xf32>
    %c0_160 = arith.constant 0 : index
    %c0_161 = arith.constant 0 : index
    %342 = vector.load %arg19[%c0_160, %c0_161] : memref<1x32xf32, #tpu.memory_space<vmem>>, vector<1x32xf32>
    %cst_162 = arith.constant dense<0.000000e+00> : vector<1xf32>
    %343 = vector.multi_reduction <add>, %340, %cst_162 [1] : vector<1x32xf32> to vector<1xf32>
    %344 = vector.shape_cast %343 : vector<1xf32> to vector<1x1xf32>
    %cst_163 = arith.constant 3.200000e+01 : f32
    %345 = vector.broadcast %cst_163 : f32 to vector<1x1xf32>
    %346 = arith.divf %344, %345 : vector<1x1xf32>
    %347 = vector.broadcast %346 : vector<1x1xf32> to vector<1x32xf32>
    %348 = arith.subf %340, %347 : vector<1x32xf32>
    %349 = arith.mulf %348, %348 : vector<1x32xf32>
    %cst_164 = arith.constant dense<0.000000e+00> : vector<1xf32>
    %350 = vector.multi_reduction <add>, %349, %cst_164 [1] : vector<1x32xf32> to vector<1xf32>
    %351 = vector.shape_cast %350 : vector<1xf32> to vector<1x1xf32>
    %cst_165 = arith.constant 3.200000e+01 : f32
    %352 = vector.broadcast %cst_165 : f32 to vector<1x1xf32>
    %353 = arith.divf %351, %352 : vector<1x1xf32>
    %354 = vector.broadcast %346 : vector<1x1xf32> to vector<1x32xf32>
    %355 = arith.subf %340, %354 : vector<1x32xf32>
    %cst_166 = arith.constant 9.99999974E-6 : f32
    %356 = vector.broadcast %cst_166 : f32 to vector<1x1xf32>
    %357 = arith.addf %353, %356 : vector<1x1xf32>
    %358 = math.rsqrt %357 : vector<1x1xf32>
    %359 = vector.broadcast %358 : vector<1x1xf32> to vector<1x32xf32>
    %360 = arith.mulf %355, %359 : vector<1x32xf32>
    %361 = arith.mulf %360, %341 : vector<1x32xf32>
    %362 = arith.addf %361, %342 : vector<1x32xf32>
    %c0_167 = arith.constant 0 : index
    %c0_168 = arith.constant 0 : index
    %363 = vector.load %arg20[%c0_167, %c0_168] : memref<32x128xf32, #tpu.memory_space<vmem>>, vector<32x128xf32>
    %cst_169 = arith.constant dense<0.000000e+00> : vector<1x128xf32>
    %364 = tpu.matmul %362, %363, %cst_169 {dimension_numbers = #tpu.dot_dimension_numbers<[1], [0], [0], [1], [0, 0, 1, 1], [], []>} : vector<1x32xf32>, vector<32x128xf32>, vector<1x128xf32> -> vector<1x128xf32>
    %c0_170 = arith.constant 0 : index
    %c0_171 = arith.constant 0 : index
    %365 = vector.load %arg21[%c0_170, %c0_171] : memref<1x128xf32, #tpu.memory_space<vmem>>, vector<1x128xf32>
    %366 = arith.addf %364, %365 : vector<1x128xf32>
    %367 = vector.shape_cast %366 : vector<1x128xf32> to vector<1x128xf32>
    %368 = vector.broadcast %367 : vector<1x128xf32> to vector<8x128xf32>
    %c0_172 = arith.constant 0 : index
    %c0_173 = arith.constant 0 : index
    %c0_174 = arith.constant 0 : index
    %369 = vector.load %arg22[%c0_172, %c0_173, %c0_174] : memref<1x8x128xf32, #tpu.memory_space<vmem>>, vector<1x8x128xf32>
    %370 = vector.shape_cast %369 : vector<1x8x128xf32> to vector<8x128xf32>
    %371 = vector.shape_cast %368 : vector<8x128xf32> to vector<1x8x128xf32>
    tpu.vector_store %arg22[%c0_172, %c0_173, %c0_174], %371 {strides = array<i32>} : memref<1x8x128xf32, #tpu.memory_space<vmem>>, vector<1x8x128xf32>,
    return
  }
  func.func @transform_0(%arg0: i32) -> (i32, i32, i32) {
    %c0_i32 = arith.constant 0 : i32
    %c0_i32_0 = arith.constant 0 : i32
    %c0_i32_1 = arith.constant 0 : i32
    return %arg0, %c0_i32, %c0_i32_0 : i32, i32, i32
  }
  func.func @transform_1(%arg0: i32) -> (i32, i32) {
    %c0_i32 = arith.constant 0 : i32
    %c0_i32_0 = arith.constant 0 : i32
    %c0_i32_1 = arith.constant 0 : i32
    return %c0_i32, %c0_i32_0 : i32, i32
  }
  func.func @transform_2(%arg0: i32) -> (i32, i32) {
    %c0_i32 = arith.constant 0 : i32
    %c0_i32_0 = arith.constant 0 : i32
    %c0_i32_1 = arith.constant 0 : i32
    return %c0_i32, %c0_i32_0 : i32, i32
  }
  func.func @transform_3(%arg0: i32) -> (i32, i32, i32) {
    %c0_i32 = arith.constant 0 : i32
    %c0_i32_0 = arith.constant 0 : i32
    %c0_i32_1 = arith.constant 0 : i32
    %c0_i32_2 = arith.constant 0 : i32
    return %c0_i32, %c0_i32_0, %c0_i32_1 : i32, i32, i32
  }
  func.func @transform_4(%arg0: i32) -> (i32, i32, i32) {
    %c0_i32 = arith.constant 0 : i32
    %c0_i32_0 = arith.constant 0 : i32
    %c0_i32_1 = arith.constant 0 : i32
    %c0_i32_2 = arith.constant 0 : i32
    return %c0_i32, %c0_i32_0, %c0_i32_1 : i32, i32, i32
  }
  func.func @transform_5(%arg0: i32) -> (i32, i32, i32) {
    %c0_i32 = arith.constant 0 : i32
    %c0_i32_0 = arith.constant 0 : i32
    %c0_i32_1 = arith.constant 0 : i32
    %c0_i32_2 = arith.constant 0 : i32
    return %c0_i32, %c0_i32_0, %c0_i32_1 : i32, i32, i32
  }
  func.func @transform_6(%arg0: i32) -> (i32, i32, i32) {
    %c0_i32 = arith.constant 0 : i32
    %c0_i32_0 = arith.constant 0 : i32
    %c0_i32_1 = arith.constant 0 : i32
    %c0_i32_2 = arith.constant 0 : i32
    return %c0_i32, %c0_i32_0, %c0_i32_1 : i32, i32, i32
  }
  func.func @transform_7(%arg0: i32) -> (i32, i32, i32) {
    %c0_i32 = arith.constant 0 : i32
    %c0_i32_0 = arith.constant 0 : i32
    %c0_i32_1 = arith.constant 0 : i32
    %c0_i32_2 = arith.constant 0 : i32
    return %c0_i32, %c0_i32_0, %c0_i32_1 : i32, i32, i32
  }
  func.func @transform_8(%arg0: i32) -> (i32, i32, i32) {
    %c0_i32 = arith.constant 0 : i32
    %c0_i32_0 = arith.constant 0 : i32
    %c0_i32_1 = arith.constant 0 : i32
    %c0_i32_2 = arith.constant 0 : i32
    return %c0_i32, %c0_i32_0, %c0_i32_1 : i32, i32, i32
  }
  func.func @transform_9(%arg0: i32) -> (i32, i32, i32) {
    %c0_i32 = arith.constant 0 : i32
    %c0_i32_0 = arith.constant 0 : i32
    %c0_i32_1 = arith.constant 0 : i32
    %c0_i32_2 = arith.constant 0 : i32
    return %c0_i32, %c0_i32_0, %c0_i32_1 : i32, i32, i32
  }
  func.func @transform_10(%arg0: i32) -> (i32, i32, i32) {
    %c0_i32 = arith.constant 0 : i32
    %c0_i32_0 = arith.constant 0 : i32
    %c0_i32_1 = arith.constant 0 : i32
    %c0_i32_2 = arith.constant 0 : i32
    return %c0_i32, %c0_i32_0, %c0_i32_1 : i32, i32, i32
  }
  func.func @transform_11(%arg0: i32) -> (i32, i32, i32) {
    %c0_i32 = arith.constant 0 : i32
    %c0_i32_0 = arith.constant 0 : i32
    %c0_i32_1 = arith.constant 0 : i32
    %c0_i32_2 = arith.constant 0 : i32
    return %c0_i32, %c0_i32_0, %c0_i32_1 : i32, i32, i32
  }
  func.func @transform_12(%arg0: i32) -> (i32, i32, i32) {
    %c0_i32 = arith.constant 0 : i32
    %c0_i32_0 = arith.constant 0 : i32
    %c0_i32_1 = arith.constant 0 : i32
    %c0_i32_2 = arith.constant 0 : i32
    return %c0_i32, %c0_i32_0, %c0_i32_1 : i32, i32, i32
  }
  func.func @transform_13(%arg0: i32) -> (i32, i32, i32) {
    %c0_i32 = arith.constant 0 : i32
    %c0_i32_0 = arith.constant 0 : i32
    %c0_i32_1 = arith.constant 0 : i32
    %c0_i32_2 = arith.constant 0 : i32
    return %c0_i32, %c0_i32_0, %c0_i32_1 : i32, i32, i32
  }
  func.func @transform_14(%arg0: i32) -> (i32, i32, i32) {
    %c0_i32 = arith.constant 0 : i32
    %c0_i32_0 = arith.constant 0 : i32
    %c0_i32_1 = arith.constant 0 : i32
    %c0_i32_2 = arith.constant 0 : i32
    return %c0_i32, %c0_i32_0, %c0_i32_1 : i32, i32, i32
  }
  func.func @transform_15(%arg0: i32) -> (i32, i32) {
    %c0_i32 = arith.constant 0 : i32
    %c0_i32_0 = arith.constant 0 : i32
    %c0_i32_1 = arith.constant 0 : i32
    return %c0_i32, %c0_i32_0 : i32, i32
  }
  func.func @transform_16(%arg0: i32) -> (i32, i32) {
    %c0_i32 = arith.constant 0 : i32
    %c0_i32_0 = arith.constant 0 : i32
    %c0_i32_1 = arith.constant 0 : i32
    return %c0_i32, %c0_i32_0 : i32, i32
  }
  func.func @transform_17(%arg0: i32) -> (i32, i32) {
    %c0_i32 = arith.constant 0 : i32
    %c0_i32_0 = arith.constant 0 : i32
    %c0_i32_1 = arith.constant 0 : i32
    return %c0_i32, %c0_i32_0 : i32, i32
  }
  func.func @transform_18(%arg0: i32) -> (i32, i32) {
    %c0_i32 = arith.constant 0 : i32
    %c0_i32_0 = arith.constant 0 : i32
    %c0_i32_1 = arith.constant 0 : i32
    return %c0_i32, %c0_i32_0 : i32, i32
  }
  func.func @transform_19(%arg0: i32) -> (i32, i32) {
    %c0_i32 = arith.constant 0 : i32
    %c0_i32_0 = arith.constant 0 : i32
    %c0_i32_1 = arith.constant 0 : i32
    return %c0_i32, %c0_i32_0 : i32, i32
  }
  func.func @transform_20(%arg0: i32) -> (i32, i32) {
    %c0_i32 = arith.constant 0 : i32
    %c0_i32_0 = arith.constant 0 : i32
    %c0_i32_1 = arith.constant 0 : i32
    return %c0_i32, %c0_i32_0 : i32, i32
  }
  func.func @transform_21(%arg0: i32) -> (i32, i32, i32) {
    %c0_i32 = arith.constant 0 : i32
    %c0_i32_0 = arith.constant 0 : i32
    %c0_i32_1 = arith.constant 0 : i32
    return %arg0, %c0_i32, %c0_i32_0 : i32, i32, i32
  }
}

</mosaic_0001>

<llo_original>
// kernel: tpu_custom_call.1
$region0: #{tpu_custom_call.1}
  #allocation0 [shape = 'u32[]', space=smem, size = 0x4, offset = 0x4, fixed_abs, tag = 'smem constant byte address 0x4 - core index']
  #allocation1 [shape = 'u32[144,128]{1,0:T(1,128)}', space=vmem, size = 0x12000, scoped, tag = 'internal scratch']
  %s0 = inlined_call_operand.vmem [shape: f32[2,17,56], index: 0, kind: input, shape index: {}]
  %s1 = inlined_call_operand.vmem [shape: f32[56,32], index: 1, kind: input, shape index: {}]
  %s2 = inlined_call_operand.vmem [shape: f32[17,32], index: 2, kind: input, shape index: {}]
  %s3 = inlined_call_operand.vmem [shape: f32[2,1,32], index: 3, kind: input, shape index: {}]
  %s4 = inlined_call_operand.vmem [shape: f32[2,1,32], index: 4, kind: input, shape index: {}]
  %s5 = inlined_call_operand.vmem [shape: f32[2,32,96], index: 5, kind: input, shape index: {}]
  %s6 = inlined_call_operand.vmem [shape: f32[2,1,96], index: 6, kind: input, shape index: {}]
  %s7 = inlined_call_operand.vmem [shape: f32[2,32,32], index: 7, kind: input, shape index: {}]
  %s8 = inlined_call_operand.vmem [shape: f32[2,1,32], index: 8, kind: input, shape index: {}]
  %s9 = inlined_call_operand.vmem [shape: f32[2,1,32], index: 9, kind: input, shape index: {}]
  %s10 = inlined_call_operand.vmem [shape: f32[2,1,32], index: 10, kind: input, shape index: {}]
  %s11 = inlined_call_operand.vmem [shape: f32[2,32,128], index: 11, kind: input, shape index: {}]
  %s12 = inlined_call_operand.vmem [shape: f32[2,1,128], index: 12, kind: input, shape index: {}]
  %s13 = inlined_call_operand.vmem [shape: f32[2,128,32], index: 13, kind: input, shape index: {}]
  %s14 = inlined_call_operand.vmem [shape: f32[2,1,32], index: 14, kind: input, shape index: {}]
  %s15 = inlined_call_operand.vmem [shape: f32[1,32], index: 15, kind: input, shape index: {}]
  %s16 = inlined_call_operand.vmem [shape: f32[1,32], index: 16, kind: input, shape index: {}]
  %s17 = inlined_call_operand.vmem [shape: f32[1,32], index: 17, kind: input, shape index: {}]
  %s18 = inlined_call_operand.vmem [shape: f32[1,32], index: 18, kind: input, shape index: {}]
  %s19 = inlined_call_operand.vmem [shape: f32[32,128], index: 19, kind: input, shape index: {}]
  %s20 = inlined_call_operand.vmem [shape: f32[1,128], index: 20, kind: input, shape index: {}]
  %s21 = inlined_call_operand.hbm [shape: f32[2,8,128], index: 21, kind: output, shape index: {}]
  %s22 = sld [smem:[#allocation0]]
  $region117: #{tpu_custom_call.1} parent=0
    _
  %s24 = ssub.s32 1, %s22
  %s25 = scalar_select 0, %s24, %s22
  $region1: #{tpu_custom_call.1} parent=0
    #allocation2 [shape = 'u8[8192]{0}', space=vmem, size = 0x2000, scoped, tag = 'output window, operand 0']
    #allocation3 [shape = 's32[2]{0}', space=sflag, size = 0x8, scoped, tag = 'scoped memory for tpu_custom_call.1']
    %26 = vsyncpa [#allocation3], 0
    %s27 = scalar_lea.sflag [#allocation3], 1
    %28 = vsyncpa %s27, 0
    loop: start=0, step=1, limit=4
    $region2: #{tpu_custom_call.1} parent=1 // loop_pre_header
      _
    $region3: #{tpu_custom_call.1} parent=1 // loop_header
      %s30 = sphi 0, %s34
      %p31 = scmp.ge.s32.totalorder %s30, 4
      %s40 = sphi 0, %s42
      %s43 = sphi 0, %s40
      %s44 = sphi 0, %s43
      %s60 = sphi 0, %s44
      %s64 = sphi 0, %s64
      %s66 = sphi 0, %s64
      %s67 = sphi 0, %s66
      %s81 = sphi 0, %s67
      %s85 = sphi 0, %s85
      %s87 = sphi 0, %s85
      %s88 = sphi 0, %s87
      %s102 = sphi 0, %s88
      %s106 = sphi 0, %s106
      %s108 = sphi 0, %s106
      %s109 = sphi 0, %s108
      %s123 = sphi 0, %s109
      %s127 = sphi 0, %s127
      %s129 = sphi 0, %s127
      %s130 = sphi 0, %s129
      %s144 = sphi 0, %s130
      %s148 = sphi 0, %s148
      %s150 = sphi 0, %s148
      %s151 = sphi 0, %s150
      %s165 = sphi 0, %s151
      %s169 = sphi 0, %s169
      %s171 = sphi 0, %s169
      %s172 = sphi 0, %s171
      %s186 = sphi 0, %s172
      %s190 = sphi 0, %s190
      %s192 = sphi 0, %s190
      %s193 = sphi 0, %s192
      %s207 = sphi 0, %s193
      %s211 = sphi 0, %s211
      %s213 = sphi 0, %s211
      %s214 = sphi 0, %s213
      %s228 = sphi 0, %s214
      %s232 = sphi 0, %s232
      %s234 = sphi 0, %s232
      %s235 = sphi 0, %s234
      %s249 = sphi 0, %s235
      %s253 = sphi 0, %s253
      %s255 = sphi 0, %s253
      %s256 = sphi 0, %s255
      %s270 = sphi 0, %s256
      %s274 = sphi 0, %s274
      %s276 = sphi 0, %s274
      %s277 = sphi 0, %s276
      %s291 = sphi 0, %s277
      %s295 = sphi 0, %s295
      %s297 = sphi 0, %s295
      %s298 = sphi 0, %s297
      %s312 = sphi 0, %s298
      %s316 = sphi 0, %s316
      %s318 = sphi 0, %s316
      %s319 = sphi 0, %s318
      %s333 = sphi 0, %s319
      %s337 = sphi 0, %s337
      %s339 = sphi 0, %s337
      %s340 = sphi 0, %s339
      %s354 = sphi 0, %s340
      %s358 = sphi 0, %s358
      %s360 = sphi 0, %s358
      %s361 = sphi 0, %s360
      %s375 = sphi 0, %s361
      %s379 = sphi 0, %s379
      %s381 = sphi 0, %s379
      %s382 = sphi 0, %s381
      %s396 = sphi 0, %s382
      %s400 = sphi 0, %s400
      %s402 = sphi 0, %s400
      %s403 = sphi 0, %s402
      %s417 = sphi 0, %s403
      %s421 = sphi 0, %s421
      %s423 = sphi 0, %s421
      %s424 = sphi 0, %s423
      %s438 = sphi 0, %s424
      %s442 = sphi 0, %s442
      %s444 = sphi 0, %s442
      %s445 = sphi 0, %s444
      %s459 = sphi 0, %s445
      %s463 = sphi 0, %s463
      %s465 = sphi 0, %s463
      %s466 = sphi 0, %s465
      %s480 = sphi 0, %s466
      %s486 = sphi 0, %s488
      %s489 = sphi 0, %s486
      %s490 = sphi 0, %s489
      %s506 = sphi 0, %s490
    $region4: #{tpu_custom_call.1} parent=1 // loop_header_branch
      %33 = sbr.rel (%p31) target = $region8
    $region5: #{tpu_custom_call.1} parent=1 // loop_body
      %s35 = ssub.s32 %s30, 1
      %s36 = ssub.s32 %s30, 2
      %s37 = sadd.s32 %s30, 1
      %s38 = ssub.s32 %s30, %s37
      %p39 = scmp.eq.s32.totalorder %s38, 0
      %s41 = sadd.s32 %s40, 1
      %s42 = scalar_select %p39, %s40, %s41
      %p45 = pneg %p39
      %p46 = scmp.eq.s32.totalorder %s30, 1
      %p47 = por %p45, %p46
      %p48 = scmp.ne.s32.totalorder %s40, %s43
      %p49 = scmp.eq.s32.totalorder %s30, 0
      %p50 = por %p48, %p49
      %p51 = scmp.ne.s32.totalorder %s40, %s43
      %p52 = scmp.eq.s32.totalorder %s35, 1
      %p53 = por %p51, %p52
      %p54 = scmp.ne.s32.totalorder %s43, %s44
      %p55 = scmp.eq.s32.totalorder %s35, 0
      %p56 = por %p54, %p55
      %p57 = scmp.ne.s32.totalorder %s43, %s44
      %p58 = scmp.eq.s32.totalorder %s36, 1
      %p59 = por %p57, %p58
      %p61 = scmp.ne.s32.totalorder %s44, %s60
      %p62 = scmp.eq.s32.totalorder %s36, 0
      %p63 = por %p61, %p62
      %s65 = sadd.s32 %s64, 1
      %p68 = scmp.eq.s32.totalorder %s30, 1
      %p69 = scmp.ne.s32.totalorder %s64, %s66
      %p70 = scmp.eq.s32.totalorder %s30, 0
      %p71 = por %p69, %p70
      %p72 = scmp.ne.s32.totalorder %s64, %s66
      %p73 = scmp.eq.s32.totalorder %s35, 1
      %p74 = por %p72, %p73
      %p75 = scmp.ne.s32.totalorder %s66, %s67
      %p76 = scmp.eq.s32.totalorder %s35, 0
      %p77 = por %p75, %p76
      %p78 = scmp.ne.s32.totalorder %s66, %s67
      %p79 = scmp.eq.s32.totalorder %s36, 1
      %p80 = por %p78, %p79
      %p82 = scmp.ne.s32.totalorder %s67, %s81
      %p83 = scmp.eq.s32.totalorder %s36, 0
      %p84 = por %p82, %p83
      %s86 = sadd.s32 %s85, 1
      %p89 = scmp.eq.s32.totalorder %s30, 1
      %p90 = scmp.ne.s32.totalorder %s85, %s87
      %p91 = scmp.eq.s32.totalorder %s30, 0
      %p92 = por %p90, %p91
      %p93 = scmp.ne.s32.totalorder %s85, %s87
      %p94 = scmp.eq.s32.totalorder %s35, 1
      %p95 = por %p93, %p94
      %p96 = scmp.ne.s32.totalorder %s87, %s88
      %p97 = scmp.eq.s32.totalorder %s35, 0
      %p98 = por %p96, %p97
      %p99 = scmp.ne.s32.totalorder %s87, %s88
      %p100 = scmp.eq.s32.totalorder %s36, 1
      %p101 = por %p99, %p100
      %p103 = scmp.ne.s32.totalorder %s88, %s102
      %p104 = scmp.eq.s32.totalorder %s36, 0
      %p105 = por %p103, %p104
      %s107 = sadd.s32 %s106, 1
      %p110 = scmp.eq.s32.totalorder %s30, 1
      %p111 = scmp.ne.s32.totalorder %s106, %s108
      %p112 = scmp.eq.s32.totalorder %s30, 0
      %p113 = por %p111, %p112
      %p114 = scmp.ne.s32.totalorder %s106, %s108
      %p115 = scmp.eq.s32.totalorder %s35, 1
      %p116 = por %p114, %p115
      %p117 = scmp.ne.s32.totalorder %s108, %s109
      %p118 = scmp.eq.s32.totalorder %s35, 0
      %p119 = por %p117, %p118
      %p120 = scmp.ne.s32.totalorder %s108, %s109
      %p121 = scmp.eq.s32.totalorder %s36, 1
      %p122 = por %p120, %p121
      %p124 = scmp.ne.s32.totalorder %s109, %s123
      %p125 = scmp.eq.s32.totalorder %s36, 0
      %p126 = por %p124, %p125
      %s128 = sadd.s32 %s127, 1
      %p131 = scmp.eq.s32.totalorder %s30, 1
      %p132 = scmp.ne.s32.totalorder %s127, %s129
      %p133 = scmp.eq.s32.totalorder %s30, 0
      %p134 = por %p132, %p133
      %p135 = scmp.ne.s32.totalorder %s127, %s129
      %p136 = scmp.eq.s32.totalorder %s35, 1
      %p137 = por %p135, %p136
      %p138 = scmp.ne.s32.totalorder %s129, %s130
      %p139 = scmp.eq.s32.totalorder %s35, 0
      %p140 = por %p138, %p139
      %p141 = scmp.ne.s32.totalorder %s129, %s130
      %p142 = scmp.eq.s32.totalorder %s36, 1
      %p143 = por %p141, %p142
      %p145 = scmp.ne.s32.totalorder %s130, %s144
      %p146 = scmp.eq.s32.totalorder %s36, 0
      %p147 = por %p145, %p146
      %s149 = sadd.s32 %s148, 1
      %p152 = scmp.eq.s32.totalorder %s30, 1
      %p153 = scmp.ne.s32.totalorder %s148, %s150
      %p154 = scmp.eq.s32.totalorder %s30, 0
      %p155 = por %p153, %p154
      %p156 = scmp.ne.s32.totalorder %s148, %s150
      %p157 = scmp.eq.s32.totalorder %s35, 1
      %p158 = por %p156, %p157
      %p159 = scmp.ne.s32.totalorder %s150, %s151
      %p160 = scmp.eq.s32.totalorder %s35, 0
      %p161 = por %p159, %p160
      %p162 = scmp.ne.s32.totalorder %s150, %s151
      %p163 = scmp.eq.s32.totalorder %s36, 1
      %p164 = por %p162, %p163
      %p166 = scmp.ne.s32.totalorder %s151, %s165
      %p167 = scmp.eq.s32.totalorder %s36, 0
      %p168 = por %p166, %p167
      %s170 = sadd.s32 %s169, 1
      %p173 = scmp.eq.s32.totalorder %s30, 1
      %p174 = scmp.ne.s32.totalorder %s169, %s171
      %p175 = scmp.eq.s32.totalorder %s30, 0
      %p176 = por %p174, %p175
      %p177 = scmp.ne.s32.totalorder %s169, %s171
      %p178 = scmp.eq.s32.totalorder %s35, 1
      %p179 = por %p177, %p178
      %p180 = scmp.ne.s32.totalorder %s171, %s172
      %p181 = scmp.eq.s32.totalorder %s35, 0
      %p182 = por %p180, %p181
      %p183 = scmp.ne.s32.totalorder %s171, %s172
      %p184 = scmp.eq.s32.totalorder %s36, 1
      %p185 = por %p183, %p184
      %p187 = scmp.ne.s32.totalorder %s172, %s186
      %p188 = scmp.eq.s32.totalorder %s36, 0
      %p189 = por %p187, %p188
      %s191 = sadd.s32 %s190, 1
      %p194 = scmp.eq.s32.totalorder %s30, 1
      %p195 = scmp.ne.s32.totalorder %s190, %s192
      %p196 = scmp.eq.s32.totalorder %s30, 0
      %p197 = por %p195, %p196
      %p198 = scmp.ne.s32.totalorder %s190, %s192
      %p199 = scmp.eq.s32.totalorder %s35, 1
      %p200 = por %p198, %p199
      %p201 = scmp.ne.s32.totalorder %s192, %s193
      %p202 = scmp.eq.s32.totalorder %s35, 0
      %p203 = por %p201, %p202
      %p204 = scmp.ne.s32.totalorder %s192, %s193
      %p205 = scmp.eq.s32.totalorder %s36, 1
      %p206 = por %p204, %p205
      %p208 = scmp.ne.s32.totalorder %s193, %s207
      %p209 = scmp.eq.s32.totalorder %s36, 0
      %p210 = por %p208, %p209
      %s212 = sadd.s32 %s211, 1
      %p215 = scmp.eq.s32.totalorder %s30, 1
      %p216 = scmp.ne.s32.totalorder %s211, %s213
      %p217 = scmp.eq.s32.totalorder %s30, 0
      %p218 = por %p216, %p217
      %p219 = scmp.ne.s32.totalorder %s211, %s213
      %p220 = scmp.eq.s32.totalorder %s35, 1
      %p221 = por %p219, %p220
      %p222 = scmp.ne.s32.totalorder %s213, %s214
      %p223 = scmp.eq.s32.totalorder %s35, 0
      %p224 = por %p222, %p223
      %p225 = scmp.ne.s32.totalorder %s213, %s214
      %p226 = scmp.eq.s32.totalorder %s36, 1
      %p227 = por %p225, %p226
      %p229 = scmp.ne.s32.totalorder %s214, %s228
      %p230 = scmp.eq.s32.totalorder %s36, 0
      %p231 = por %p229, %p230
      %s233 = sadd.s32 %s232, 1
      %p236 = scmp.eq.s32.totalorder %s30, 1
      %p237 = scmp.ne.s32.totalorder %s232, %s234
      %p238 = scmp.eq.s32.totalorder %s30, 0
      %p239 = por %p237, %p238
      %p240 = scmp.ne.s32.totalorder %s232, %s234
      %p241 = scmp.eq.s32.totalorder %s35, 1
      %p242 = por %p240, %p241
      %p243 = scmp.ne.s32.totalorder %s234, %s235
      %p244 = scmp.eq.s32.totalorder %s35, 0
      %p245 = por %p243, %p244
      %p246 = scmp.ne.s32.totalorder %s234, %s235
      %p247 = scmp.eq.s32.totalorder %s36, 1
      %p248 = por %p246, %p247
      %p250 = scmp.ne.s32.totalorder %s235, %s249
      %p251 = scmp.eq.s32.totalorder %s36, 0
      %p252 = por %p250, %p251
      %s254 = sadd.s32 %s253, 1
      %p257 = scmp.eq.s32.totalorder %s30, 1
      %p258 = scmp.ne.s32.totalorder %s253, %s255
      %p259 = scmp.eq.s32.totalorder %s30, 0
      %p260 = por %p258, %p259
      %p261 = scmp.ne.s32.totalorder %s253, %s255
      %p262 = scmp.eq.s32.totalorder %s35, 1
      %p263 = por %p261, %p262
      %p264 = scmp.ne.s32.totalorder %s255, %s256
      %p265 = scmp.eq.s32.totalorder %s35, 0
      %p266 = por %p264, %p265
      %p267 = scmp.ne.s32.totalorder %s255, %s256
      %p268 = scmp.eq.s32.totalorder %s36, 1
      %p269 = por %p267, %p268
      %p271 = scmp.ne.s32.totalorder %s256, %s270
      %p272 = scmp.eq.s32.totalorder %s36, 0
      %p273 = por %p271, %p272
      %s275 = sadd.s32 %s274, 1
      %p278 = scmp.eq.s32.totalorder %s30, 1
      %p279 = scmp.ne.s32.totalorder %s274, %s276
      %p280 = scmp.eq.s32.totalorder %s30, 0
      %p281 = por %p279, %p280
      %p282 = scmp.ne.s32.totalorder %s274, %s276
      %p283 = scmp.eq.s32.totalorder %s35, 1
      %p284 = por %p282, %p283
      %p285 = scmp.ne.s32.totalorder %s276, %s277
      %p286 = scmp.eq.s32.totalorder %s35, 0
      %p287 = por %p285, %p286
      %p288 = scmp.ne.s32.totalorder %s276, %s277
      %p289 = scmp.eq.s32.totalorder %s36, 1
      %p290 = por %p288, %p289
      %p292 = scmp.ne.s32.totalorder %s277, %s291
      %p293 = scmp.eq.s32.totalorder %s36, 0
      %p294 = por %p292, %p293
      %s296 = sadd.s32 %s295, 1
      %p299 = scmp.eq.s32.totalorder %s30, 1
      %p300 = scmp.ne.s32.totalorder %s295, %s297
      %p301 = scmp.eq.s32.totalorder %s30, 0
      %p302 = por %p300, %p301
      %p303 = scmp.ne.s32.totalorder %s295, %s297
      %p304 = scmp.eq.s32.totalorder %s35, 1
      %p305 = por %p303, %p304
      %p306 = scmp.ne.s32.totalorder %s297, %s298
      %p307 = scmp.eq.s32.totalorder %s35, 0
      %p308 = por %p306, %p307
      %p309 = scmp.ne.s32.totalorder %s297, %s298
      %p310 = scmp.eq.s32.totalorder %s36, 1
      %p311 = por %p309, %p310
      %p313 = scmp.ne.s32.totalorder %s298, %s312
      %p314 = scmp.eq.s32.totalorder %s36, 0
      %p315 = por %p313, %p314
      %s317 = sadd.s32 %s316, 1
      %p320 = scmp.eq.s32.totalorder %s30, 1
      %p321 = scmp.ne.s32.totalorder %s316, %s318
      %p322 = scmp.eq.s32.totalorder %s30, 0
      %p323 = por %p321, %p322
      %p324 = scmp.ne.s32.totalorder %s316, %s318
      %p325 = scmp.eq.s32.totalorder %s35, 1
      %p326 = por %p324, %p325
      %p327 = scmp.ne.s32.totalorder %s318, %s319
      %p328 = scmp.eq.s32.totalorder %s35, 0
      %p329 = por %p327, %p328
      %p330 = scmp.ne.s32.totalorder %s318, %s319
      %p331 = scmp.eq.s32.totalorder %s36, 1
      %p332 = por %p330, %p331
      %p334 = scmp.ne.s32.totalorder %s319, %s333
      %p335 = scmp.eq.s32.totalorder %s36, 0
      %p336 = por %p334, %p335
      %s338 = sadd.s32 %s337, 1
      %p341 = scmp.eq.s32.totalorder %s30, 1
      %p342 = scmp.ne.s32.totalorder %s337, %s339
      %p343 = scmp.eq.s32.totalorder %s30, 0
      %p344 = por %p342, %p343
      %p345 = scmp.ne.s32.totalorder %s337, %s339
      %p346 = scmp.eq.s32.totalorder %s35, 1
      %p347 = por %p345, %p346
      %p348 = scmp.ne.s32.totalorder %s339, %s340
      %p349 = scmp.eq.s32.totalorder %s35, 0
      %p350 = por %p348, %p349
      %p351 = scmp.ne.s32.totalorder %s339, %s340
      %p352 = scmp.eq.s32.totalorder %s36, 1
      %p353 = por %p351, %p352
      %p355 = scmp.ne.s32.totalorder %s340, %s354
      %p356 = scmp.eq.s32.totalorder %s36, 0
      %p357 = por %p355, %p356
      %s359 = sadd.s32 %s358, 1
      %p362 = scmp.eq.s32.totalorder %s30, 1
      %p363 = scmp.ne.s32.totalorder %s358, %s360
      %p364 = scmp.eq.s32.totalorder %s30, 0
      %p365 = por %p363, %p364
      %p366 = scmp.ne.s32.totalorder %s358, %s360
      %p367 = scmp.eq.s32.totalorder %s35, 1
      %p368 = por %p366, %p367
      %p369 = scmp.ne.s32.totalorder %s360, %s361
      %p370 = scmp.eq.s32.totalorder %s35, 0
      %p371 = por %p369, %p370
      %p372 = scmp.ne.s32.totalorder %s360, %s361
      %p373 = scmp.eq.s32.totalorder %s36, 1
      %p374 = por %p372, %p373
      %p376 = scmp.ne.s32.totalorder %s361, %s375
      %p377 = scmp.eq.s32.totalorder %s36, 0
      %p378 = por %p376, %p377
      %s380 = sadd.s32 %s379, 1
      %p383 = scmp.eq.s32.totalorder %s30, 1
      %p384 = scmp.ne.s32.totalorder %s379, %s381
      %p385 = scmp.eq.s32.totalorder %s30, 0
      %p386 = por %p384, %p385
      %p387 = scmp.ne.s32.totalorder %s379, %s381
      %p388 = scmp.eq.s32.totalorder %s35, 1
      %p389 = por %p387, %p388
      %p390 = scmp.ne.s32.totalorder %s381, %s382
      %p391 = scmp.eq.s32.totalorder %s35, 0
      %p392 = por %p390, %p391
      %p393 = scmp.ne.s32.totalorder %s381, %s382
      %p394 = scmp.eq.s32.totalorder %s36, 1
      %p395 = por %p393, %p394
      %p397 = scmp.ne.s32.totalorder %s382, %s396
      %p398 = scmp.eq.s32.totalorder %s36, 0
      %p399 = por %p397, %p398
      %s401 = sadd.s32 %s400, 1
      %p404 = scmp.eq.s32.totalorder %s30, 1
      %p405 = scmp.ne.s32.totalorder %s400, %s402
      %p406 = scmp.eq.s32.totalorder %s30, 0
      %p407 = por %p405, %p406
      %p408 = scmp.ne.s32.totalorder %s400, %s402
      %p409 = scmp.eq.s32.totalorder %s35, 1
      %p410 = por %p408, %p409
      %p411 = scmp.ne.s32.totalorder %s402, %s403
      %p412 = scmp.eq.s32.totalorder %s35, 0
      %p413 = por %p411, %p412
      %p414 = scmp.ne.s32.totalorder %s402, %s403
      %p415 = scmp.eq.s32.totalorder %s36, 1
      %p416 = por %p414, %p415
      %p418 = scmp.ne.s32.totalorder %s403, %s417
      %p419 = scmp.eq.s32.totalorder %s36, 0
      %p420 = por %p418, %p419
      %s422 = sadd.s32 %s421, 1
      %p425 = scmp.eq.s32.totalorder %s30, 1
      %p426 = scmp.ne.s32.totalorder %s421, %s423
      %p427 = scmp.eq.s32.totalorder %s30, 0
      %p428 = por %p426, %p427
      %p429 = scmp.ne.s32.totalorder %s421, %s423
      %p430 = scmp.eq.s32.totalorder %s35, 1
      %p431 = por %p429, %p430
      %p432 = scmp.ne.s32.totalorder %s423, %s424
      %p433 = scmp.eq.s32.totalorder %s35, 0
      %p434 = por %p432, %p433
      %p435 = scmp.ne.s32.totalorder %s423, %s424
      %p436 = scmp.eq.s32.totalorder %s36, 1
      %p437 = por %p435, %p436
      %p439 = scmp.ne.s32.totalorder %s424, %s438
      %p440 = scmp.eq.s32.totalorder %s36, 0
      %p441 = por %p439, %p440
      %s443 = sadd.s32 %s442, 1
      %p446 = scmp.eq.s32.totalorder %s30, 1
      %p447 = scmp.ne.s32.totalorder %s442, %s444
      %p448 = scmp.eq.s32.totalorder %s30, 0
      %p449 = por %p447, %p448
      %p450 = scmp.ne.s32.totalorder %s442, %s444
      %p451 = scmp.eq.s32.totalorder %s35, 1
      %p452 = por %p450, %p451
      %p453 = scmp.ne.s32.totalorder %s444, %s445
      %p454 = scmp.eq.s32.totalorder %s35, 0
      %p455 = por %p453, %p454
      %p456 = scmp.ne.s32.totalorder %s444, %s445
      %p457 = scmp.eq.s32.totalorder %s36, 1
      %p458 = por %p456, %p457
      %p460 = scmp.ne.s32.totalorder %s445, %s459
      %p461 = scmp.eq.s32.totalorder %s36, 0
      %p462 = por %p460, %p461
      %s464 = sadd.s32 %s463, 1
      %p467 = scmp.eq.s32.totalorder %s30, 1
      %p468 = scmp.ne.s32.totalorder %s463, %s465
      %p469 = scmp.eq.s32.totalorder %s30, 0
      %p470 = por %p468, %p469
      %p471 = scmp.ne.s32.totalorder %s463, %s465
      %p472 = scmp.eq.s32.totalorder %s35, 1
      %p473 = por %p471, %p472
      %p474 = scmp.ne.s32.totalorder %s465, %s466
      %p475 = scmp.eq.s32.totalorder %s35, 0
      %p476 = por %p474, %p475
      %p477 = scmp.ne.s32.totalorder %s465, %s466
      %p478 = scmp.eq.s32.totalorder %s36, 1
      %p479 = por %p477, %p478
      %p481 = scmp.ne.s32.totalorder %s466, %s480
      %p482 = scmp.eq.s32.totalorder %s36, 0
      %p483 = por %p481, %p482
      %s484 = ssub.s32 %s30, %s37
      %p485 = scmp.eq.s32.totalorder %s484, 0
      %s487 = sadd.s32 %s486, 1
      %s488 = scalar_select %p485, %s486, %s487
      %p491 = pneg %p485
      %p492 = scmp.eq.s32.totalorder %s30, 1
      %p493 = por %p491, %p492
      %p494 = scmp.ne.s32.totalorder %s486, %s489
      %p495 = scmp.eq.s32.totalorder %s30, 0
      %p496 = por %p494, %p495
      %p497 = scmp.ne.s32.totalorder %s486, %s489
      %p498 = scmp.eq.s32.totalorder %s35, 1
      %p499 = por %p497, %p498
      %p500 = scmp.ne.s32.totalorder %s489, %s490
      %p501 = scmp.eq.s32.totalorder %s35, 0
      %p502 = por %p500, %p501
      %p503 = scmp.ne.s32.totalorder %s489, %s490
      %p504 = scmp.eq.s32.totalorder %s36, 1
      %p505 = por %p503, %p504
      %p507 = scmp.ne.s32.totalorder %s490, %s506
      %p508 = scmp.eq.s32.totalorder %s36, 0
      %p509 = por %p507, %p508
      %p510 = scmp.le.s32.totalorder 1, %s30
      %p511 = scmp.lt.s32.totalorder %s30, 3
      %p512 = pnand %p510, %p511
      %p513 = pneg %p512
      // Predicated region
      $region9: #{tpu_custom_call.1} parent=5 // pred_check
        _
      $region10: #{tpu_custom_call.1} parent=5 // pred_check_branch
        %515 = sbr.rel (%p512) target = $region12
      $region11: #{tpu_custom_call.1} parent=5 // pred_region
        %s516 = ssub.s32 %s30, 1
        // Predicated region
        $region13: #{tpu_custom_call.1} parent=11 // pred_check
          %p517 = pneg %p77
        $region14: #{tpu_custom_call.1} parent=11 // pred_check_branch
          %519 = sbr.rel (%p517) target = $region16
        $region15: #{tpu_custom_call.1} parent=11 // pred_region
          _
        $region16: #{tpu_custom_call.1} parent=11 // pred_fallthru
          _
        // Predicated region
        $region17: #{tpu_custom_call.1} parent=11 // pred_check
          %p520 = pneg %p98
        $region18: #{tpu_custom_call.1} parent=11 // pred_check_branch
          %522 = sbr.rel (%p520) target = $region20
        $region19: #{tpu_custom_call.1} parent=11 // pred_region
          _
        $region20: #{tpu_custom_call.1} parent=11 // pred_fallthru
          _
        // Predicated region
        $region21: #{tpu_custom_call.1} parent=11 // pred_check
          %p523 = pneg %p119
        $region22: #{tpu_custom_call.1} parent=11 // pred_check_branch
          %525 = sbr.rel (%p523) target = $region24
        $region23: #{tpu_custom_call.1} parent=11 // pred_region
          _
        $region24: #{tpu_custom_call.1} parent=11 // pred_fallthru
          _
        // Predicated region
        $region25: #{tpu_custom_call.1} parent=11 // pred_check
          %p526 = pneg %p140
        $region26: #{tpu_custom_call.1} parent=11 // pred_check_branch
          %528 = sbr.rel (%p526) target = $region28
        $region27: #{tpu_custom_call.1} parent=11 // pred_region
          _
        $region28: #{tpu_custom_call.1} parent=11 // pred_fallthru
          _
        // Predicated region
        $region29: #{tpu_custom_call.1} parent=11 // pred_check
          %p529 = pneg %p161
        $region30: #{tpu_custom_call.1} parent=11 // pred_check_branch
          %531 = sbr.rel (%p529) target = $region32
        $region31: #{tpu_custom_call.1} parent=11 // pred_region
          _
        $region32: #{tpu_custom_call.1} parent=11 // pred_fallthru
          _
        // Predicated region
        $region33: #{tpu_custom_call.1} parent=11 // pred_check
          %p532 = pneg %p182
        $region34: #{tpu_custom_call.1} parent=11 // pred_check_branch
          %534 = sbr.rel (%p532) target = $region36
        $region35: #{tpu_custom_call.1} parent=11 // pred_region
          _
        $region36: #{tpu_custom_call.1} parent=11 // pred_fallthru
          _
        // Predicated region
        $region37: #{tpu_custom_call.1} parent=11 // pred_check
          %p535 = pneg %p203
        $region38: #{tpu_custom_call.1} parent=11 // pred_check_branch
          %537 = sbr.rel (%p535) target = $region40
        $region39: #{tpu_custom_call.1} parent=11 // pred_region
          _
        $region40: #{tpu_custom_call.1} parent=11 // pred_fallthru
          _
        // Predicated region
        $region41: #{tpu_custom_call.1} parent=11 // pred_check
          %p538 = pneg %p224
        $region42: #{tpu_custom_call.1} parent=11 // pred_check_branch
          %540 = sbr.rel (%p538) target = $region44
        $region43: #{tpu_custom_call.1} parent=11 // pred_region
          _
        $region44: #{tpu_custom_call.1} parent=11 // pred_fallthru
          _
        // Predicated region
        $region45: #{tpu_custom_call.1} parent=11 // pred_check
          %p541 = pneg %p245
        $region46: #{tpu_custom_call.1} parent=11 // pred_check_branch
          %543 = sbr.rel (%p541) target = $region48
        $region47: #{tpu_custom_call.1} parent=11 // pred_region
          _
        $region48: #{tpu_custom_call.1} parent=11 // pred_fallthru
          _
        // Predicated region
        $region49: #{tpu_custom_call.1} parent=11 // pred_check
          %p544 = pneg %p266
        $region50: #{tpu_custom_call.1} parent=11 // pred_check_branch
          %546 = sbr.rel (%p544) target = $region52
        $region51: #{tpu_custom_call.1} parent=11 // pred_region
          _
        $region52: #{tpu_custom_call.1} parent=11 // pred_fallthru
          _
        // Predicated region
        $region53: #{tpu_custom_call.1} parent=11 // pred_check
          %p547 = pneg %p287
        $region54: #{tpu_custom_call.1} parent=11 // pred_check_branch
          %549 = sbr.rel (%p547) target = $region56
        $region55: #{tpu_custom_call.1} parent=11 // pred_region
          _
        $region56: #{tpu_custom_call.1} parent=11 // pred_fallthru
          _
        // Predicated region
        $region57: #{tpu_custom_call.1} parent=11 // pred_check
          %p550 = pneg %p308
        $region58: #{tpu_custom_call.1} parent=11 // pred_check_branch
          %552 = sbr.rel (%p550) target = $region60
        $region59: #{tpu_custom_call.1} parent=11 // pred_region
          _
        $region60: #{tpu_custom_call.1} parent=11 // pred_fallthru
          _
        // Predicated region
        $region61: #{tpu_custom_call.1} parent=11 // pred_check
          %p553 = pneg %p329
        $region62: #{tpu_custom_call.1} parent=11 // pred_check_branch
          %555 = sbr.rel (%p553) target = $region64
        $region63: #{tpu_custom_call.1} parent=11 // pred_region
          _
        $region64: #{tpu_custom_call.1} parent=11 // pred_fallthru
          _
        // Predicated region
        $region65: #{tpu_custom_call.1} parent=11 // pred_check
          %p556 = pneg %p350
        $region66: #{tpu_custom_call.1} parent=11 // pred_check_branch
          %558 = sbr.rel (%p556) target = $region68
        $region67: #{tpu_custom_call.1} parent=11 // pred_region
          _
        $region68: #{tpu_custom_call.1} parent=11 // pred_fallthru
          _
        // Predicated region
        $region69: #{tpu_custom_call.1} parent=11 // pred_check
          %p559 = pneg %p371
        $region70: #{tpu_custom_call.1} parent=11 // pred_check_branch
          %561 = sbr.rel (%p559) target = $region72
        $region71: #{tpu_custom_call.1} parent=11 // pred_region
          _
        $region72: #{tpu_custom_call.1} parent=11 // pred_fallthru
          _
        // Predicated region
        $region73: #{tpu_custom_call.1} parent=11 // pred_check
          %p562 = pneg %p392
        $region74: #{tpu_custom_call.1} parent=11 // pred_check_branch
          %564 = sbr.rel (%p562) target = $region76
        $region75: #{tpu_custom_call.1} parent=11 // pred_region
          _
        $region76: #{tpu_custom_call.1} parent=11 // pred_fallthru
          _
        // Predicated region
        $region77: #{tpu_custom_call.1} parent=11 // pred_check
          %p565 = pneg %p413
        $region78: #{tpu_custom_call.1} parent=11 // pred_check_branch
          %567 = sbr.rel (%p565) target = $region80
        $region79: #{tpu_custom_call.1} parent=11 // pred_region
          _
        $region80: #{tpu_custom_call.1} parent=11 // pred_fallthru
          _
        // Predicated region
        $region81: #{tpu_custom_call.1} parent=11 // pred_check
          %p568 = pneg %p434
        $region82: #{tpu_custom_call.1} parent=11 // pred_check_branch
          %570 = sbr.rel (%p568) target = $region84
        $region83: #{tpu_custom_call.1} parent=11 // pred_region
          _
        $region84: #{tpu_custom_call.1} parent=11 // pred_fallthru
          _
        // Predicated region
        $region85: #{tpu_custom_call.1} parent=11 // pred_check
          %p571 = pneg %p455
        $region86: #{tpu_custom_call.1} parent=11 // pred_check_branch
          %573 = sbr.rel (%p571) target = $region88
        $region87: #{tpu_custom_call.1} parent=11 // pred_region
          _
        $region88: #{tpu_custom_call.1} parent=11 // pred_fallthru
          _
        // Predicated region
        $region89: #{tpu_custom_call.1} parent=11 // pred_check
          %p574 = pneg %p476
        $region90: #{tpu_custom_call.1} parent=11 // pred_check_branch
          %576 = sbr.rel (%p574) target = $region92
        $region91: #{tpu_custom_call.1} parent=11 // pred_region
          _
        $region92: #{tpu_custom_call.1} parent=11 // pred_fallthru
          _
      $region12: #{tpu_custom_call.1} parent=5 // pred_fallthru
        _
      %p577 = scmp.lt.s32.totalorder %s30, 2
      // Predicated region
      $region93: #{tpu_custom_call.1} parent=5 // pred_check
        %p578 = pneg %p577
      $region94: #{tpu_custom_call.1} parent=5 // pred_check_branch
        %580 = sbr.rel (%p578) target = $region96
      $region95: #{tpu_custom_call.1} parent=5 // pred_region
        // Predicated region
        $region97: #{tpu_custom_call.1} parent=95 // pred_check
          %p581 = pneg %p50
        $region98: #{tpu_custom_call.1} parent=95 // pred_check_branch
          %583 = sbr.rel (%p581) target = $region100
        $region99: #{tpu_custom_call.1} parent=95 // pred_region
          %p584 = scmp.lt.s32.totalorder %s30, 1
          %s585 = scalar_select %p584, %s30, 1
          %s586 = smul.addr %s585, 3
          %s587 = smul.addr %s586, 8
          %s588 = scalar_lea.vmem %s0, %s587
        $region100: #{tpu_custom_call.1} parent=95 // pred_fallthru
          _
      $region96: #{tpu_custom_call.1} parent=5 // pred_fallthru
        _
      %p589 = scmp.le.s32.totalorder 1, %s30
      %p590 = scmp.lt.s32.totalorder %s30, 3
      %p591 = pnand %p589, %p590
      %p592 = pneg %p591
      // Predicated region
      $region101: #{tpu_custom_call.1} parent=5 // pred_check
        _
      $region102: #{tpu_custom_call.1} parent=5 // pred_check_branch
        %594 = sbr.rel (%p591) target = $region104
      $region103: #{tpu_custom_call.1} parent=5 // pred_region
        %s595 = ssub.s32 %s30, 1
        %p596 = scmp.lt.s32.totalorder %s35, 1
        %s597 = scalar_select %p596, %s35, 1
        %s598 = smul.addr %s597, 3
        %s599 = smul.addr %s598, 8
        %s600 = scalar_lea.vmem %s0, %s599
        %p601 = pneg %p56
        %p602 = pneg %p53
        %p603 = pneg %p77
        %p604 = pneg %p74
        %p605 = pneg %p98
        %p606 = pneg %p95
        %p607 = pneg %p119
        %p608 = pneg %p116
        %p609 = pneg %p140
        %p610 = pneg %p137
        %p611 = pneg %p161
        %p612 = pneg %p158
        %p613 = pneg %p182
        %p614 = pneg %p179
        %p615 = pneg %p203
        %p616 = pneg %p200
        %p617 = pneg %p224
        %p618 = pneg %p221
        %p619 = pneg %p245
        %p620 = pneg %p242
        %p621 = pneg %p266
        %p622 = pneg %p263
        %p623 = pneg %p287
        %p624 = pneg %p284
        %p625 = pneg %p308
        %p626 = pneg %p305
        %p627 = pneg %p329
        %p628 = pneg %p326
        %p629 = pneg %p350
        %p630 = pneg %p347
        %p631 = pneg %p371
        %p632 = pneg %p368
        %p633 = pneg %p392
        %p634 = pneg %p389
        %p635 = pneg %p413
        %p636 = pneg %p410
        %p637 = pneg %p434
        %p638 = pneg %p431
        %p639 = pneg %p455
        %p640 = pneg %p452
        %p641 = pneg %p476
        %p642 = pneg %p473
        %p643 = pneg %p502
        %p644 = pneg %p499
        %s645 = sand.u32 %s489, 1
        %s646 = scalar_lea.sflag [#allocation3], %s645
        %s647 = sand.u32 %s489, 1
        %s648 = smul.addr %s647, 8
        %s649 = scalar_lea.vmem [#allocation2], %s648
        %p650 = scmp.lt.s32.totalorder %s35, 1
        %s651 = scalar_select %p650, %s35, 1
        %s652 = smul.addr %s651, 3
        %s653 = smul.addr %s652, 8
        %s654 = scalar_lea.vmem %s0, %s653
        %v655 = vld [vmem:[%s654] sm:$0xff]
        %v656 = vld [vmem:[%s654 + $0x8] sm:$0xff]
        %v657 = vld [vmem:[%s654 + $0x10] sm:$0x1]
        %v658 = vld [vmem:[%s1] sm:$0xff]
        %v659 = vld [vmem:[%s1 + $0x8] sm:$0xff]
        %v660 = vld [vmem:[%s1 + $0x10] sm:$0xff]
        %v661 = vld [vmem:[%s1 + $0x18] sm:$0xff]
        %v662 = vld [vmem:[%s1 + $0x20] sm:$0xff]
        %v663 = vld [vmem:[%s1 + $0x28] sm:$0xff]
        %v664 = vld [vmem:[%s1 + $0x30] sm:$0xff]
        %v665 = vld [vmem:[%s2] sm:$0xff]
        %v666 = vld [vmem:[%s2 + $0x8] sm:$0xff]
        %v667 = vld [vmem:[%s2 + $0x10] sm:$0x1]
        %vm668 = vcmask 457728
        %v670 = vsel %vm668, %v655, 0
        %v673 = vsel %vm668, %v656, 0
        %v676 = vsel %vm668, %v657, 0
        %678 = vmatprep.subr.mxu0 0.0
        %679 = vmatpush1.msra.mxu0 %v658
        %680 = vmatprep.subr.mxu0 0.0
        %681 = vmatpush1.msra.mxu0 %v659
        %682 = vmatprep.subr.mxu0 0.0
        %683 = vmatpush1.msra.mxu0 %v660
        %684 = vmatprep.subr.mxu0 0.0
        %685 = vmatpush1.msra.mxu0 %v661
        %686 = vmatprep.subr.mxu0 0.0
        %687 = vmatpush1.msra.mxu0 %v662
        %688 = vmatprep.subr.mxu0 0.0
        %689 = vmatpush1.msra.mxu0 %v663
        %690 = vmatprep.subr.mxu0 0.0
        %691 = vmatpush1.msra.mxu0 %v664
        %692 = vmatprep.subr.mxu0 0.0
        %693 = vmatpush1.msra.mxu0 0.0
        %694 = vmatprep.subr.mxu0 0.0
        %695 = vmatpush1.msra.mxu0 0.0
        %696 = vmatprep.subr.mxu0 0.0
        %697 = vmatpush1.msra.mxu0 0.0
        %698 = vmatprep.subr.mxu0 0.0
        %699 = vmatpush1.msra.mxu0 0.0
        %700 = vmatprep.subr.mxu0 0.0
        %701 = vmatpush1.msra.mxu0 0.0
        %702 = vmatprep.subr.mxu0 0.0
        %703 = vmatpush1.msra.mxu0 0.0
        %704 = vmatprep.subr.mxu0 0.0
        %705 = vmatpush1.msra.mxu0 0.0
        %706 = vmatprep.subr.mxu0 0.0
        %707 = vmatpush1.msra.mxu0 0.0
        %708 = vmatprep.subr.mxu0 0.0
        %709 = vmatpush1.msra.mxu0 0.0
        %710 = vmatprep.subr.mxu0 0.0
        %711 = vmatpush1.msra.mxu0 0.0
        %712 = vmatprep.subr.mxu0 0.0
        %713 = vmatpush1.msra.mxu0 0.0
        %714 = vmatprep.subr.mxu0 0.0
        %715 = vmatpush1.msra.mxu0 0.0
        %716 = vmatprep.subr.mxu0 0.0
        %717 = vmatpush1.msra.mxu0 0.0
        %718 = vmatprep.subr.mxu0 0.0
        %719 = vmatpush1.msra.mxu0 0.0
        %720 = vmatprep.subr.mxu0 0.0
        %721 = vmatpush1.msra.mxu0 0.0
        %722 = vmatprep.subr.mxu0 0.0
        %723 = vmatpush1.msra.mxu0 0.0
        %724 = vmatprep.subr.mxu0 0.0
        %725 = vmatpush1.msra.mxu0 0.0
        %726 = vmatprep.subr.mxu0 0.0
        %727 = vmatpush1.msra.mxu0 0.0
        %728 = vmatprep.subr.mxu0 0.0
        %729 = vmatpush1.msra.mxu0 0.0
        %730 = vmatprep.subr.mxu0 0.0
        %731 = vmatpush1.msra.mxu0 0.0
        %732 = vmatprep.subr.mxu0 0.0
        %733 = vmatpush1.msra.mxu0 0.0
        %734 = vmatprep.subr.mxu0 0.0
        %735 = vmatpush1.msra.mxu0 0.0
        %736 = vmatprep.subr.mxu0 0.0
        %737 = vmatpush1.msra.mxu0 0.0
        %738 = vmatprep.subr.mxu0 0.0
        %739 = vmatpush1.msra.mxu0 0.0
        %740 = vmatprep.subr.mxu0 0.0
        %741 = vmatpush1.msra.mxu0 0.0
        %742 = vmatprep.mubr.f32.mxu0 0.0
        %743 = vmatmul.mubr.f32.gmra.mrb[0].mxu0 %v670
        %v744 = vpop.f32.mrb[0].mxu0
        %v745 = vadd.f32 %v665, %v744
        %v746 = vpop.f32.mrb[0].mxu0
        %747 = vmatprep.mubr.f32.mxu0 0.0
        %748 = vmatmul.mubr.f32.gmra.mrb[0].mxu0 %v673
        %v749 = vpop.f32.mrb[0].mxu0
        %v750 = vadd.f32 %v666, %v749
        %v751 = vpop.f32.mrb[0].mxu0
        %752 = vmatprep.mubr.f32.mxu0 0.0
        %753 = vmatmul.mubr.f32.gmra.mrb[0].mxu0 %v676
        %v754 = vpop.f32.mrb[0].mxu0
        %v755 = vadd.f32 %v667, %v754
        %v756 = vpop.f32.mrb[0].mxu0
        %757 = vdwg.mxu0
        %v758 = vld [vmem:[%s3] sm:$0x1]
        %v759 = vld [vmem:[%s4] sm:$0x1]
        %vm760 = vcmask 261120
        %v761 = vsel %vm760, %v745, 0.0
        %762 = vadd.xlane.f32.xlu0 %v761
        %v763 = vpop.xlane.xlu0 %762
        %v764 = vsel %vm760, %v750, 0.0
        %765 = vadd.xlane.f32.xlu0 %v764
        %v766 = vpop.xlane.xlu0 %765
        %vm767 = vcmask 253952
        %v768 = vsel %vm767, %v755, 0.0
        %769 = vadd.xlane.f32.xlu0 %v768
        %v770 = vpop.xlane.xlu0 %769
        %v771 = vrcp.pop 32.0
        %v772 = vmul.f32 %v763, %v771
        %v773 = vmul.f32 %v766, %v771
        %v774 = vmul.f32 %v770, %v771
        %v775 = vsub.f32 %v745, %v772
        %v776 = vsub.f32 %v750, %v773
        %v777 = vsub.f32 %v755, %v774
        %v778 = vmul.f32 %v775, %v775
        %v779 = vmul.f32 %v776, %v776
        %v780 = vmul.f32 %v777, %v777
        %v781 = vsel %vm760, %v778, 0.0
        %782 = vadd.xlane.f32.xlu0 %v781
        %v783 = vpop.xlane.xlu0 %782
        %v784 = vsel %vm760, %v779, 0.0
        %785 = vadd.xlane.f32.xlu0 %v784
        %v786 = vpop.xlane.xlu0 %785
        %v787 = vsel %vm767, %v780, 0.0
        %788 = vadd.xlane.f32.xlu0 %v787
        %v789 = vpop.xlane.xlu0 %788
        %v790 = vmul.f32 %v783, %v771
        %v791 = vmul.f32 %v786, %v771
        %v792 = vmul.f32 %v789, %v771
        %v793 = vadd.f32 %v790, 1e-05
        %v794 = vadd.f32 %v791, 1e-05
        %v795 = vadd.f32 %v792, 1e-05
        %v796 = vrsqrt.pop %v793
        %v797 = vrsqrt.pop %v794
        %v798 = vrsqrt.pop %v795
        %v799 = vmul.f32 %v775, %v796
        %v800 = vmul.f32 %v776, %v797
        %v801 = vmul.f32 %v777, %v798
        %v803 = vlaneseq
        %v804 = vshrl.u32 %v803, 7
        %v805 = vsub.s32 0, %v804
        %v806 = vrot.slane %v758, %v805
        %v808 = vmul.f32 %v799, %v806
        %v809 = vmul.f32 %v800, %v806
        %v810 = vmul.f32 %v801, %v806
        %v812 = vlaneseq
        %v813 = vshrl.u32 %v812, 7
        %v814 = vsub.s32 0, %v813
        %v815 = vrot.slane %v759, %v814
        %v817 = vadd.f32 %v808, %v815
        %v818 = vadd.f32 %v809, %v815
        %v819 = vadd.f32 %v810, %v815
        %v820 = vld [vmem:[%s5] sm:$0xff]
        %v821 = vld [vmem:[%s5 + $0x8] sm:$0xff]
        %v822 = vld [vmem:[%s5 + $0x10] sm:$0xff]
        %v823 = vld [vmem:[%s5 + $0x18] sm:$0xff]
        %v824 = vld [vmem:[%s6] sm:$0x1]
        %v826 = vlaneseq
        %v827 = vshrl.u32 %v826, 7
        %v828 = vsub.s32 0, %v827
        %v829 = vrot.slane %v824, %v828
        %v832 = vsel %vm760, %v817, 0
        %v835 = vsel %vm760, %v818, 0
        %v838 = vsel %vm760, %v819, 0
        %840 = vmatprep.subr.mxu0 0.0
        %841 = vmatpush1.msra.mxu0 %v820
        %842 = vmatprep.subr.mxu0 0.0
        %843 = vmatpush1.msra.mxu0 %v821
        %844 = vmatprep.subr.mxu0 0.0
        %845 = vmatpush1.msra.mxu0 %v822
        %846 = vmatprep.subr.mxu0 0.0
        %847 = vmatpush1.msra.mxu0 %v823
        %848 = vmatprep.subr.mxu0 0.0
        %849 = vmatpush1.msra.mxu0 0.0
        %850 = vmatprep.subr.mxu0 0.0
        %851 = vmatpush1.msra.mxu0 0.0
        %852 = vmatprep.subr.mxu0 0.0
        %853 = vmatpush1.msra.mxu0 0.0
        %854 = vmatprep.subr.mxu0 0.0
        %855 = vmatpush1.msra.mxu0 0.0
        %856 = vmatprep.subr.mxu0 0.0
        %857 = vmatpush1.msra.mxu0 0.0
        %858 = vmatprep.subr.mxu0 0.0
        %859 = vmatpush1.msra.mxu0 0.0
        %860 = vmatprep.subr.mxu0 0.0
        %861 = vmatpush1.msra.mxu0 0.0
        %862 = vmatprep.subr.mxu0 0.0
        %863 = vmatpush1.msra.mxu0 0.0
        %864 = vmatprep.subr.mxu0 0.0
        %865 = vmatpush1.msra.mxu0 0.0
        %866 = vmatprep.subr.mxu0 0.0
        %867 = vmatpush1.msra.mxu0 0.0
        %868 = vmatprep.subr.mxu0 0.0
        %869 = vmatpush1.msra.mxu0 0.0
        %870 = vmatprep.subr.mxu0 0.0
        %871 = vmatpush1.msra.mxu0 0.0
        %872 = vmatprep.subr.mxu0 0.0
        %873 = vmatpush1.msra.mxu0 0.0
        %874 = vmatprep.subr.mxu0 0.0
        %875 = vmatpush1.msra.mxu0 0.0
        %876 = vmatprep.subr.mxu0 0.0
        %877 = vmatpush1.msra.mxu0 0.0
        %878 = vmatprep.subr.mxu0 0.0
        %879 = vmatpush1.msra.mxu0 0.0
        %880 = vmatprep.subr.mxu0 0.0
        %881 = vmatpush1.msra.mxu0 0.0
        %882 = vmatprep.subr.mxu0 0.0
        %883 = vmatpush1.msra.mxu0 0.0
        %884 = vmatprep.subr.mxu0 0.0
        %885 = vmatpush1.msra.mxu0 0.0
        %886 = vmatprep.subr.mxu0 0.0
        %887 = vmatpush1.msra.mxu0 0.0
        %888 = vmatprep.subr.mxu0 0.0
        %889 = vmatpush1.msra.mxu0 0.0
        %890 = vmatprep.subr.mxu0 0.0
        %891 = vmatpush1.msra.mxu0 0.0
        %892 = vmatprep.subr.mxu0 0.0
        %893 = vmatpush1.msra.mxu0 0.0
        %894 = vmatprep.subr.mxu0 0.0
        %895 = vmatpush1.msra.mxu0 0.0
        %896 = vmatprep.subr.mxu0 0.0
        %897 = vmatpush1.msra.mxu0 0.0
        %898 = vmatprep.subr.mxu0 0.0
        %899 = vmatpush1.msra.mxu0 0.0
        %900 = vmatprep.subr.mxu0 0.0
        %901 = vmatpush1.msra.mxu0 0.0
        %902 = vmatprep.subr.mxu0 0.0
        %903 = vmatpush1.msra.mxu0 0.0
        %904 = vmatprep.mubr.f32.mxu0 0.0
        %905 = vmatmul.mubr.f32.gmra.mrb[0].mxu0 %v832
        %v906 = vpop.f32.mrb[0].mxu0
        %v907 = vadd.f32 %v829, %v906
        %v908 = vpop.f32.mrb[0].mxu0
        %909 = vmatprep.mubr.f32.mxu0 0.0
        %910 = vmatmul.mubr.f32.gmra.mrb[0].mxu0 %v835
        %v911 = vpop.f32.mrb[0].mxu0
        %v912 = vadd.f32 %v829, %v911
        %v913 = vpop.f32.mrb[0].mxu0
        %914 = vmatprep.mubr.f32.mxu0 0.0
        %915 = vmatmul.mubr.f32.gmra.mrb[0].mxu0 %v838
        %v916 = vpop.f32.mrb[0].mxu0
        %v917 = vadd.f32 %v829, %v916
        %v918 = vpop.f32.mrb[0].mxu0
        %919 = vdwg.mxu0
        %v920 = vmul.f32 %v907, 0.35355338
        %v921 = vmul.f32 %v912, 0.35355338
        %v922 = vmul.f32 %v917, 0.35355338
        %926 = vrot.lane.b32.xlu0 %v907, 96
        %v927 = vpop.permute.xlu0 %926
        %928 = vrot.lane.b32.xlu0 %v912, 96
        %v929 = vpop.permute.xlu0 %928
        %930 = vrot.lane.b32.xlu0 %v917, 96
        %v931 = vpop.permute.xlu0 %930
        %vm932 = vcmask 64512
        %v934 = vsel %vm932, %v920, 0
        %v937 = vsel %vm932, %v921, 0
        %v940 = vsel %vm932, %v922, 0
        %v942 = vsel %vm932, %v927, 0
        %v944 = vsel %vm932, %v929, 0
        %v946 = vsel %vm932, %v931, 0
        %948 = vmatprep.subr.mxu0 0.0
        %949 = vmatpush1.xpose.msra.mxu0 %v942
        %950 = vmatprep.subr.mxu0 0.0
        %951 = vmatpush1.xpose.msra.mxu0 %v944
        %952 = vmatprep.subr.mxu0 0.0
        %953 = vmatpush1.xpose.msra.mxu0 %v946
        %954 = vmatprep.subr.mxu0 0.0
        %955 = vmatpush1.xpose.msra.mxu0 0.0
        %956 = vmatprep.subr.mxu0 0.0
        %957 = vmatpush1.xpose.msra.mxu0 0.0
        %958 = vmatprep.subr.mxu0 0.0
        %959 = vmatpush1.xpose.msra.mxu0 0.0
        %960 = vmatprep.subr.mxu0 0.0
        %961 = vmatpush1.xpose.msra.mxu0 0.0
        %962 = vmatprep.subr.mxu0 0.0
        %963 = vmatpush1.xpose.msra.mxu0 0.0
        %964 = vmatprep.subr.mxu0 0.0
        %965 = vmatpush1.xpose.msra.mxu0 0.0
        %966 = vmatprep.subr.mxu0 0.0
        %967 = vmatpush1.xpose.msra.mxu0 0.0
        %968 = vmatprep.subr.mxu0 0.0
        %969 = vmatpush1.xpose.msra.mxu0 0.0
        %970 = vmatprep.subr.mxu0 0.0
        %971 = vmatpush1.xpose.msra.mxu0 0.0
        %972 = vmatprep.subr.mxu0 0.0
        %973 = vmatpush1.xpose.msra.mxu0 0.0
        %974 = vmatprep.subr.mxu0 0.0
        %975 = vmatpush1.xpose.msra.mxu0 0.0
        %976 = vmatprep.subr.mxu0 0.0
        %977 = vmatpush1.xpose.msra.mxu0 0.0
        %978 = vmatprep.subr.mxu0 0.0
        %979 = vmatpush1.xpose.msra.mxu0 0.0
        %980 = vmatprep.subr.mxu0 0.0
        %981 = vmatpush1.xpose.msra.mxu0 0.0
        %982 = vmatprep.subr.mxu0 0.0
        %983 = vmatpush1.xpose.msra.mxu0 0.0
        %984 = vmatprep.subr.mxu0 0.0
        %985 = vmatpush1.xpose.msra.mxu0 0.0
        %986 = vmatprep.subr.mxu0 0.0
        %987 = vmatpush1.xpose.msra.mxu0 0.0
        %988 = vmatprep.subr.mxu0 0.0
        %989 = vmatpush1.xpose.msra.mxu0 0.0
        %990 = vmatprep.subr.mxu0 0.0
        %991 = vmatpush1.xpose.msra.mxu0 0.0
        %992 = vmatprep.subr.mxu0 0.0
        %993 = vmatpush1.xpose.msra.mxu0 0.0
        %994 = vmatprep.subr.mxu0 0.0
        %995 = vmatpush1.xpose.msra.mxu0 0.0
        %996 = vmatprep.subr.mxu0 0.0
        %997 = vmatpush1.xpose.msra.mxu0 0.0
        %998 = vmatprep.subr.mxu0 0.0
        %999 = vmatpush1.xpose.msra.mxu0 0.0
        %1000 = vmatprep.subr.mxu0 0.0
        %1001 = vmatpush1.xpose.msra.mxu0 0.0
        %1002 = vmatprep.subr.mxu0 0.0
        %1003 = vmatpush1.xpose.msra.mxu0 0.0
        %1004 = vmatprep.subr.mxu0 0.0
        %1005 = vmatpush1.xpose.msra.mxu0 0.0
        %1006 = vmatprep.subr.mxu0 0.0
        %1007 = vmatpush1.xpose.msra.mxu0 0.0
        %1008 = vmatprep.subr.mxu0 0.0
        %1009 = vmatpush1.xpose.msra.mxu0 0.0
        %1010 = vmatprep.subr.mxu0 0.0
        %1011 = vmatpush1.xpose.msra.mxu0 0.0
        %1012 = vmatprep.mubr.f32.mxu0 0.0
        %1013 = vmatmul.mubr.f32.gmra.mrb[0].mxu0 %v934
        %v1014 = vpop.f32.mrb[0].mxu0
        %v1015 = vadd.f32 0.0, %v1014
        %v1016 = vpop.f32.mrb[0].mxu0
        %1017 = vmatprep.mubr.f32.mxu0 0.0
        %1018 = vmatmul.mubr.f32.gmra.mrb[0].mxu0 %v937
        %v1019 = vpop.f32.mrb[0].mxu0
        %v1020 = vadd.f32 0.0, %v1019
        %v1021 = vpop.f32.mrb[0].mxu0
        %1022 = vmatprep.mubr.f32.mxu0 0.0
        %1023 = vmatmul.mubr.f32.gmra.mrb[0].mxu0 %v940
        %v1024 = vpop.f32.mrb[0].mxu0
        %v1025 = vadd.f32 0.0, %v1024
        %v1026 = vpop.f32.mrb[0].mxu0
        %1027 = vdwg.mxu0
        %vm1028 = vcmask 138240
        %v1029 = vsel %vm1028, %v1015, -inf
        %1030 = vmax.xlane.f32.xlu0 %v1029
        %v1031 = vpop.xlane.xlu0 %1030
        %v1032 = vsel %vm1028, %v1020, -inf
        %1033 = vmax.xlane.f32.xlu0 %v1032
        %v1034 = vpop.xlane.xlu0 %1033
        %vm1035 = vcmask 131072
        %v1036 = vsel %vm1035, %v1025, -inf
        %1037 = vmax.xlane.f32.xlu0 %v1036
        %v1038 = vpop.xlane.xlu0 %1037
        %v1039 = vsub.f32 %v1015, %v1031
        %v1040 = vsub.f32 %v1020, %v1034
        %v1041 = vsub.f32 %v1025, %v1038
        %v1042 = vmul.f32 %v1039, 1.442695
        %v1043 = vpow.pop %v1042
        %v1044 = vmul.f32 %v1040, 1.442695
        %v1045 = vpow.pop %v1044
        %v1046 = vmul.f32 %v1041, 1.442695
        %v1047 = vpow.pop %v1046
        %v1048 = vsel %vm1028, %v1043, 0.0
        %1049 = vadd.xlane.f32.xlu0 %v1048
        %v1050 = vpop.xlane.xlu0 %1049
        %v1051 = vsel %vm1028, %v1045, 0.0
        %1052 = vadd.xlane.f32.xlu0 %v1051
        %v1053 = vpop.xlane.xlu0 %1052
        %v1054 = vsel %vm1035, %v1047, 0.0
        %1055 = vadd.xlane.f32.xlu0 %v1054
        %v1056 = vpop.xlane.xlu0 %1055
        %v1057 = vrcp.pop %v1050
        %v1058 = vrcp.pop %v1053
        %v1059 = vrcp.pop %v1056
        %v1060 = vmul.f32 %v1043, %v1057
        %v1061 = vmul.f32 %v1045, %v1058
        %v1062 = vmul.f32 %v1047, %v1059
        %1063 = vrot.lane.b32.xlu0 %v907, 64
        %v1064 = vpop.permute.xlu0 %1063
        %1065 = vrot.lane.b32.xlu0 %v912, 64
        %v1066 = vpop.permute.xlu0 %1065
        %1067 = vrot.lane.b32.xlu0 %v917, 64
        %v1068 = vpop.permute.xlu0 %1067
        %v1072 = vsel %vm1028, %v1060, 0
        %v1075 = vsel %vm1028, %v1061, 0
        %v1078 = vsel %vm1028, %v1062, 0
        %vm1080 = vcmask 1040384
        %v1081 = vsel %vm1080, %v1068, 0
        %1083 = vmatprep.subr.mxu0 0.0
        %1084 = vmatpush1.msra.mxu0 %v1064
        %1085 = vmatprep.subr.mxu0 0.0
        %1086 = vmatpush1.msra.mxu0 %v1066
        %1087 = vmatprep.subr.mxu0 0.0
        %1088 = vmatpush1.msra.mxu0 %v1081
        %1089 = vmatprep.subr.mxu0 0.0
        %1090 = vmatpush1.msra.mxu0 0.0
        %1091 = vmatprep.subr.mxu0 0.0
        %1092 = vmatpush1.msra.mxu0 0.0
        %1093 = vmatprep.subr.mxu0 0.0
        %1094 = vmatpush1.msra.mxu0 0.0
        %1095 = vmatprep.subr.mxu0 0.0
        %1096 = vmatpush1.msra.mxu0 0.0
        %1097 = vmatprep.subr.mxu0 0.0
        %1098 = vmatpush1.msra.mxu0 0.0
        %1099 = vmatprep.subr.mxu0 0.0
        %1100 = vmatpush1.msra.mxu0 0.0
        %1101 = vmatprep.subr.mxu0 0.0
        %1102 = vmatpush1.msra.mxu0 0.0
        %1103 = vmatprep.subr.mxu0 0.0
        %1104 = vmatpush1.msra.mxu0 0.0
        %1105 = vmatprep.subr.mxu0 0.0
        %1106 = vmatpush1.msra.mxu0 0.0
        %1107 = vmatprep.subr.mxu0 0.0
        %1108 = vmatpush1.msra.mxu0 0.0
        %1109 = vmatprep.subr.mxu0 0.0
        %1110 = vmatpush1.msra.mxu0 0.0
        %1111 = vmatprep.subr.mxu0 0.0
        %1112 = vmatpush1.msra.mxu0 0.0
        %1113 = vmatprep.subr.mxu0 0.0
        %1114 = vmatpush1.msra.mxu0 0.0
        %1115 = vmatprep.subr.mxu0 0.0
        %1116 = vmatpush1.msra.mxu0 0.0
        %1117 = vmatprep.subr.mxu0 0.0
        %1118 = vmatpush1.msra.mxu0 0.0
        %1119 = vmatprep.subr.mxu0 0.0
        %1120 = vmatpush1.msra.mxu0 0.0
        %1121 = vmatprep.subr.mxu0 0.0
        %1122 = vmatpush1.msra.mxu0 0.0
        %1123 = vmatprep.subr.mxu0 0.0
        %1124 = vmatpush1.msra.mxu0 0.0
        %1125 = vmatprep.subr.mxu0 0.0
        %1126 = vmatpush1.msra.mxu0 0.0
        %1127 = vmatprep.subr.mxu0 0.0
        %1128 = vmatpush1.msra.mxu0 0.0
        %1129 = vmatprep.subr.mxu0 0.0
        %1130 = vmatpush1.msra.mxu0 0.0
        %1131 = vmatprep.subr.mxu0 0.0
        %1132 = vmatpush1.msra.mxu0 0.0
        %1133 = vmatprep.subr.mxu0 0.0
        %1134 = vmatpush1.msra.mxu0 0.0
        %1135 = vmatprep.subr.mxu0 0.0
        %1136 = vmatpush1.msra.mxu0 0.0
        %1137 = vmatprep.subr.mxu0 0.0
        %1138 = vmatpush1.msra.mxu0 0.0
        %1139 = vmatprep.subr.mxu0 0.0
        %1140 = vmatpush1.msra.mxu0 0.0
        %1141 = vmatprep.subr.mxu0 0.0
        %1142 = vmatpush1.msra.mxu0 0.0
        %1143 = vmatprep.subr.mxu0 0.0
        %1144 = vmatpush1.msra.mxu0 0.0
        %1145 = vmatprep.subr.mxu0 0.0
        %1146 = vmatpush1.msra.mxu0 0.0
        %1147 = vmatprep.mubr.f32.mxu0 0.0
        %1148 = vmatmul.mubr.f32.gmra.mrb[0].mxu0 %v1072
        %v1149 = vpop.f32.mrb[0].mxu0
        %v1150 = vadd.f32 0.0, %v1149
        %v1151 = vpop.f32.mrb[0].mxu0
        %1152 = vmatprep.mubr.f32.mxu0 0.0
        %1153 = vmatmul.mubr.f32.gmra.mrb[0].mxu0 %v1075
        %v1154 = vpop.f32.mrb[0].mxu0
        %v1155 = vadd.f32 0.0, %v1154
        %v1156 = vpop.f32.mrb[0].mxu0
        %1157 = vmatprep.mubr.f32.mxu0 0.0
        %1158 = vmatmul.mubr.f32.gmra.mrb[0].mxu0 %v1078
        %v1159 = vpop.f32.mrb[0].mxu0
        %v1160 = vadd.f32 0.0, %v1159
        %v1161 = vpop.f32.mrb[0].mxu0
        %1162 = vdwg.mxu0
        %1163 = vrot.lane.b32.xlu0 %v920, 120
        %v1164 = vpop.permute.xlu0 %1163
        %1165 = vrot.lane.b32.xlu0 %v921, 120
        %v1166 = vpop.permute.xlu0 %1165
        %1167 = vrot.lane.b32.xlu0 %v922, 120
        %v1168 = vpop.permute.xlu0 %1167
        %1169 = vrot.lane.b32.xlu0 %v907, 88
        %v1170 = vpop.permute.xlu0 %1169
        %1171 = vrot.lane.b32.xlu0 %v912, 88
        %v1172 = vpop.permute.xlu0 %1171
        %1173 = vrot.lane.b32.xlu0 %v917, 88
        %v1174 = vpop.permute.xlu0 %1173
        %v1175 = vsel %vm932, %v1164, 0
        %v1177 = vsel %vm932, %v1166, 0
        %v1179 = vsel %vm932, %v1168, 0
        %v1181 = vsel %vm932, %v1170, 0
        %v1183 = vsel %vm932, %v1172, 0
        %v1185 = vsel %vm932, %v1174, 0
        %1187 = vmatprep.subr.mxu0 0.0
        %1188 = vmatpush1.xpose.msra.mxu0 %v1181
        %1189 = vmatprep.subr.mxu0 0.0
        %1190 = vmatpush1.xpose.msra.mxu0 %v1183
        %1191 = vmatprep.subr.mxu0 0.0
        %1192 = vmatpush1.xpose.msra.mxu0 %v1185
        %1193 = vmatprep.subr.mxu0 0.0
        %1194 = vmatpush1.xpose.msra.mxu0 0.0
        %1195 = vmatprep.subr.mxu0 0.0
        %1196 = vmatpush1.xpose.msra.mxu0 0.0
        %1197 = vmatprep.subr.mxu0 0.0
        %1198 = vmatpush1.xpose.msra.mxu0 0.0
        %1199 = vmatprep.subr.mxu0 0.0
        %1200 = vmatpush1.xpose.msra.mxu0 0.0
        %1201 = vmatprep.subr.mxu0 0.0
        %1202 = vmatpush1.xpose.msra.mxu0 0.0
        %1203 = vmatprep.subr.mxu0 0.0
        %1204 = vmatpush1.xpose.msra.mxu0 0.0
        %1205 = vmatprep.subr.mxu0 0.0
        %1206 = vmatpush1.xpose.msra.mxu0 0.0
        %1207 = vmatprep.subr.mxu0 0.0
        %1208 = vmatpush1.xpose.msra.mxu0 0.0
        %1209 = vmatprep.subr.mxu0 0.0
        %1210 = vmatpush1.xpose.msra.mxu0 0.0
        %1211 = vmatprep.subr.mxu0 0.0
        %1212 = vmatpush1.xpose.msra.mxu0 0.0
        %1213 = vmatprep.subr.mxu0 0.0
        %1214 = vmatpush1.xpose.msra.mxu0 0.0
        %1215 = vmatprep.subr.mxu0 0.0
        %1216 = vmatpush1.xpose.msra.mxu0 0.0
        %1217 = vmatprep.subr.mxu0 0.0
        %1218 = vmatpush1.xpose.msra.mxu0 0.0
        %1219 = vmatprep.subr.mxu0 0.0
        %1220 = vmatpush1.xpose.msra.mxu0 0.0
        %1221 = vmatprep.subr.mxu0 0.0
        %1222 = vmatpush1.xpose.msra.mxu0 0.0
        %1223 = vmatprep.subr.mxu0 0.0
        %1224 = vmatpush1.xpose.msra.mxu0 0.0
        %1225 = vmatprep.subr.mxu0 0.0
        %1226 = vmatpush1.xpose.msra.mxu0 0.0
        %1227 = vmatprep.subr.mxu0 0.0
        %1228 = vmatpush1.xpose.msra.mxu0 0.0
        %1229 = vmatprep.subr.mxu0 0.0
        %1230 = vmatpush1.xpose.msra.mxu0 0.0
        %1231 = vmatprep.subr.mxu0 0.0
        %1232 = vmatpush1.xpose.msra.mxu0 0.0
        %1233 = vmatprep.subr.mxu0 0.0
        %1234 = vmatpush1.xpose.msra.mxu0 0.0
        %1235 = vmatprep.subr.mxu0 0.0
        %1236 = vmatpush1.xpose.msra.mxu0 0.0
        %1237 = vmatprep.subr.mxu0 0.0
        %1238 = vmatpush1.xpose.msra.mxu0 0.0
        %1239 = vmatprep.subr.mxu0 0.0
        %1240 = vmatpush1.xpose.msra.mxu0 0.0
        %1241 = vmatprep.subr.mxu0 0.0
        %1242 = vmatpush1.xpose.msra.mxu0 0.0
        %1243 = vmatprep.subr.mxu0 0.0
        %1244 = vmatpush1.xpose.msra.mxu0 0.0
        %1245 = vmatprep.subr.mxu0 0.0
        %1246 = vmatpush1.xpose.msra.mxu0 0.0
        %1247 = vmatprep.subr.mxu0 0.0
        %1248 = vmatpush1.xpose.msra.mxu0 0.0
        %1249 = vmatprep.subr.mxu0 0.0
        %1250 = vmatpush1.xpose.msra.mxu0 0.0
        %1251 = vmatprep.mubr.f32.mxu0 0.0
        %1252 = vmatmul.mubr.f32.gmra.mrb[0].mxu0 %v1175
        %v1253 = vpop.f32.mrb[0].mxu0
        %v1254 = vadd.f32 0.0, %v1253
        %v1255 = vpop.f32.mrb[0].mxu0
        %1256 = vmatprep.mubr.f32.mxu0 0.0
        %1257 = vmatmul.mubr.f32.gmra.mrb[0].mxu0 %v1177
        %v1258 = vpop.f32.mrb[0].mxu0
        %v1259 = vadd.f32 0.0, %v1258
        %v1260 = vpop.f32.mrb[0].mxu0
        %1261 = vmatprep.mubr.f32.mxu0 0.0
        %1262 = vmatmul.mubr.f32.gmra.mrb[0].mxu0 %v1179
        %v1263 = vpop.f32.mrb[0].mxu0
        %v1264 = vadd.f32 0.0, %v1263
        %v1265 = vpop.f32.mrb[0].mxu0
        %1266 = vdwg.mxu0
        %v1267 = vsel %vm1028, %v1254, -inf
        %1268 = vmax.xlane.f32.xlu0 %v1267
        %v1269 = vpop.xlane.xlu0 %1268
        %v1270 = vsel %vm1028, %v1259, -inf
        %1271 = vmax.xlane.f32.xlu0 %v1270
        %v1272 = vpop.xlane.xlu0 %1271
        %v1273 = vsel %vm1035, %v1264, -inf
        %1274 = vmax.xlane.f32.xlu0 %v1273
        %v1275 = vpop.xlane.xlu0 %1274
        %v1276 = vsub.f32 %v1254, %v1269
        %v1277 = vsub.f32 %v1259, %v1272
        %v1278 = vsub.f32 %v1264, %v1275
        %v1279 = vmul.f32 %v1276, 1.442695
        %v1280 = vpow.pop %v1279
        %v1281 = vmul.f32 %v1277, 1.442695
        %v1282 = vpow.pop %v1281
        %v1283 = vmul.f32 %v1278, 1.442695
        %v1284 = vpow.pop %v1283
        %v1285 = vsel %vm1028, %v1280, 0.0
        %1286 = vadd.xlane.f32.xlu0 %v1285
        %v1287 = vpop.xlane.xlu0 %1286
        %v1288 = vsel %vm1028, %v1282, 0.0
        %1289 = vadd.xlane.f32.xlu0 %v1288
        %v1290 = vpop.xlane.xlu0 %1289
        %v1291 = vsel %vm1035, %v1284, 0.0
        %1292 = vadd.xlane.f32.xlu0 %v1291
        %v1293 = vpop.xlane.xlu0 %1292
        %v1294 = vrcp.pop %v1287
        %v1295 = vrcp.pop %v1290
        %v1296 = vrcp.pop %v1293
        %v1297 = vmul.f32 %v1280, %v1294
        %v1298 = vmul.f32 %v1282, %v1295
        %v1299 = vmul.f32 %v1284, %v1296
        %1300 = vrot.lane.b32.xlu0 %v907, 56
        %v1301 = vpop.permute.xlu0 %1300
        %1302 = vrot.lane.b32.xlu0 %v912, 56
        %v1303 = vpop.permute.xlu0 %1302
        %1304 = vrot.lane.b32.xlu0 %v917, 56
        %v1305 = vpop.permute.xlu0 %1304
        %v1309 = vsel %vm1028, %v1297, 0
        %v1312 = vsel %vm1028, %v1298, 0
        %v1315 = vsel %vm1028, %v1299, 0
        %v1317 = vsel %vm1080, %v1305, 0
        %1319 = vmatprep.subr.mxu0 0.0
        %1320 = vmatpush1.msra.mxu0 %v1301
        %1321 = vmatprep.subr.mxu0 0.0
        %1322 = vmatpush1.msra.mxu0 %v1303
        %1323 = vmatprep.subr.mxu0 0.0
        %1324 = vmatpush1.msra.mxu0 %v1317
        %1325 = vmatprep.subr.mxu0 0.0
        %1326 = vmatpush1.msra.mxu0 0.0
        %1327 = vmatprep.subr.mxu0 0.0
        %1328 = vmatpush1.msra.mxu0 0.0
        %1329 = vmatprep.subr.mxu0 0.0
        %1330 = vmatpush1.msra.mxu0 0.0
        %1331 = vmatprep.subr.mxu0 0.0
        %1332 = vmatpush1.msra.mxu0 0.0
        %1333 = vmatprep.subr.mxu0 0.0
        %1334 = vmatpush1.msra.mxu0 0.0
        %1335 = vmatprep.subr.mxu0 0.0
        %1336 = vmatpush1.msra.mxu0 0.0
        %1337 = vmatprep.subr.mxu0 0.0
        %1338 = vmatpush1.msra.mxu0 0.0
        %1339 = vmatprep.subr.mxu0 0.0
        %1340 = vmatpush1.msra.mxu0 0.0
        %1341 = vmatprep.subr.mxu0 0.0
        %1342 = vmatpush1.msra.mxu0 0.0
        %1343 = vmatprep.subr.mxu0 0.0
        %1344 = vmatpush1.msra.mxu0 0.0
        %1345 = vmatprep.subr.mxu0 0.0
        %1346 = vmatpush1.msra.mxu0 0.0
        %1347 = vmatprep.subr.mxu0 0.0
        %1348 = vmatpush1.msra.mxu0 0.0
        %1349 = vmatprep.subr.mxu0 0.0
        %1350 = vmatpush1.msra.mxu0 0.0
        %1351 = vmatprep.subr.mxu0 0.0
        %1352 = vmatpush1.msra.mxu0 0.0
        %1353 = vmatprep.subr.mxu0 0.0
        %1354 = vmatpush1.msra.mxu0 0.0
        %1355 = vmatprep.subr.mxu0 0.0
        %1356 = vmatpush1.msra.mxu0 0.0
        %1357 = vmatprep.subr.mxu0 0.0
        %1358 = vmatpush1.msra.mxu0 0.0
        %1359 = vmatprep.subr.mxu0 0.0
        %1360 = vmatpush1.msra.mxu0 0.0
        %1361 = vmatprep.subr.mxu0 0.0
        %1362 = vmatpush1.msra.mxu0 0.0
        %1363 = vmatprep.subr.mxu0 0.0
        %1364 = vmatpush1.msra.mxu0 0.0
        %1365 = vmatprep.subr.mxu0 0.0
        %1366 = vmatpush1.msra.mxu0 0.0
        %1367 = vmatprep.subr.mxu0 0.0
        %1368 = vmatpush1.msra.mxu0 0.0
        %1369 = vmatprep.subr.mxu0 0.0
        %1370 = vmatpush1.msra.mxu0 0.0
        %1371 = vmatprep.subr.mxu0 0.0
        %1372 = vmatpush1.msra.mxu0 0.0
        %1373 = vmatprep.subr.mxu0 0.0
        %1374 = vmatpush1.msra.mxu0 0.0
        %1375 = vmatprep.subr.mxu0 0.0
        %1376 = vmatpush1.msra.mxu0 0.0
        %1377 = vmatprep.subr.mxu0 0.0
        %1378 = vmatpush1.msra.mxu0 0.0
        %1379 = vmatprep.subr.mxu0 0.0
        %1380 = vmatpush1.msra.mxu0 0.0
        %1381 = vmatprep.subr.mxu0 0.0
        %1382 = vmatpush1.msra.mxu0 0.0
        %1383 = vmatprep.mubr.f32.mxu0 0.0
        %1384 = vmatmul.mubr.f32.gmra.mrb[0].mxu0 %v1309
        %v1385 = vpop.f32.mrb[0].mxu0
        %v1386 = vadd.f32 0.0, %v1385
        %v1387 = vpop.f32.mrb[0].mxu0
        %1388 = vmatprep.mubr.f32.mxu0 0.0
        %1389 = vmatmul.mubr.f32.gmra.mrb[0].mxu0 %v1312
        %v1390 = vpop.f32.mrb[0].mxu0
        %v1391 = vadd.f32 0.0, %v1390
        %v1392 = vpop.f32.mrb[0].mxu0
        %1393 = vmatprep.mubr.f32.mxu0 0.0
        %1394 = vmatmul.mubr.f32.gmra.mrb[0].mxu0 %v1315
        %v1395 = vpop.f32.mrb[0].mxu0
        %v1396 = vadd.f32 0.0, %v1395
        %v1397 = vpop.f32.mrb[0].mxu0
        %1398 = vdwg.mxu0
        %1399 = vrot.lane.b32.xlu0 %v920, 112
        %v1400 = vpop.permute.xlu0 %1399
        %1401 = vrot.lane.b32.xlu0 %v921, 112
        %v1402 = vpop.permute.xlu0 %1401
        %1403 = vrot.lane.b32.xlu0 %v922, 112
        %v1404 = vpop.permute.xlu0 %1403
        %1405 = vrot.lane.b32.xlu0 %v907, 80
        %v1406 = vpop.permute.xlu0 %1405
        %1407 = vrot.lane.b32.xlu0 %v912, 80
        %v1408 = vpop.permute.xlu0 %1407
        %1409 = vrot.lane.b32.xlu0 %v917, 80
        %v1410 = vpop.permute.xlu0 %1409
        %v1411 = vsel %vm932, %v1400, 0
        %v1413 = vsel %vm932, %v1402, 0
        %v1415 = vsel %vm932, %v1404, 0
        %v1417 = vsel %vm932, %v1406, 0
        %v1419 = vsel %vm932, %v1408, 0
        %v1421 = vsel %vm932, %v1410, 0
        %1423 = vmatprep.subr.mxu0 0.0
        %1424 = vmatpush1.xpose.msra.mxu0 %v1417
        %1425 = vmatprep.subr.mxu0 0.0
        %1426 = vmatpush1.xpose.msra.mxu0 %v1419
        %1427 = vmatprep.subr.mxu0 0.0
        %1428 = vmatpush1.xpose.msra.mxu0 %v1421
        %1429 = vmatprep.subr.mxu0 0.0
        %1430 = vmatpush1.xpose.msra.mxu0 0.0
        %1431 = vmatprep.subr.mxu0 0.0
        %1432 = vmatpush1.xpose.msra.mxu0 0.0
        %1433 = vmatprep.subr.mxu0 0.0
        %1434 = vmatpush1.xpose.msra.mxu0 0.0
        %1435 = vmatprep.subr.mxu0 0.0
        %1436 = vmatpush1.xpose.msra.mxu0 0.0
        %1437 = vmatprep.subr.mxu0 0.0
        %1438 = vmatpush1.xpose.msra.mxu0 0.0
        %1439 = vmatprep.subr.mxu0 0.0
        %1440 = vmatpush1.xpose.msra.mxu0 0.0
        %1441 = vmatprep.subr.mxu0 0.0
        %1442 = vmatpush1.xpose.msra.mxu0 0.0
        %1443 = vmatprep.subr.mxu0 0.0
        %1444 = vmatpush1.xpose.msra.mxu0 0.0
        %1445 = vmatprep.subr.mxu0 0.0
        %1446 = vmatpush1.xpose.msra.mxu0 0.0
        %1447 = vmatprep.subr.mxu0 0.0
        %1448 = vmatpush1.xpose.msra.mxu0 0.0
        %1449 = vmatprep.subr.mxu0 0.0
        %1450 = vmatpush1.xpose.msra.mxu0 0.0
        %1451 = vmatprep.subr.mxu0 0.0
        %1452 = vmatpush1.xpose.msra.mxu0 0.0
        %1453 = vmatprep.subr.mxu0 0.0
        %1454 = vmatpush1.xpose.msra.mxu0 0.0
        %1455 = vmatprep.subr.mxu0 0.0
        %1456 = vmatpush1.xpose.msra.mxu0 0.0
        %1457 = vmatprep.subr.mxu0 0.0
        %1458 = vmatpush1.xpose.msra.mxu0 0.0
        %1459 = vmatprep.subr.mxu0 0.0
        %1460 = vmatpush1.xpose.msra.mxu0 0.0
        %1461 = vmatprep.subr.mxu0 0.0
        %1462 = vmatpush1.xpose.msra.mxu0 0.0
        %1463 = vmatprep.subr.mxu0 0.0
        %1464 = vmatpush1.xpose.msra.mxu0 0.0
        %1465 = vmatprep.subr.mxu0 0.0
        %1466 = vmatpush1.xpose.msra.mxu0 0.0
        %1467 = vmatprep.subr.mxu0 0.0
        %1468 = vmatpush1.xpose.msra.mxu0 0.0
        %1469 = vmatprep.subr.mxu0 0.0
        %1470 = vmatpush1.xpose.msra.mxu0 0.0
        %1471 = vmatprep.subr.mxu0 0.0
        %1472 = vmatpush1.xpose.msra.mxu0 0.0
        %1473 = vmatprep.subr.mxu0 0.0
        %1474 = vmatpush1.xpose.msra.mxu0 0.0
        %1475 = vmatprep.subr.mxu0 0.0
        %1476 = vmatpush1.xpose.msra.mxu0 0.0
        %1477 = vmatprep.subr.mxu0 0.0
        %1478 = vmatpush1.xpose.msra.mxu0 0.0
        %1479 = vmatprep.subr.mxu0 0.0
        %1480 = vmatpush1.xpose.msra.mxu0 0.0
        %1481 = vmatprep.subr.mxu0 0.0
        %1482 = vmatpush1.xpose.msra.mxu0 0.0
        %1483 = vmatprep.subr.mxu0 0.0
        %1484 = vmatpush1.xpose.msra.mxu0 0.0
        %1485 = vmatprep.subr.mxu0 0.0
        %1486 = vmatpush1.xpose.msra.mxu0 0.0
        %1487 = vmatprep.mubr.f32.mxu0 0.0
        %1488 = vmatmul.mubr.f32.gmra.mrb[0].mxu0 %v1411
        %v1489 = vpop.f32.mrb[0].mxu0
        %v1490 = vadd.f32 0.0, %v1489
        %v1491 = vpop.f32.mrb[0].mxu0
        %1492 = vmatprep.mubr.f32.mxu0 0.0
        %1493 = vmatmul.mubr.f32.gmra.mrb[0].mxu0 %v1413
        %v1494 = vpop.f32.mrb[0].mxu0
        %v1495 = vadd.f32 0.0, %v1494
        %v1496 = vpop.f32.mrb[0].mxu0
        %1497 = vmatprep.mubr.f32.mxu0 0.0
        %1498 = vmatmul.mubr.f32.gmra.mrb[0].mxu0 %v1415
        %v1499 = vpop.f32.mrb[0].mxu0
        %v1500 = vadd.f32 0.0, %v1499
        %v1501 = vpop.f32.mrb[0].mxu0
        %1502 = vdwg.mxu0
        %v1503 = vsel %vm1028, %v1490, -inf
        %1504 = vmax.xlane.f32.xlu0 %v1503
        %v1505 = vpop.xlane.xlu0 %1504
        %v1506 = vsel %vm1028, %v1495, -inf
        %1507 = vmax.xlane.f32.xlu0 %v1506
        %v1508 = vpop.xlane.xlu0 %1507
        %v1509 = vsel %vm1035, %v1500, -inf
        %1510 = vmax.xlane.f32.xlu0 %v1509
        %v1511 = vpop.xlane.xlu0 %1510
        %v1512 = vsub.f32 %v1490, %v1505
        %v1513 = vsub.f32 %v1495, %v1508
        %v1514 = vsub.f32 %v1500, %v1511
        %v1515 = vmul.f32 %v1512, 1.442695
        %v1516 = vpow.pop %v1515
        %v1517 = vmul.f32 %v1513, 1.442695
        %v1518 = vpow.pop %v1517
        %v1519 = vmul.f32 %v1514, 1.442695
        %v1520 = vpow.pop %v1519
        %v1521 = vsel %vm1028, %v1516, 0.0
        %1522 = vadd.xlane.f32.xlu0 %v1521
        %v1523 = vpop.xlane.xlu0 %1522
        %v1524 = vsel %vm1028, %v1518, 0.0
        %1525 = vadd.xlane.f32.xlu0 %v1524
        %v1526 = vpop.xlane.xlu0 %1525
        %v1527 = vsel %vm1035, %v1520, 0.0
        %1528 = vadd.xlane.f32.xlu0 %v1527
        %v1529 = vpop.xlane.xlu0 %1528
        %v1530 = vrcp.pop %v1523
        %v1531 = vrcp.pop %v1526
        %v1532 = vrcp.pop %v1529
        %v1533 = vmul.f32 %v1516, %v1530
        %v1534 = vmul.f32 %v1518, %v1531
        %v1535 = vmul.f32 %v1520, %v1532
        %1536 = vrot.lane.b32.xlu0 %v907, 48
        %v1537 = vpop.permute.xlu0 %1536
        %1538 = vrot.lane.b32.xlu0 %v912, 48
        %v1539 = vpop.permute.xlu0 %1538
        %1540 = vrot.lane.b32.xlu0 %v917, 48
        %v1541 = vpop.permute.xlu0 %1540
        %v1545 = vsel %vm1028, %v1533, 0
        %v1548 = vsel %vm1028, %v1534, 0
        %v1551 = vsel %vm1028, %v1535, 0
        %v1553 = vsel %vm1080, %v1541, 0
        %1555 = vmatprep.subr.mxu0 0.0
        %1556 = vmatpush1.msra.mxu0 %v1537
        %1557 = vmatprep.subr.mxu0 0.0
        %1558 = vmatpush1.msra.mxu0 %v1539
        %1559 = vmatprep.subr.mxu0 0.0
        %1560 = vmatpush1.msra.mxu0 %v1553
        %1561 = vmatprep.subr.mxu0 0.0
        %1562 = vmatpush1.msra.mxu0 0.0
        %1563 = vmatprep.subr.mxu0 0.0
        %1564 = vmatpush1.msra.mxu0 0.0
        %1565 = vmatprep.subr.mxu0 0.0
        %1566 = vmatpush1.msra.mxu0 0.0
        %1567 = vmatprep.subr.mxu0 0.0
        %1568 = vmatpush1.msra.mxu0 0.0
        %1569 = vmatprep.subr.mxu0 0.0
        %1570 = vmatpush1.msra.mxu0 0.0
        %1571 = vmatprep.subr.mxu0 0.0
        %1572 = vmatpush1.msra.mxu0 0.0
        %1573 = vmatprep.subr.mxu0 0.0
        %1574 = vmatpush1.msra.mxu0 0.0
        %1575 = vmatprep.subr.mxu0 0.0
        %1576 = vmatpush1.msra.mxu0 0.0
        %1577 = vmatprep.subr.mxu0 0.0
        %1578 = vmatpush1.msra.mxu0 0.0
        %1579 = vmatprep.subr.mxu0 0.0
        %1580 = vmatpush1.msra.mxu0 0.0
        %1581 = vmatprep.subr.mxu0 0.0
        %1582 = vmatpush1.msra.mxu0 0.0
        %1583 = vmatprep.subr.mxu0 0.0
        %1584 = vmatpush1.msra.mxu0 0.0
        %1585 = vmatprep.subr.mxu0 0.0
        %1586 = vmatpush1.msra.mxu0 0.0
        %1587 = vmatprep.subr.mxu0 0.0
        %1588 = vmatpush1.msra.mxu0 0.0
        %1589 = vmatprep.subr.mxu0 0.0
        %1590 = vmatpush1.msra.mxu0 0.0
        %1591 = vmatprep.subr.mxu0 0.0
        %1592 = vmatpush1.msra.mxu0 0.0
        %1593 = vmatprep.subr.mxu0 0.0
        %1594 = vmatpush1.msra.mxu0 0.0
        %1595 = vmatprep.subr.mxu0 0.0
        %1596 = vmatpush1.msra.mxu0 0.0
        %1597 = vmatprep.subr.mxu0 0.0
        %1598 = vmatpush1.msra.mxu0 0.0
        %1599 = vmatprep.subr.mxu0 0.0
        %1600 = vmatpush1.msra.mxu0 0.0
        %1601 = vmatprep.subr.mxu0 0.0
        %1602 = vmatpush1.msra.mxu0 0.0
        %1603 = vmatprep.subr.mxu0 0.0
        %1604 = vmatpush1.msra.mxu0 0.0
        %1605 = vmatprep.subr.mxu0 0.0
        %1606 = vmatpush1.msra.mxu0 0.0
        %1607 = vmatprep.subr.mxu0 0.0
        %1608 = vmatpush1.msra.mxu0 0.0
        %1609 = vmatprep.subr.mxu0 0.0
        %1610 = vmatpush1.msra.mxu0 0.0
        %1611 = vmatprep.subr.mxu0 0.0
        %1612 = vmatpush1.msra.mxu0 0.0
        %1613 = vmatprep.subr.mxu0 0.0
        %1614 = vmatpush1.msra.mxu0 0.0
        %1615 = vmatprep.subr.mxu0 0.0
        %1616 = vmatpush1.msra.mxu0 0.0
        %1617 = vmatprep.subr.mxu0 0.0
        %1618 = vmatpush1.msra.mxu0 0.0
        %1619 = vmatprep.mubr.f32.mxu0 0.0
        %1620 = vmatmul.mubr.f32.gmra.mrb[0].mxu0 %v1545
        %v1621 = vpop.f32.mrb[0].mxu0
        %v1622 = vadd.f32 0.0, %v1621
        %v1623 = vpop.f32.mrb[0].mxu0
        %1624 = vmatprep.mubr.f32.mxu0 0.0
        %1625 = vmatmul.mubr.f32.gmra.mrb[0].mxu0 %v1548
        %v1626 = vpop.f32.mrb[0].mxu0
        %v1627 = vadd.f32 0.0, %v1626
        %v1628 = vpop.f32.mrb[0].mxu0
        %1629 = vmatprep.mubr.f32.mxu0 0.0
        %1630 = vmatmul.mubr.f32.gmra.mrb[0].mxu0 %v1551
        %v1631 = vpop.f32.mrb[0].mxu0
        %v1632 = vadd.f32 0.0, %v1631
        %v1633 = vpop.f32.mrb[0].mxu0
        %1634 = vdwg.mxu0
        %1635 = vrot.lane.b32.xlu0 %v920, 104
        %v1636 = vpop.permute.xlu0 %1635
        %1637 = vrot.lane.b32.xlu0 %v921, 104
        %v1638 = vpop.permute.xlu0 %1637
        %1639 = vrot.lane.b32.xlu0 %v922, 104
        %v1640 = vpop.permute.xlu0 %1639
        %1641 = vrot.lane.b32.xlu0 %v907, 72
        %v1642 = vpop.permute.xlu0 %1641
        %1643 = vrot.lane.b32.xlu0 %v912, 72
        %v1644 = vpop.permute.xlu0 %1643
        %1645 = vrot.lane.b32.xlu0 %v917, 72
        %v1646 = vpop.permute.xlu0 %1645
        %v1647 = vsel %vm932, %v1636, 0
        %v1649 = vsel %vm932, %v1638, 0
        %v1651 = vsel %vm932, %v1640, 0
        %v1653 = vsel %vm932, %v1642, 0
        %v1655 = vsel %vm932, %v1644, 0
        %v1657 = vsel %vm932, %v1646, 0
        %1659 = vmatprep.subr.mxu0 0.0
        %1660 = vmatpush1.xpose.msra.mxu0 %v1653
        %1661 = vmatprep.subr.mxu0 0.0
        %1662 = vmatpush1.xpose.msra.mxu0 %v1655
        %1663 = vmatprep.subr.mxu0 0.0
        %1664 = vmatpush1.xpose.msra.mxu0 %v1657
        %1665 = vmatprep.subr.mxu0 0.0
        %1666 = vmatpush1.xpose.msra.mxu0 0.0
        %1667 = vmatprep.subr.mxu0 0.0
        %1668 = vmatpush1.xpose.msra.mxu0 0.0
        %1669 = vmatprep.subr.mxu0 0.0
        %1670 = vmatpush1.xpose.msra.mxu0 0.0
        %1671 = vmatprep.subr.mxu0 0.0
        %1672 = vmatpush1.xpose.msra.mxu0 0.0
        %1673 = vmatprep.subr.mxu0 0.0
        %1674 = vmatpush1.xpose.msra.mxu0 0.0
        %1675 = vmatprep.subr.mxu0 0.0
        %1676 = vmatpush1.xpose.msra.mxu0 0.0
        %1677 = vmatprep.subr.mxu0 0.0
        %1678 = vmatpush1.xpose.msra.mxu0 0.0
        %1679 = vmatprep.subr.mxu0 0.0
        %1680 = vmatpush1.xpose.msra.mxu0 0.0
        %1681 = vmatprep.subr.mxu0 0.0
        %1682 = vmatpush1.xpose.msra.mxu0 0.0
        %1683 = vmatprep.subr.mxu0 0.0
        %1684 = vmatpush1.xpose.msra.mxu0 0.0
        %1685 = vmatprep.subr.mxu0 0.0
        %1686 = vmatpush1.xpose.msra.mxu0 0.0
        %1687 = vmatprep.subr.mxu0 0.0
        %1688 = vmatpush1.xpose.msra.mxu0 0.0
        %1689 = vmatprep.subr.mxu0 0.0
        %1690 = vmatpush1.xpose.msra.mxu0 0.0
        %1691 = vmatprep.subr.mxu0 0.0
        %1692 = vmatpush1.xpose.msra.mxu0 0.0
        %1693 = vmatprep.subr.mxu0 0.0
        %1694 = vmatpush1.xpose.msra.mxu0 0.0
        %1695 = vmatprep.subr.mxu0 0.0
        %1696 = vmatpush1.xpose.msra.mxu0 0.0
        %1697 = vmatprep.subr.mxu0 0.0
        %1698 = vmatpush1.xpose.msra.mxu0 0.0
        %1699 = vmatprep.subr.mxu0 0.0
        %1700 = vmatpush1.xpose.msra.mxu0 0.0
        %1701 = vmatprep.subr.mxu0 0.0
        %1702 = vmatpush1.xpose.msra.mxu0 0.0
        %1703 = vmatprep.subr.mxu0 0.0
        %1704 = vmatpush1.xpose.msra.mxu0 0.0
        %1705 = vmatprep.subr.mxu0 0.0
        %1706 = vmatpush1.xpose.msra.mxu0 0.0
        %1707 = vmatprep.subr.mxu0 0.0
        %1708 = vmatpush1.xpose.msra.mxu0 0.0
        %1709 = vmatprep.subr.mxu0 0.0
        %1710 = vmatpush1.xpose.msra.mxu0 0.0
        %1711 = vmatprep.subr.mxu0 0.0
        %1712 = vmatpush1.xpose.msra.mxu0 0.0
        %1713 = vmatprep.subr.mxu0 0.0
        %1714 = vmatpush1.xpose.msra.mxu0 0.0
        %1715 = vmatprep.subr.mxu0 0.0
        %1716 = vmatpush1.xpose.msra.mxu0 0.0
        %1717 = vmatprep.subr.mxu0 0.0
        %1718 = vmatpush1.xpose.msra.mxu0 0.0
        %1719 = vmatprep.subr.mxu0 0.0
        %1720 = vmatpush1.xpose.msra.mxu0 0.0
        %1721 = vmatprep.subr.mxu0 0.0
        %1722 = vmatpush1.xpose.msra.mxu0 0.0
        %1723 = vmatprep.mubr.f32.mxu0 0.0
        %1724 = vmatmul.mubr.f32.gmra.mrb[0].mxu0 %v1647
        %v1725 = vpop.f32.mrb[0].mxu0
        %v1726 = vadd.f32 0.0, %v1725
        %v1727 = vpop.f32.mrb[0].mxu0
        %1728 = vmatprep.mubr.f32.mxu0 0.0
        %1729 = vmatmul.mubr.f32.gmra.mrb[0].mxu0 %v1649
        %v1730 = vpop.f32.mrb[0].mxu0
        %v1731 = vadd.f32 0.0, %v1730
        %v1732 = vpop.f32.mrb[0].mxu0
        %1733 = vmatprep.mubr.f32.mxu0 0.0
        %1734 = vmatmul.mubr.f32.gmra.mrb[0].mxu0 %v1651
        %v1735 = vpop.f32.mrb[0].mxu0
        %v1736 = vadd.f32 0.0, %v1735
        %v1737 = vpop.f32.mrb[0].mxu0
        %1738 = vdwg.mxu0
        %v1739 = vsel %vm1028, %v1726, -inf
        %1740 = vmax.xlane.f32.xlu0 %v1739
        %v1741 = vpop.xlane.xlu0 %1740
        %v1742 = vsel %vm1028, %v1731, -inf
        %1743 = vmax.xlane.f32.xlu0 %v1742
        %v1744 = vpop.xlane.xlu0 %1743
        %v1745 = vsel %vm1035, %v1736, -inf
        %1746 = vmax.xlane.f32.xlu0 %v1745
        %v1747 = vpop.xlane.xlu0 %1746
        %v1748 = vsub.f32 %v1726, %v1741
        %v1749 = vsub.f32 %v1731, %v1744
        %v1750 = vsub.f32 %v1736, %v1747
        %v1751 = vmul.f32 %v1748, 1.442695
        %v1752 = vpow.pop %v1751
        %v1753 = vmul.f32 %v1749, 1.442695
        %v1754 = vpow.pop %v1753
        %v1755 = vmul.f32 %v1750, 1.442695
        %v1756 = vpow.pop %v1755
        %v1757 = vsel %vm1028, %v1752, 0.0
        %1758 = vadd.xlane.f32.xlu0 %v1757
        %v1759 = vpop.xlane.xlu0 %1758
        %v1760 = vsel %vm1028, %v1754, 0.0
        %1761 = vadd.xlane.f32.xlu0 %v1760
        %v1762 = vpop.xlane.xlu0 %1761
        %v1763 = vsel %vm1035, %v1756, 0.0
        %1764 = vadd.xlane.f32.xlu0 %v1763
        %v1765 = vpop.xlane.xlu0 %1764
        %v1766 = vrcp.pop %v1759
        %v1767 = vrcp.pop %v1762
        %v1768 = vrcp.pop %v1765
        %v1769 = vmul.f32 %v1752, %v1766
        %v1770 = vmul.f32 %v1754, %v1767
        %v1771 = vmul.f32 %v1756, %v1768
        %1772 = vrot.lane.b32.xlu0 %v907, 40
        %v1773 = vpop.permute.xlu0 %1772
        %1774 = vrot.lane.b32.xlu0 %v912, 40
        %v1775 = vpop.permute.xlu0 %1774
        %1776 = vrot.lane.b32.xlu0 %v917, 40
        %v1777 = vpop.permute.xlu0 %1776
        %v1781 = vsel %vm1028, %v1769, 0
        %v1784 = vsel %vm1028, %v1770, 0
        %v1787 = vsel %vm1028, %v1771, 0
        %v1789 = vsel %vm1080, %v1777, 0
        %1791 = vmatprep.subr.mxu0 0.0
        %1792 = vmatpush1.msra.mxu0 %v1773
        %1793 = vmatprep.subr.mxu0 0.0
        %1794 = vmatpush1.msra.mxu0 %v1775
        %1795 = vmatprep.subr.mxu0 0.0
        %1796 = vmatpush1.msra.mxu0 %v1789
        %1797 = vmatprep.subr.mxu0 0.0
        %1798 = vmatpush1.msra.mxu0 0.0
        %1799 = vmatprep.subr.mxu0 0.0
        %1800 = vmatpush1.msra.mxu0 0.0
        %1801 = vmatprep.subr.mxu0 0.0
        %1802 = vmatpush1.msra.mxu0 0.0
        %1803 = vmatprep.subr.mxu0 0.0
        %1804 = vmatpush1.msra.mxu0 0.0
        %1805 = vmatprep.subr.mxu0 0.0
        %1806 = vmatpush1.msra.mxu0 0.0
        %1807 = vmatprep.subr.mxu0 0.0
        %1808 = vmatpush1.msra.mxu0 0.0
        %1809 = vmatprep.subr.mxu0 0.0
        %1810 = vmatpush1.msra.mxu0 0.0
        %1811 = vmatprep.subr.mxu0 0.0
        %1812 = vmatpush1.msra.mxu0 0.0
        %1813 = vmatprep.subr.mxu0 0.0
        %1814 = vmatpush1.msra.mxu0 0.0
        %1815 = vmatprep.subr.mxu0 0.0
        %1816 = vmatpush1.msra.mxu0 0.0
        %1817 = vmatprep.subr.mxu0 0.0
        %1818 = vmatpush1.msra.mxu0 0.0
        %1819 = vmatprep.subr.mxu0 0.0
        %1820 = vmatpush1.msra.mxu0 0.0
        %1821 = vmatprep.subr.mxu0 0.0
        %1822 = vmatpush1.msra.mxu0 0.0
        %1823 = vmatprep.subr.mxu0 0.0
        %1824 = vmatpush1.msra.mxu0 0.0
        %1825 = vmatprep.subr.mxu0 0.0
        %1826 = vmatpush1.msra.mxu0 0.0
        %1827 = vmatprep.subr.mxu0 0.0
        %1828 = vmatpush1.msra.mxu0 0.0
        %1829 = vmatprep.subr.mxu0 0.0
        %1830 = vmatpush1.msra.mxu0 0.0
        %1831 = vmatprep.subr.mxu0 0.0
        %1832 = vmatpush1.msra.mxu0 0.0
        %1833 = vmatprep.subr.mxu0 0.0
        %1834 = vmatpush1.msra.mxu0 0.0
        %1835 = vmatprep.subr.mxu0 0.0
        %1836 = vmatpush1.msra.mxu0 0.0
        %1837 = vmatprep.subr.mxu0 0.0
        %1838 = vmatpush1.msra.mxu0 0.0
        %1839 = vmatprep.subr.mxu0 0.0
        %1840 = vmatpush1.msra.mxu0 0.0
        %1841 = vmatprep.subr.mxu0 0.0
        %1842 = vmatpush1.msra.mxu0 0.0
        %1843 = vmatprep.subr.mxu0 0.0
        %1844 = vmatpush1.msra.mxu0 0.0
        %1845 = vmatprep.subr.mxu0 0.0
        %1846 = vmatpush1.msra.mxu0 0.0
        %1847 = vmatprep.subr.mxu0 0.0
        %1848 = vmatpush1.msra.mxu0 0.0
        %1849 = vmatprep.subr.mxu0 0.0
        %1850 = vmatpush1.msra.mxu0 0.0
        %1851 = vmatprep.subr.mxu0 0.0
        %1852 = vmatpush1.msra.mxu0 0.0
        %1853 = vmatprep.subr.mxu0 0.0
        %1854 = vmatpush1.msra.mxu0 0.0
        %1855 = vmatprep.mubr.f32.mxu0 0.0
        %1856 = vmatmul.mubr.f32.gmra.mrb[0].mxu0 %v1781
        %v1857 = vpop.f32.mrb[0].mxu0
        %v1858 = vadd.f32 0.0, %v1857
        %v1859 = vpop.f32.mrb[0].mxu0
        %1860 = vmatprep.mubr.f32.mxu0 0.0
        %1861 = vmatmul.mubr.f32.gmra.mrb[0].mxu0 %v1784
        %v1862 = vpop.f32.mrb[0].mxu0
        %v1863 = vadd.f32 0.0, %v1862
        %v1864 = vpop.f32.mrb[0].mxu0
        %1865 = vmatprep.mubr.f32.mxu0 0.0
        %1866 = vmatmul.mubr.f32.gmra.mrb[0].mxu0 %v1787
        %v1867 = vpop.f32.mrb[0].mxu0
        %v1868 = vadd.f32 0.0, %v1867
        %v1869 = vpop.f32.mrb[0].mxu0
        %1870 = vdwg.mxu0
        %1874 = vrot.lane.b32.xlu0 %v1386, 8
        %v1875 = vpop.permute.xlu0 %1874
        %1876 = vrot.lane.b32.xlu0 %v1391, 8
        %v1877 = vpop.permute.xlu0 %1876
        %1878 = vrot.lane.b32.xlu0 %v1396, 8
        %v1879 = vpop.permute.xlu0 %1878
        %1886 = vrot.lane.b32.xlu0 %v1622, 16
        %v1887 = vpop.permute.xlu0 %1886
        %1888 = vrot.lane.b32.xlu0 %v1627, 16
        %v1889 = vpop.permute.xlu0 %1888
        %1890 = vrot.lane.b32.xlu0 %v1632, 16
        %v1891 = vpop.permute.xlu0 %1890
        %1898 = vrot.lane.b32.xlu0 %v1858, 24
        %v1899 = vpop.permute.xlu0 %1898
        %1900 = vrot.lane.b32.xlu0 %v1863, 24
        %v1901 = vpop.permute.xlu0 %1900
        %1902 = vrot.lane.b32.xlu0 %v1868, 24
        %v1903 = vpop.permute.xlu0 %1902
        %v1907 = vsel %vm932, %v1150, %v1875
        %v1908 = vsel %vm932, %v1155, %v1877
        %v1909 = vsel %vm932, %v1160, %v1879
        %vm1910 = vcmask 130048
        %v1911 = vsel %vm1910, %v1907, %v1887
        %v1912 = vsel %vm1910, %v1908, %v1889
        %v1913 = vsel %vm1910, %v1909, %v1891
        %vm1914 = vcmask 195584
        %v1915 = vsel %vm1914, %v1911, %v1899
        %v1916 = vsel %vm1914, %v1912, %v1901
        %v1917 = vsel %vm1914, %v1913, %v1903
        %v1918 = vld [vmem:[%s7] sm:$0xff]
        %v1919 = vld [vmem:[%s7 + $0x8] sm:$0xff]
        %v1920 = vld [vmem:[%s7 + $0x10] sm:$0xff]
        %v1921 = vld [vmem:[%s7 + $0x18] sm:$0xff]
        %v1922 = vld [vmem:[%s8] sm:$0x1]
        %v1924 = vlaneseq
        %v1925 = vshrl.u32 %v1924, 7
        %v1926 = vsub.s32 0, %v1925
        %v1927 = vrot.slane %v1922, %v1926
        %v1930 = vsel %vm760, %v1915, 0
        %v1933 = vsel %vm760, %v1916, 0
        %v1936 = vsel %vm760, %v1917, 0
        %1938 = vmatprep.subr.mxu0 0.0
        %1939 = vmatpush1.msra.mxu0 %v1918
        %1940 = vmatprep.subr.mxu0 0.0
        %1941 = vmatpush1.msra.mxu0 %v1919
        %1942 = vmatprep.subr.mxu0 0.0
        %1943 = vmatpush1.msra.mxu0 %v1920
        %1944 = vmatprep.subr.mxu0 0.0
        %1945 = vmatpush1.msra.mxu0 %v1921
        %1946 = vmatprep.subr.mxu0 0.0
        %1947 = vmatpush1.msra.mxu0 0.0
        %1948 = vmatprep.subr.mxu0 0.0
        %1949 = vmatpush1.msra.mxu0 0.0
        %1950 = vmatprep.subr.mxu0 0.0
        %1951 = vmatpush1.msra.mxu0 0.0
        %1952 = vmatprep.subr.mxu0 0.0
        %1953 = vmatpush1.msra.mxu0 0.0
        %1954 = vmatprep.subr.mxu0 0.0
        %1955 = vmatpush1.msra.mxu0 0.0
        %1956 = vmatprep.subr.mxu0 0.0
        %1957 = vmatpush1.msra.mxu0 0.0
        %1958 = vmatprep.subr.mxu0 0.0
        %1959 = vmatpush1.msra.mxu0 0.0
        %1960 = vmatprep.subr.mxu0 0.0
        %1961 = vmatpush1.msra.mxu0 0.0
        %1962 = vmatprep.subr.mxu0 0.0
        %1963 = vmatpush1.msra.mxu0 0.0
        %1964 = vmatprep.subr.mxu0 0.0
        %1965 = vmatpush1.msra.mxu0 0.0
        %1966 = vmatprep.subr.mxu0 0.0
        %1967 = vmatpush1.msra.mxu0 0.0
        %1968 = vmatprep.subr.mxu0 0.0
        %1969 = vmatpush1.msra.mxu0 0.0
        %1970 = vmatprep.subr.mxu0 0.0
        %1971 = vmatpush1.msra.mxu0 0.0
        %1972 = vmatprep.subr.mxu0 0.0
        %1973 = vmatpush1.msra.mxu0 0.0
        %1974 = vmatprep.subr.mxu0 0.0
        %1975 = vmatpush1.msra.mxu0 0.0
        %1976 = vmatprep.subr.mxu0 0.0
        %1977 = vmatpush1.msra.mxu0 0.0
        %1978 = vmatprep.subr.mxu0 0.0
        %1979 = vmatpush1.msra.mxu0 0.0
        %1980 = vmatprep.subr.mxu0 0.0
        %1981 = vmatpush1.msra.mxu0 0.0
        %1982 = vmatprep.subr.mxu0 0.0
        %1983 = vmatpush1.msra.mxu0 0.0
        %1984 = vmatprep.subr.mxu0 0.0
        %1985 = vmatpush1.msra.mxu0 0.0
        %1986 = vmatprep.subr.mxu0 0.0
        %1987 = vmatpush1.msra.mxu0 0.0
        %1988 = vmatprep.subr.mxu0 0.0
        %1989 = vmatpush1.msra.mxu0 0.0
        %1990 = vmatprep.subr.mxu0 0.0
        %1991 = vmatpush1.msra.mxu0 0.0
        %1992 = vmatprep.subr.mxu0 0.0
        %1993 = vmatpush1.msra.mxu0 0.0
        %1994 = vmatprep.subr.mxu0 0.0
        %1995 = vmatpush1.msra.mxu0 0.0
        %1996 = vmatprep.subr.mxu0 0.0
        %1997 = vmatpush1.msra.mxu0 0.0
        %1998 = vmatprep.subr.mxu0 0.0
        %1999 = vmatpush1.msra.mxu0 0.0
        %2000 = vmatprep.subr.mxu0 0.0
        %2001 = vmatpush1.msra.mxu0 0.0
        %2002 = vmatprep.mubr.f32.mxu0 0.0
        %2003 = vmatmul.mubr.f32.gmra.mrb[0].mxu0 %v1930
        %v2004 = vpop.f32.mrb[0].mxu0
        %v2005 = vadd.f32 %v1927, %v2004
        %v2006 = vpop.f32.mrb[0].mxu0
        %2007 = vmatprep.mubr.f32.mxu0 0.0
        %2008 = vmatmul.mubr.f32.gmra.mrb[0].mxu0 %v1933
        %v2009 = vpop.f32.mrb[0].mxu0
        %v2010 = vadd.f32 %v1927, %v2009
        %v2011 = vpop.f32.mrb[0].mxu0
        %2012 = vmatprep.mubr.f32.mxu0 0.0
        %2013 = vmatmul.mubr.f32.gmra.mrb[0].mxu0 %v1936
        %v2014 = vpop.f32.mrb[0].mxu0
        %v2015 = vadd.f32 %v1927, %v2014
        %v2016 = vpop.f32.mrb[0].mxu0
        %2017 = vdwg.mxu0
        %v2018 = vadd.f32 %v745, %v2005
        %v2019 = vadd.f32 %v750, %v2010
        %v2020 = vadd.f32 %v755, %v2015
        %v2021 = vld [vmem:[%s9] sm:$0x1]
        %v2022 = vld [vmem:[%s10] sm:$0x1]
        %v2023 = vsel %vm760, %v2018, 0.0
        %2024 = vadd.xlane.f32.xlu0 %v2023
        %v2025 = vpop.xlane.xlu0 %2024
        %v2026 = vsel %vm760, %v2019, 0.0
        %2027 = vadd.xlane.f32.xlu0 %v2026
        %v2028 = vpop.xlane.xlu0 %2027
        %v2029 = vsel %vm767, %v2020, 0.0
        %2030 = vadd.xlane.f32.xlu0 %v2029
        %v2031 = vpop.xlane.xlu0 %2030
        %v2032 = vmul.f32 %v2025, %v771
        %v2033 = vmul.f32 %v2028, %v771
        %v2034 = vmul.f32 %v2031, %v771
        %v2035 = vsub.f32 %v2018, %v2032
        %v2036 = vsub.f32 %v2019, %v2033
        %v2037 = vsub.f32 %v2020, %v2034
        %v2038 = vmul.f32 %v2035, %v2035
        %v2039 = vmul.f32 %v2036, %v2036
        %v2040 = vmul.f32 %v2037, %v2037
        %v2041 = vsel %vm760, %v2038, 0.0
        %2042 = vadd.xlane.f32.xlu0 %v2041
        %v2043 = vpop.xlane.xlu0 %2042
        %v2044 = vsel %vm760, %v2039, 0.0
        %2045 = vadd.xlane.f32.xlu0 %v2044
        %v2046 = vpop.xlane.xlu0 %2045
        %v2047 = vsel %vm767, %v2040, 0.0
        %2048 = vadd.xlane.f32.xlu0 %v2047
        %v2049 = vpop.xlane.xlu0 %2048
        %v2050 = vmul.f32 %v2043, %v771
        %v2051 = vmul.f32 %v2046, %v771
        %v2052 = vmul.f32 %v2049, %v771
        %v2053 = vadd.f32 %v2050, 1e-05
        %v2054 = vadd.f32 %v2051, 1e-05
        %v2055 = vadd.f32 %v2052, 1e-05
        %v2056 = vrsqrt.pop %v2053
        %v2057 = vrsqrt.pop %v2054
        %v2058 = vrsqrt.pop %v2055
        %v2059 = vmul.f32 %v2035, %v2056
        %v2060 = vmul.f32 %v2036, %v2057
        %v2061 = vmul.f32 %v2037, %v2058
        %v2063 = vlaneseq
        %v2064 = vshrl.u32 %v2063, 7
        %v2065 = vsub.s32 0, %v2064
        %v2066 = vrot.slane %v2021, %v2065
        %v2068 = vmul.f32 %v2059, %v2066
        %v2069 = vmul.f32 %v2060, %v2066
        %v2070 = vmul.f32 %v2061, %v2066
        %v2072 = vlaneseq
        %v2073 = vshrl.u32 %v2072, 7
        %v2074 = vsub.s32 0, %v2073
        %v2075 = vrot.slane %v2022, %v2074
        %v2077 = vadd.f32 %v2068, %v2075
        %v2078 = vadd.f32 %v2069, %v2075
        %v2079 = vadd.f32 %v2070, %v2075
        %v2080 = vld [vmem:[%s11] sm:$0xff]
        %v2081 = vld [vmem:[%s11 + $0x8] sm:$0xff]
        %v2082 = vld [vmem:[%s11 + $0x10] sm:$0xff]
        %v2083 = vld [vmem:[%s11 + $0x18] sm:$0xff]
        %v2084 = vld [vmem:[%s12] sm:$0x1]
        %v2086 = vlaneseq
        %v2087 = vshrl.u32 %v2086, 7
        %v2088 = vsub.s32 0, %v2087
        %v2089 = vrot.slane %v2084, %v2088
        %v2092 = vsel %vm760, %v2077, 0
        %v2095 = vsel %vm760, %v2078, 0
        %v2098 = vsel %vm760, %v2079, 0
        %2100 = vmatprep.subr.mxu0 0.0
        %2101 = vmatpush1.msra.mxu0 %v2080
        %2102 = vmatprep.subr.mxu0 0.0
        %2103 = vmatpush1.msra.mxu0 %v2081
        %2104 = vmatprep.subr.mxu0 0.0
        %2105 = vmatpush1.msra.mxu0 %v2082
        %2106 = vmatprep.subr.mxu0 0.0
        %2107 = vmatpush1.msra.mxu0 %v2083
        %2108 = vmatprep.subr.mxu0 0.0
        %2109 = vmatpush1.msra.mxu0 0.0
        %2110 = vmatprep.subr.mxu0 0.0
        %2111 = vmatpush1.msra.mxu0 0.0
        %2112 = vmatprep.subr.mxu0 0.0
        %2113 = vmatpush1.msra.mxu0 0.0
        %2114 = vmatprep.subr.mxu0 0.0
        %2115 = vmatpush1.msra.mxu0 0.0
        %2116 = vmatprep.subr.mxu0 0.0
        %2117 = vmatpush1.msra.mxu0 0.0
        %2118 = vmatprep.subr.mxu0 0.0
        %2119 = vmatpush1.msra.mxu0 0.0
        %2120 = vmatprep.subr.mxu0 0.0
        %2121 = vmatpush1.msra.mxu0 0.0
        %2122 = vmatprep.subr.mxu0 0.0
        %2123 = vmatpush1.msra.mxu0 0.0
        %2124 = vmatprep.subr.mxu0 0.0
        %2125 = vmatpush1.msra.mxu0 0.0
        %2126 = vmatprep.subr.mxu0 0.0
        %2127 = vmatpush1.msra.mxu0 0.0
        %2128 = vmatprep.subr.mxu0 0.0
        %2129 = vmatpush1.msra.mxu0 0.0
        %2130 = vmatprep.subr.mxu0 0.0
        %2131 = vmatpush1.msra.mxu0 0.0
        %2132 = vmatprep.subr.mxu0 0.0
        %2133 = vmatpush1.msra.mxu0 0.0
        %2134 = vmatprep.subr.mxu0 0.0
        %2135 = vmatpush1.msra.mxu0 0.0
        %2136 = vmatprep.subr.mxu0 0.0
        %2137 = vmatpush1.msra.mxu0 0.0
        %2138 = vmatprep.subr.mxu0 0.0
        %2139 = vmatpush1.msra.mxu0 0.0
        %2140 = vmatprep.subr.mxu0 0.0
        %2141 = vmatpush1.msra.mxu0 0.0
        %2142 = vmatprep.subr.mxu0 0.0
        %2143 = vmatpush1.msra.mxu0 0.0
        %2144 = vmatprep.subr.mxu0 0.0
        %2145 = vmatpush1.msra.mxu0 0.0
        %2146 = vmatprep.subr.mxu0 0.0
        %2147 = vmatpush1.msra.mxu0 0.0
        %2148 = vmatprep.subr.mxu0 0.0
        %2149 = vmatpush1.msra.mxu0 0.0
        %2150 = vmatprep.subr.mxu0 0.0
        %2151 = vmatpush1.msra.mxu0 0.0
        %2152 = vmatprep.subr.mxu0 0.0
        %2153 = vmatpush1.msra.mxu0 0.0
        %2154 = vmatprep.subr.mxu0 0.0
        %2155 = vmatpush1.msra.mxu0 0.0
        %2156 = vmatprep.subr.mxu0 0.0
        %2157 = vmatpush1.msra.mxu0 0.0
        %2158 = vmatprep.subr.mxu0 0.0
        %2159 = vmatpush1.msra.mxu0 0.0
        %2160 = vmatprep.subr.mxu0 0.0
        %2161 = vmatpush1.msra.mxu0 0.0
        %2162 = vmatprep.subr.mxu0 0.0
        %2163 = vmatpush1.msra.mxu0 0.0
        %2164 = vmatprep.mubr.f32.mxu0 0.0
        %2165 = vmatmul.mubr.f32.gmra.mrb[0].mxu0 %v2092
        %v2166 = vpop.f32.mrb[0].mxu0
        %v2167 = vadd.f32 %v2089, %v2166
        %v2168 = vpop.f32.mrb[0].mxu0
        %2169 = vmatprep.mubr.f32.mxu0 0.0
        %2170 = vmatmul.mubr.f32.gmra.mrb[0].mxu0 %v2095
        %v2171 = vpop.f32.mrb[0].mxu0
        %v2172 = vadd.f32 %v2089, %v2171
        %v2173 = vpop.f32.mrb[0].mxu0
        %2174 = vmatprep.mubr.f32.mxu0 0.0
        %2175 = vmatmul.mubr.f32.gmra.mrb[0].mxu0 %v2098
        %v2176 = vpop.f32.mrb[0].mxu0
        %v2177 = vadd.f32 %v2089, %v2176
        %v2178 = vpop.f32.mrb[0].mxu0
        %2179 = vdwg.mxu0
        %v2180 = vmax.f32 %v2167, 0.0
        %v2181 = vmax.f32 %v2172, 0.0
        %v2182 = vmax.f32 %v2177, 0.0
        %v2183 = vld [vmem:[%s13] sm:$0xff]
        %v2184 = vld [vmem:[%s13 + $0x8] sm:$0xff]
        %v2185 = vld [vmem:[%s13 + $0x10] sm:$0xff]
        %v2186 = vld [vmem:[%s13 + $0x18] sm:$0xff]
        %v2187 = vld [vmem:[%s13 + $0x20] sm:$0xff]
        %v2188 = vld [vmem:[%s13 + $0x28] sm:$0xff]
        %v2189 = vld [vmem:[%s13 + $0x30] sm:$0xff]
        %v2190 = vld [vmem:[%s13 + $0x38] sm:$0xff]
        %v2191 = vld [vmem:[%s13 + $0x40] sm:$0xff]
        %v2192 = vld [vmem:[%s13 + $0x48] sm:$0xff]
        %v2193 = vld [vmem:[%s13 + $0x50] sm:$0xff]
        %v2194 = vld [vmem:[%s13 + $0x58] sm:$0xff]
        %v2195 = vld [vmem:[%s13 + $0x60] sm:$0xff]
        %v2196 = vld [vmem:[%s13 + $0x68] sm:$0xff]
        %v2197 = vld [vmem:[%s13 + $0x70] sm:$0xff]
        %v2198 = vld [vmem:[%s13 + $0x78] sm:$0xff]
        %v2199 = vld [vmem:[%s14] sm:$0x1]
        %v2201 = vlaneseq
        %v2202 = vshrl.u32 %v2201, 7
        %v2203 = vsub.s32 0, %v2202
        %v2204 = vrot.slane %v2199, %v2203
        %2206 = vmatprep.subr.mxu0 0.0
        %2207 = vmatpush1.msra.mxu0 %v2183
        %2208 = vmatprep.subr.mxu0 0.0
        %2209 = vmatpush1.msra.mxu0 %v2184
        %2210 = vmatprep.subr.mxu0 0.0
        %2211 = vmatpush1.msra.mxu0 %v2185
        %2212 = vmatprep.subr.mxu0 0.0
        %2213 = vmatpush1.msra.mxu0 %v2186
        %2214 = vmatprep.subr.mxu0 0.0
        %2215 = vmatpush1.msra.mxu0 %v2187
        %2216 = vmatprep.subr.mxu0 0.0
        %2217 = vmatpush1.msra.mxu0 %v2188
        %2218 = vmatprep.subr.mxu0 0.0
        %2219 = vmatpush1.msra.mxu0 %v2189
        %2220 = vmatprep.subr.mxu0 0.0
        %2221 = vmatpush1.msra.mxu0 %v2190
        %2222 = vmatprep.subr.mxu0 0.0
        %2223 = vmatpush1.msra.mxu0 %v2191
        %2224 = vmatprep.subr.mxu0 0.0
        %2225 = vmatpush1.msra.mxu0 %v2192
        %2226 = vmatprep.subr.mxu0 0.0
        %2227 = vmatpush1.msra.mxu0 %v2193
        %2228 = vmatprep.subr.mxu0 0.0
        %2229 = vmatpush1.msra.mxu0 %v2194
        %2230 = vmatprep.subr.mxu0 0.0
        %2231 = vmatpush1.msra.mxu0 %v2195
        %2232 = vmatprep.subr.mxu0 0.0
        %2233 = vmatpush1.msra.mxu0 %v2196
        %2234 = vmatprep.subr.mxu0 0.0
        %2235 = vmatpush1.msra.mxu0 %v2197
        %2236 = vmatprep.subr.mxu0 0.0
        %2237 = vmatpush1.msra.mxu0 %v2198
        %2238 = vmatprep.subr.mxu0 0.0
        %2239 = vmatpush1.msra.mxu0 0.0
        %2240 = vmatprep.subr.mxu0 0.0
        %2241 = vmatpush1.msra.mxu0 0.0
        %2242 = vmatprep.subr.mxu0 0.0
        %2243 = vmatpush1.msra.mxu0 0.0
        %2244 = vmatprep.subr.mxu0 0.0
        %2245 = vmatpush1.msra.mxu0 0.0
        %2246 = vmatprep.subr.mxu0 0.0
        %2247 = vmatpush1.msra.mxu0 0.0
        %2248 = vmatprep.subr.mxu0 0.0
        %2249 = vmatpush1.msra.mxu0 0.0
        %2250 = vmatprep.subr.mxu0 0.0
        %2251 = vmatpush1.msra.mxu0 0.0
        %2252 = vmatprep.subr.mxu0 0.0
        %2253 = vmatpush1.msra.mxu0 0.0
        %2254 = vmatprep.subr.mxu0 0.0
        %2255 = vmatpush1.msra.mxu0 0.0
        %2256 = vmatprep.subr.mxu0 0.0
        %2257 = vmatpush1.msra.mxu0 0.0
        %2258 = vmatprep.subr.mxu0 0.0
        %2259 = vmatpush1.msra.mxu0 0.0
        %2260 = vmatprep.subr.mxu0 0.0
        %2261 = vmatpush1.msra.mxu0 0.0
        %2262 = vmatprep.subr.mxu0 0.0
        %2263 = vmatpush1.msra.mxu0 0.0
        %2264 = vmatprep.subr.mxu0 0.0
        %2265 = vmatpush1.msra.mxu0 0.0
        %2266 = vmatprep.subr.mxu0 0.0
        %2267 = vmatpush1.msra.mxu0 0.0
        %2268 = vmatprep.subr.mxu0 0.0
        %2269 = vmatpush1.msra.mxu0 0.0
        %2270 = vmatprep.mubr.f32.mxu0 0.0
        %2271 = vmatmul.mubr.f32.gmra.mrb[0].mxu0 %v2180
        %v2272 = vpop.f32.mrb[0].mxu0
        %v2273 = vadd.f32 %v2204, %v2272
        %v2274 = vpop.f32.mrb[0].mxu0
        %2275 = vmatprep.mubr.f32.mxu0 0.0
        %2276 = vmatmul.mubr.f32.gmra.mrb[0].mxu0 %v2181
        %v2277 = vpop.f32.mrb[0].mxu0
        %v2278 = vadd.f32 %v2204, %v2277
        %v2279 = vpop.f32.mrb[0].mxu0
        %2280 = vmatprep.mubr.f32.mxu0 0.0
        %2281 = vmatmul.mubr.f32.gmra.mrb[0].mxu0 %v2182
        %v2282 = vpop.f32.mrb[0].mxu0
        %v2283 = vadd.f32 %v2204, %v2282
        %v2284 = vpop.f32.mrb[0].mxu0
        %2285 = vdwg.mxu0
        %v2286 = vadd.f32 %v2018, %v2273
        %v2287 = vadd.f32 %v2019, %v2278
        %v2288 = vadd.f32 %v2020, %v2283
        %s2289 = scalar_lea.vmem %s3, 1
        %v2290 = vld [vmem:[%s2289] sm:$0x1]
        %s2291 = scalar_lea.vmem %s4, 1
        %v2292 = vld [vmem:[%s2291] sm:$0x1]
        %v2293 = vsel %vm760, %v2286, 0.0
        %2294 = vadd.xlane.f32.xlu0 %v2293
        %v2295 = vpop.xlane.xlu0 %2294
        %v2296 = vsel %vm760, %v2287, 0.0
        %2297 = vadd.xlane.f32.xlu0 %v2296
        %v2298 = vpop.xlane.xlu0 %2297
        %v2299 = vsel %vm767, %v2288, 0.0
        %2300 = vadd.xlane.f32.xlu0 %v2299
        %v2301 = vpop.xlane.xlu0 %2300
        %v2302 = vmul.f32 %v2295, %v771
        %v2303 = vmul.f32 %v2298, %v771
        %v2304 = vmul.f32 %v2301, %v771
        %v2305 = vsub.f32 %v2286, %v2302
        %v2306 = vsub.f32 %v2287, %v2303
        %v2307 = vsub.f32 %v2288, %v2304
        %v2308 = vmul.f32 %v2305, %v2305
        %v2309 = vmul.f32 %v2306, %v2306
        %v2310 = vmul.f32 %v2307, %v2307
        %v2311 = vsel %vm760, %v2308, 0.0
        %2312 = vadd.xlane.f32.xlu0 %v2311
        %v2313 = vpop.xlane.xlu0 %2312
        %v2314 = vsel %vm760, %v2309, 0.0
        %2315 = vadd.xlane.f32.xlu0 %v2314
        %v2316 = vpop.xlane.xlu0 %2315
        %v2317 = vsel %vm767, %v2310, 0.0
        %2318 = vadd.xlane.f32.xlu0 %v2317
        %v2319 = vpop.xlane.xlu0 %2318
        %v2320 = vmul.f32 %v2313, %v771
        %v2321 = vmul.f32 %v2316, %v771
        %v2322 = vmul.f32 %v2319, %v771
        %v2323 = vadd.f32 %v2320, 1e-05
        %v2324 = vadd.f32 %v2321, 1e-05
        %v2325 = vadd.f32 %v2322, 1e-05
        %v2326 = vrsqrt.pop %v2323
        %v2327 = vrsqrt.pop %v2324
        %v2328 = vrsqrt.pop %v2325
        %v2329 = vmul.f32 %v2305, %v2326
        %v2330 = vmul.f32 %v2306, %v2327
        %v2331 = vmul.f32 %v2307, %v2328
        %v2333 = vlaneseq
        %v2334 = vshrl.u32 %v2333, 7
        %v2335 = vsub.s32 0, %v2334
        %v2336 = vrot.slane %v2290, %v2335
        %v2338 = vmul.f32 %v2329, %v2336
        %v2339 = vmul.f32 %v2330, %v2336
        %v2340 = vmul.f32 %v2331, %v2336
        %v2342 = vlaneseq
        %v2343 = vshrl.u32 %v2342, 7
        %v2344 = vsub.s32 0, %v2343
        %v2345 = vrot.slane %v2292, %v2344
        %v2347 = vadd.f32 %v2338, %v2345
        %v2348 = vadd.f32 %v2339, %v2345
        %v2349 = vadd.f32 %v2340, %v2345
        %s2350 = scalar_lea.vmem %s5, 32
        %v2351 = vld [vmem:[%s2350] sm:$0xff]
        %v2352 = vld [vmem:[%s2350 + $0x8] sm:$0xff]
        %v2353 = vld [vmem:[%s2350 + $0x10] sm:$0xff]
        %v2354 = vld [vmem:[%s2350 + $0x18] sm:$0xff]
        %s2355 = scalar_lea.vmem %s6, 1
        %v2356 = vld [vmem:[%s2355] sm:$0x1]
        %v2358 = vlaneseq
        %v2359 = vshrl.u32 %v2358, 7
        %v2360 = vsub.s32 0, %v2359
        %v2361 = vrot.slane %v2356, %v2360
        %v2364 = vsel %vm760, %v2347, 0
        %v2367 = vsel %vm760, %v2348, 0
        %v2370 = vsel %vm760, %v2349, 0
        %2372 = vmatprep.subr.mxu0 0.0
        %2373 = vmatpush1.msra.mxu0 %v2351
        %2374 = vmatprep.subr.mxu0 0.0
        %2375 = vmatpush1.msra.mxu0 %v2352
        %2376 = vmatprep.subr.mxu0 0.0
        %2377 = vmatpush1.msra.mxu0 %v2353
        %2378 = vmatprep.subr.mxu0 0.0
        %2379 = vmatpush1.msra.mxu0 %v2354
        %2380 = vmatprep.subr.mxu0 0.0
        %2381 = vmatpush1.msra.mxu0 0.0
        %2382 = vmatprep.subr.mxu0 0.0
        %2383 = vmatpush1.msra.mxu0 0.0
        %2384 = vmatprep.subr.mxu0 0.0
        %2385 = vmatpush1.msra.mxu0 0.0
        %2386 = vmatprep.subr.mxu0 0.0
        %2387 = vmatpush1.msra.mxu0 0.0
        %2388 = vmatprep.subr.mxu0 0.0
        %2389 = vmatpush1.msra.mxu0 0.0
        %2390 = vmatprep.subr.mxu0 0.0
        %2391 = vmatpush1.msra.mxu0 0.0
        %2392 = vmatprep.subr.mxu0 0.0
        %2393 = vmatpush1.msra.mxu0 0.0
        %2394 = vmatprep.subr.mxu0 0.0
        %2395 = vmatpush1.msra.mxu0 0.0
        %2396 = vmatprep.subr.mxu0 0.0
        %2397 = vmatpush1.msra.mxu0 0.0
        %2398 = vmatprep.subr.mxu0 0.0
        %2399 = vmatpush1.msra.mxu0 0.0
        %2400 = vmatprep.subr.mxu0 0.0
        %2401 = vmatpush1.msra.mxu0 0.0
        %2402 = vmatprep.subr.mxu0 0.0
        %2403 = vmatpush1.msra.mxu0 0.0
        %2404 = vmatprep.subr.mxu0 0.0
        %2405 = vmatpush1.msra.mxu0 0.0
        %2406 = vmatprep.subr.mxu0 0.0
        %2407 = vmatpush1.msra.mxu0 0.0
        %2408 = vmatprep.subr.mxu0 0.0
        %2409 = vmatpush1.msra.mxu0 0.0
        %2410 = vmatprep.subr.mxu0 0.0
        %2411 = vmatpush1.msra.mxu0 0.0
        %2412 = vmatprep.subr.mxu0 0.0
        %2413 = vmatpush1.msra.mxu0 0.0
        %2414 = vmatprep.subr.mxu0 0.0
        %2415 = vmatpush1.msra.mxu0 0.0
        %2416 = vmatprep.subr.mxu0 0.0
        %2417 = vmatpush1.msra.mxu0 0.0
        %2418 = vmatprep.subr.mxu0 0.0
        %2419 = vmatpush1.msra.mxu0 0.0
        %2420 = vmatprep.subr.mxu0 0.0
        %2421 = vmatpush1.msra.mxu0 0.0
        %2422 = vmatprep.subr.mxu0 0.0
        %2423 = vmatpush1.msra.mxu0 0.0
        %2424 = vmatprep.subr.mxu0 0.0
        %2425 = vmatpush1.msra.mxu0 0.0
        %2426 = vmatprep.subr.mxu0 0.0
        %2427 = vmatpush1.msra.mxu0 0.0
        %2428 = vmatprep.subr.mxu0 0.0
        %2429 = vmatpush1.msra.mxu0 0.0
        %2430 = vmatprep.subr.mxu0 0.0
        %2431 = vmatpush1.msra.mxu0 0.0
        %2432 = vmatprep.subr.mxu0 0.0
        %2433 = vmatpush1.msra.mxu0 0.0
        %2434 = vmatprep.subr.mxu0 0.0
        %2435 = vmatpush1.msra.mxu0 0.0
        %2436 = vmatprep.mubr.f32.mxu0 0.0
        %2437 = vmatmul.mubr.f32.gmra.mrb[0].mxu0 %v2364
        %v2438 = vpop.f32.mrb[0].mxu0
        %v2439 = vadd.f32 %v2361, %v2438
        %v2440 = vpop.f32.mrb[0].mxu0
        %2441 = vmatprep.mubr.f32.mxu0 0.0
        %2442 = vmatmul.mubr.f32.gmra.mrb[0].mxu0 %v2367
        %v2443 = vpop.f32.mrb[0].mxu0
        %v2444 = vadd.f32 %v2361, %v2443
        %v2445 = vpop.f32.mrb[0].mxu0
        %2446 = vmatprep.mubr.f32.mxu0 0.0
        %2447 = vmatmul.mubr.f32.gmra.mrb[0].mxu0 %v2370
        %v2448 = vpop.f32.mrb[0].mxu0
        %v2449 = vadd.f32 %v2361, %v2448
        %v2450 = vpop.f32.mrb[0].mxu0
        %2451 = vdwg.mxu0
        %v2452 = vmul.f32 %v2439, 0.35355338
        %v2453 = vmul.f32 %v2444, 0.35355338
        %v2454 = vmul.f32 %v2449, 0.35355338
        %2458 = vrot.lane.b32.xlu0 %v2439, 96
        %v2459 = vpop.permute.xlu0 %2458
        %2460 = vrot.lane.b32.xlu0 %v2444, 96
        %v2461 = vpop.permute.xlu0 %2460
        %2462 = vrot.lane.b32.xlu0 %v2449, 96
        %v2463 = vpop.permute.xlu0 %2462
        %v2465 = vsel %vm932, %v2452, 0
        %v2468 = vsel %vm932, %v2453, 0
        %v2471 = vsel %vm932, %v2454, 0
        %v2473 = vsel %vm932, %v2459, 0
        %v2475 = vsel %vm932, %v2461, 0
        %v2477 = vsel %vm932, %v2463, 0
        %2479 = vmatprep.subr.mxu0 0.0
        %2480 = vmatpush1.xpose.msra.mxu0 %v2473
        %2481 = vmatprep.subr.mxu0 0.0
        %2482 = vmatpush1.xpose.msra.mxu0 %v2475
        %2483 = vmatprep.subr.mxu0 0.0
        %2484 = vmatpush1.xpose.msra.mxu0 %v2477
        %2485 = vmatprep.subr.mxu0 0.0
        %2486 = vmatpush1.xpose.msra.mxu0 0.0
        %2487 = vmatprep.subr.mxu0 0.0
        %2488 = vmatpush1.xpose.msra.mxu0 0.0
        %2489 = vmatprep.subr.mxu0 0.0
        %2490 = vmatpush1.xpose.msra.mxu0 0.0
        %2491 = vmatprep.subr.mxu0 0.0
        %2492 = vmatpush1.xpose.msra.mxu0 0.0
        %2493 = vmatprep.subr.mxu0 0.0
        %2494 = vmatpush1.xpose.msra.mxu0 0.0
        %2495 = vmatprep.subr.mxu0 0.0
        %2496 = vmatpush1.xpose.msra.mxu0 0.0
        %2497 = vmatprep.subr.mxu0 0.0
        %2498 = vmatpush1.xpose.msra.mxu0 0.0
        %2499 = vmatprep.subr.mxu0 0.0
        %2500 = vmatpush1.xpose.msra.mxu0 0.0
        %2501 = vmatprep.subr.mxu0 0.0
        %2502 = vmatpush1.xpose.msra.mxu0 0.0
        %2503 = vmatprep.subr.mxu0 0.0
        %2504 = vmatpush1.xpose.msra.mxu0 0.0
        %2505 = vmatprep.subr.mxu0 0.0
        %2506 = vmatpush1.xpose.msra.mxu0 0.0
        %2507 = vmatprep.subr.mxu0 0.0
        %2508 = vmatpush1.xpose.msra.mxu0 0.0
        %2509 = vmatprep.subr.mxu0 0.0
        %2510 = vmatpush1.xpose.msra.mxu0 0.0
        %2511 = vmatprep.subr.mxu0 0.0
        %2512 = vmatpush1.xpose.msra.mxu0 0.0
        %2513 = vmatprep.subr.mxu0 0.0
        %2514 = vmatpush1.xpose.msra.mxu0 0.0
        %2515 = vmatprep.subr.mxu0 0.0
        %2516 = vmatpush1.xpose.msra.mxu0 0.0
        %2517 = vmatprep.subr.mxu0 0.0
        %2518 = vmatpush1.xpose.msra.mxu0 0.0
        %2519 = vmatprep.subr.mxu0 0.0
        %2520 = vmatpush1.xpose.msra.mxu0 0.0
        %2521 = vmatprep.subr.mxu0 0.0
        %2522 = vmatpush1.xpose.msra.mxu0 0.0
        %2523 = vmatprep.subr.mxu0 0.0
        %2524 = vmatpush1.xpose.msra.mxu0 0.0
        %2525 = vmatprep.subr.mxu0 0.0
        %2526 = vmatpush1.xpose.msra.mxu0 0.0
        %2527 = vmatprep.subr.mxu0 0.0
        %2528 = vmatpush1.xpose.msra.mxu0 0.0
        %2529 = vmatprep.subr.mxu0 0.0
        %2530 = vmatpush1.xpose.msra.mxu0 0.0
        %2531 = vmatprep.subr.mxu0 0.0
        %2532 = vmatpush1.xpose.msra.mxu0 0.0
        %2533 = vmatprep.subr.mxu0 0.0
        %2534 = vmatpush1.xpose.msra.mxu0 0.0
        %2535 = vmatprep.subr.mxu0 0.0
        %2536 = vmatpush1.xpose.msra.mxu0 0.0
        %2537 = vmatprep.subr.mxu0 0.0
        %2538 = vmatpush1.xpose.msra.mxu0 0.0
        %2539 = vmatprep.subr.mxu0 0.0
        %2540 = vmatpush1.xpose.msra.mxu0 0.0
        %2541 = vmatprep.subr.mxu0 0.0
        %2542 = vmatpush1.xpose.msra.mxu0 0.0
        %2543 = vmatprep.mubr.f32.mxu0 0.0
        %2544 = vmatmul.mubr.f32.gmra.mrb[0].mxu0 %v2465
        %v2545 = vpop.f32.mrb[0].mxu0
        %v2546 = vadd.f32 0.0, %v2545
        %v2547 = vpop.f32.mrb[0].mxu0
        %2548 = vmatprep.mubr.f32.mxu0 0.0
        %2549 = vmatmul.mubr.f32.gmra.mrb[0].mxu0 %v2468
        %v2550 = vpop.f32.mrb[0].mxu0
        %v2551 = vadd.f32 0.0, %v2550
        %v2552 = vpop.f32.mrb[0].mxu0
        %2553 = vmatprep.mubr.f32.mxu0 0.0
        %2554 = vmatmul.mubr.f32.gmra.mrb[0].mxu0 %v2471
        %v2555 = vpop.f32.mrb[0].mxu0
        %v2556 = vadd.f32 0.0, %v2555
        %v2557 = vpop.f32.mrb[0].mxu0
        %2558 = vdwg.mxu0
        %v2559 = vsel %vm1028, %v2546, -inf
        %2560 = vmax.xlane.f32.xlu0 %v2559
        %v2561 = vpop.xlane.xlu0 %2560
        %v2562 = vsel %vm1028, %v2551, -inf
        %2563 = vmax.xlane.f32.xlu0 %v2562
        %v2564 = vpop.xlane.xlu0 %2563
        %v2565 = vsel %vm1035, %v2556, -inf
        %2566 = vmax.xlane.f32.xlu0 %v2565
        %v2567 = vpop.xlane.xlu0 %2566
        %v2568 = vsub.f32 %v2546, %v2561
        %v2569 = vsub.f32 %v2551, %v2564
        %v2570 = vsub.f32 %v2556, %v2567
        %v2571 = vmul.f32 %v2568, 1.442695
        %v2572 = vpow.pop %v2571
        %v2573 = vmul.f32 %v2569, 1.442695
        %v2574 = vpow.pop %v2573
        %v2575 = vmul.f32 %v2570, 1.442695
        %v2576 = vpow.pop %v2575
        %v2577 = vsel %vm1028, %v2572, 0.0
        %2578 = vadd.xlane.f32.xlu0 %v2577
        %v2579 = vpop.xlane.xlu0 %2578
        %v2580 = vsel %vm1028, %v2574, 0.0
        %2581 = vadd.xlane.f32.xlu0 %v2580
        %v2582 = vpop.xlane.xlu0 %2581
        %v2583 = vsel %vm1035, %v2576, 0.0
        %2584 = vadd.xlane.f32.xlu0 %v2583
        %v2585 = vpop.xlane.xlu0 %2584
        %v2586 = vrcp.pop %v2579
        %v2587 = vrcp.pop %v2582
        %v2588 = vrcp.pop %v2585
        %v2589 = vmul.f32 %v2572, %v2586
        %v2590 = vmul.f32 %v2574, %v2587
        %v2591 = vmul.f32 %v2576, %v2588
        %2592 = vrot.lane.b32.xlu0 %v2439, 64
        %v2593 = vpop.permute.xlu0 %2592
        %2594 = vrot.lane.b32.xlu0 %v2444, 64
        %v2595 = vpop.permute.xlu0 %2594
        %2596 = vrot.lane.b32.xlu0 %v2449, 64
        %v2597 = vpop.permute.xlu0 %2596
        %v2601 = vsel %vm1028, %v2589, 0
        %v2604 = vsel %vm1028, %v2590, 0
        %v2607 = vsel %vm1028, %v2591, 0
        %v2609 = vsel %vm1080, %v2597, 0
        %2611 = vmatprep.subr.mxu0 0.0
        %2612 = vmatpush1.msra.mxu0 %v2593
        %2613 = vmatprep.subr.mxu0 0.0
        %2614 = vmatpush1.msra.mxu0 %v2595
        %2615 = vmatprep.subr.mxu0 0.0
        %2616 = vmatpush1.msra.mxu0 %v2609
        %2617 = vmatprep.subr.mxu0 0.0
        %2618 = vmatpush1.msra.mxu0 0.0
        %2619 = vmatprep.subr.mxu0 0.0
        %2620 = vmatpush1.msra.mxu0 0.0
        %2621 = vmatprep.subr.mxu0 0.0
        %2622 = vmatpush1.msra.mxu0 0.0
        %2623 = vmatprep.subr.mxu0 0.0
        %2624 = vmatpush1.msra.mxu0 0.0
        %2625 = vmatprep.subr.mxu0 0.0
        %2626 = vmatpush1.msra.mxu0 0.0
        %2627 = vmatprep.subr.mxu0 0.0
        %2628 = vmatpush1.msra.mxu0 0.0
        %2629 = vmatprep.subr.mxu0 0.0
        %2630 = vmatpush1.msra.mxu0 0.0
        %2631 = vmatprep.subr.mxu0 0.0
        %2632 = vmatpush1.msra.mxu0 0.0
        %2633 = vmatprep.subr.mxu0 0.0
        %2634 = vmatpush1.msra.mxu0 0.0
        %2635 = vmatprep.subr.mxu0 0.0
        %2636 = vmatpush1.msra.mxu0 0.0
        %2637 = vmatprep.subr.mxu0 0.0
        %2638 = vmatpush1.msra.mxu0 0.0
        %2639 = vmatprep.subr.mxu0 0.0
        %2640 = vmatpush1.msra.mxu0 0.0
        %2641 = vmatprep.subr.mxu0 0.0
        %2642 = vmatpush1.msra.mxu0 0.0
        %2643 = vmatprep.subr.mxu0 0.0
        %2644 = vmatpush1.msra.mxu0 0.0
        %2645 = vmatprep.subr.mxu0 0.0
        %2646 = vmatpush1.msra.mxu0 0.0
        %2647 = vmatprep.subr.mxu0 0.0
        %2648 = vmatpush1.msra.mxu0 0.0
        %2649 = vmatprep.subr.mxu0 0.0
        %2650 = vmatpush1.msra.mxu0 0.0
        %2651 = vmatprep.subr.mxu0 0.0
        %2652 = vmatpush1.msra.mxu0 0.0
        %2653 = vmatprep.subr.mxu0 0.0
        %2654 = vmatpush1.msra.mxu0 0.0
        %2655 = vmatprep.subr.mxu0 0.0
        %2656 = vmatpush1.msra.mxu0 0.0
        %2657 = vmatprep.subr.mxu0 0.0
        %2658 = vmatpush1.msra.mxu0 0.0
        %2659 = vmatprep.subr.mxu0 0.0
        %2660 = vmatpush1.msra.mxu0 0.0
        %2661 = vmatprep.subr.mxu0 0.0
        %2662 = vmatpush1.msra.mxu0 0.0
        %2663 = vmatprep.subr.mxu0 0.0
        %2664 = vmatpush1.msra.mxu0 0.0
        %2665 = vmatprep.subr.mxu0 0.0
        %2666 = vmatpush1.msra.mxu0 0.0
        %2667 = vmatprep.subr.mxu0 0.0
        %2668 = vmatpush1.msra.mxu0 0.0
        %2669 = vmatprep.subr.mxu0 0.0
        %2670 = vmatpush1.msra.mxu0 0.0
        %2671 = vmatprep.subr.mxu0 0.0
        %2672 = vmatpush1.msra.mxu0 0.0
        %2673 = vmatprep.subr.mxu0 0.0
        %2674 = vmatpush1.msra.mxu0 0.0
        %2675 = vmatprep.mubr.f32.mxu0 0.0
        %2676 = vmatmul.mubr.f32.gmra.mrb[0].mxu0 %v2601
        %v2677 = vpop.f32.mrb[0].mxu0
        %v2678 = vadd.f32 0.0, %v2677
        %v2679 = vpop.f32.mrb[0].mxu0
        %2680 = vmatprep.mubr.f32.mxu0 0.0
        %2681 = vmatmul.mubr.f32.gmra.mrb[0].mxu0 %v2604
        %v2682 = vpop.f32.mrb[0].mxu0
        %v2683 = vadd.f32 0.0, %v2682
        %v2684 = vpop.f32.mrb[0].mxu0
        %2685 = vmatprep.mubr.f32.mxu0 0.0
        %2686 = vmatmul.mubr.f32.gmra.mrb[0].mxu0 %v2607
        %v2687 = vpop.f32.mrb[0].mxu0
        %v2688 = vadd.f32 0.0, %v2687
        %v2689 = vpop.f32.mrb[0].mxu0
        %2690 = vdwg.mxu0
        %2691 = vrot.lane.b32.xlu0 %v2452, 120
        %v2692 = vpop.permute.xlu0 %2691
        %2693 = vrot.lane.b32.xlu0 %v2453, 120
        %v2694 = vpop.permute.xlu0 %2693
        %2695 = vrot.lane.b32.xlu0 %v2454, 120
        %v2696 = vpop.permute.xlu0 %2695
        %2697 = vrot.lane.b32.xlu0 %v2439, 88
        %v2698 = vpop.permute.xlu0 %2697
        %2699 = vrot.lane.b32.xlu0 %v2444, 88
        %v2700 = vpop.permute.xlu0 %2699
        %2701 = vrot.lane.b32.xlu0 %v2449, 88
        %v2702 = vpop.permute.xlu0 %2701
        %v2703 = vsel %vm932, %v2692, 0
        %v2705 = vsel %vm932, %v2694, 0
        %v2707 = vsel %vm932, %v2696, 0
        %v2709 = vsel %vm932, %v2698, 0
        %v2711 = vsel %vm932, %v2700, 0
        %v2713 = vsel %vm932, %v2702, 0
        %2715 = vmatprep.subr.mxu0 0.0
        %2716 = vmatpush1.xpose.msra.mxu0 %v2709
        %2717 = vmatprep.subr.mxu0 0.0
        %2718 = vmatpush1.xpose.msra.mxu0 %v2711
        %2719 = vmatprep.subr.mxu0 0.0
        %2720 = vmatpush1.xpose.msra.mxu0 %v2713
        %2721 = vmatprep.subr.mxu0 0.0
        %2722 = vmatpush1.xpose.msra.mxu0 0.0
        %2723 = vmatprep.subr.mxu0 0.0
        %2724 = vmatpush1.xpose.msra.mxu0 0.0
        %2725 = vmatprep.subr.mxu0 0.0
        %2726 = vmatpush1.xpose.msra.mxu0 0.0
        %2727 = vmatprep.subr.mxu0 0.0
        %2728 = vmatpush1.xpose.msra.mxu0 0.0
        %2729 = vmatprep.subr.mxu0 0.0
        %2730 = vmatpush1.xpose.msra.mxu0 0.0
        %2731 = vmatprep.subr.mxu0 0.0
        %2732 = vmatpush1.xpose.msra.mxu0 0.0
        %2733 = vmatprep.subr.mxu0 0.0
        %2734 = vmatpush1.xpose.msra.mxu0 0.0
        %2735 = vmatprep.subr.mxu0 0.0
        %2736 = vmatpush1.xpose.msra.mxu0 0.0
        %2737 = vmatprep.subr.mxu0 0.0
        %2738 = vmatpush1.xpose.msra.mxu0 0.0
        %2739 = vmatprep.subr.mxu0 0.0
        %2740 = vmatpush1.xpose.msra.mxu0 0.0
        %2741 = vmatprep.subr.mxu0 0.0
        %2742 = vmatpush1.xpose.msra.mxu0 0.0
        %2743 = vmatprep.subr.mxu0 0.0
        %2744 = vmatpush1.xpose.msra.mxu0 0.0
        %2745 = vmatprep.subr.mxu0 0.0
        %2746 = vmatpush1.xpose.msra.mxu0 0.0
        %2747 = vmatprep.subr.mxu0 0.0
        %2748 = vmatpush1.xpose.msra.mxu0 0.0
        %2749 = vmatprep.subr.mxu0 0.0
        %2750 = vmatpush1.xpose.msra.mxu0 0.0
        %2751 = vmatprep.subr.mxu0 0.0
        %2752 = vmatpush1.xpose.msra.mxu0 0.0
        %2753 = vmatprep.subr.mxu0 0.0
        %2754 = vmatpush1.xpose.msra.mxu0 0.0
        %2755 = vmatprep.subr.mxu0 0.0
        %2756 = vmatpush1.xpose.msra.mxu0 0.0
        %2757 = vmatprep.subr.mxu0 0.0
        %2758 = vmatpush1.xpose.msra.mxu0 0.0
        %2759 = vmatprep.subr.mxu0 0.0
        %2760 = vmatpush1.xpose.msra.mxu0 0.0
        %2761 = vmatprep.subr.mxu0 0.0
        %2762 = vmatpush1.xpose.msra.mxu0 0.0
        %2763 = vmatprep.subr.mxu0 0.0
        %2764 = vmatpush1.xpose.msra.mxu0 0.0
        %2765 = vmatprep.subr.mxu0 0.0
        %2766 = vmatpush1.xpose.msra.mxu0 0.0
        %2767 = vmatprep.subr.mxu0 0.0
        %2768 = vmatpush1.xpose.msra.mxu0 0.0
        %2769 = vmatprep.subr.mxu0 0.0
        %2770 = vmatpush1.xpose.msra.mxu0 0.0
        %2771 = vmatprep.subr.mxu0 0.0
        %2772 = vmatpush1.xpose.msra.mxu0 0.0
        %2773 = vmatprep.subr.mxu0 0.0
        %2774 = vmatpush1.xpose.msra.mxu0 0.0
        %2775 = vmatprep.subr.mxu0 0.0
        %2776 = vmatpush1.xpose.msra.mxu0 0.0
        %2777 = vmatprep.subr.mxu0 0.0
        %2778 = vmatpush1.xpose.msra.mxu0 0.0
        %2779 = vmatprep.mubr.f32.mxu0 0.0
        %2780 = vmatmul.mubr.f32.gmra.mrb[0].mxu0 %v2703
        %v2781 = vpop.f32.mrb[0].mxu0
        %v2782 = vadd.f32 0.0, %v2781
        %v2783 = vpop.f32.mrb[0].mxu0
        %2784 = vmatprep.mubr.f32.mxu0 0.0
        %2785 = vmatmul.mubr.f32.gmra.mrb[0].mxu0 %v2705
        %v2786 = vpop.f32.mrb[0].mxu0
        %v2787 = vadd.f32 0.0, %v2786
        %v2788 = vpop.f32.mrb[0].mxu0
        %2789 = vmatprep.mubr.f32.mxu0 0.0
        %2790 = vmatmul.mubr.f32.gmra.mrb[0].mxu0 %v2707
        %v2791 = vpop.f32.mrb[0].mxu0
        %v2792 = vadd.f32 0.0, %v2791
        %v2793 = vpop.f32.mrb[0].mxu0
        %2794 = vdwg.mxu0
        %v2795 = vsel %vm1028, %v2782, -inf
        %2796 = vmax.xlane.f32.xlu0 %v2795
        %v2797 = vpop.xlane.xlu0 %2796
        %v2798 = vsel %vm1028, %v2787, -inf
        %2799 = vmax.xlane.f32.xlu0 %v2798
        %v2800 = vpop.xlane.xlu0 %2799
        %v2801 = vsel %vm1035, %v2792, -inf
        %2802 = vmax.xlane.f32.xlu0 %v2801
        %v2803 = vpop.xlane.xlu0 %2802
        %v2804 = vsub.f32 %v2782, %v2797
        %v2805 = vsub.f32 %v2787, %v2800
        %v2806 = vsub.f32 %v2792, %v2803
        %v2807 = vmul.f32 %v2804, 1.442695
        %v2808 = vpow.pop %v2807
        %v2809 = vmul.f32 %v2805, 1.442695
        %v2810 = vpow.pop %v2809
        %v2811 = vmul.f32 %v2806, 1.442695
        %v2812 = vpow.pop %v2811
        %v2813 = vsel %vm1028, %v2808, 0.0
        %2814 = vadd.xlane.f32.xlu0 %v2813
        %v2815 = vpop.xlane.xlu0 %2814
        %v2816 = vsel %vm1028, %v2810, 0.0
        %2817 = vadd.xlane.f32.xlu0 %v2816
        %v2818 = vpop.xlane.xlu0 %2817
        %v2819 = vsel %vm1035, %v2812, 0.0
        %2820 = vadd.xlane.f32.xlu0 %v2819
        %v2821 = vpop.xlane.xlu0 %2820
        %v2822 = vrcp.pop %v2815
        %v2823 = vrcp.pop %v2818
        %v2824 = vrcp.pop %v2821
        %v2825 = vmul.f32 %v2808, %v2822
        %v2826 = vmul.f32 %v2810, %v2823
        %v2827 = vmul.f32 %v2812, %v2824
        %2828 = vrot.lane.b32.xlu0 %v2439, 56
        %v2829 = vpop.permute.xlu0 %2828
        %2830 = vrot.lane.b32.xlu0 %v2444, 56
        %v2831 = vpop.permute.xlu0 %2830
        %2832 = vrot.lane.b32.xlu0 %v2449, 56
        %v2833 = vpop.permute.xlu0 %2832
        %v2837 = vsel %vm1028, %v2825, 0
        %v2840 = vsel %vm1028, %v2826, 0
        %v2843 = vsel %vm1028, %v2827, 0
        %v2845 = vsel %vm1080, %v2833, 0
        %2847 = vmatprep.subr.mxu0 0.0
        %2848 = vmatpush1.msra.mxu0 %v2829
        %2849 = vmatprep.subr.mxu0 0.0
        %2850 = vmatpush1.msra.mxu0 %v2831
        %2851 = vmatprep.subr.mxu0 0.0
        %2852 = vmatpush1.msra.mxu0 %v2845
        %2853 = vmatprep.subr.mxu0 0.0
        %2854 = vmatpush1.msra.mxu0 0.0
        %2855 = vmatprep.subr.mxu0 0.0
        %2856 = vmatpush1.msra.mxu0 0.0
        %2857 = vmatprep.subr.mxu0 0.0
        %2858 = vmatpush1.msra.mxu0 0.0
        %2859 = vmatprep.subr.mxu0 0.0
        %2860 = vmatpush1.msra.mxu0 0.0
        %2861 = vmatprep.subr.mxu0 0.0
        %2862 = vmatpush1.msra.mxu0 0.0
        %2863 = vmatprep.subr.mxu0 0.0
        %2864 = vmatpush1.msra.mxu0 0.0
        %2865 = vmatprep.subr.mxu0 0.0
        %2866 = vmatpush1.msra.mxu0 0.0
        %2867 = vmatprep.subr.mxu0 0.0
        %2868 = vmatpush1.msra.mxu0 0.0
        %2869 = vmatprep.subr.mxu0 0.0
        %2870 = vmatpush1.msra.mxu0 0.0
        %2871 = vmatprep.subr.mxu0 0.0
        %2872 = vmatpush1.msra.mxu0 0.0
        %2873 = vmatprep.subr.mxu0 0.0
        %2874 = vmatpush1.msra.mxu0 0.0
        %2875 = vmatprep.subr.mxu0 0.0
        %2876 = vmatpush1.msra.mxu0 0.0
        %2877 = vmatprep.subr.mxu0 0.0
        %2878 = vmatpush1.msra.mxu0 0.0
        %2879 = vmatprep.subr.mxu0 0.0
        %2880 = vmatpush1.msra.mxu0 0.0
        %2881 = vmatprep.subr.mxu0 0.0
        %2882 = vmatpush1.msra.mxu0 0.0
        %2883 = vmatprep.subr.mxu0 0.0
        %2884 = vmatpush1.msra.mxu0 0.0
        %2885 = vmatprep.subr.mxu0 0.0
        %2886 = vmatpush1.msra.mxu0 0.0
        %2887 = vmatprep.subr.mxu0 0.0
        %2888 = vmatpush1.msra.mxu0 0.0
        %2889 = vmatprep.subr.mxu0 0.0
        %2890 = vmatpush1.msra.mxu0 0.0
        %2891 = vmatprep.subr.mxu0 0.0
        %2892 = vmatpush1.msra.mxu0 0.0
        %2893 = vmatprep.subr.mxu0 0.0
        %2894 = vmatpush1.msra.mxu0 0.0
        %2895 = vmatprep.subr.mxu0 0.0
        %2896 = vmatpush1.msra.mxu0 0.0
        %2897 = vmatprep.subr.mxu0 0.0
        %2898 = vmatpush1.msra.mxu0 0.0
        %2899 = vmatprep.subr.mxu0 0.0
        %2900 = vmatpush1.msra.mxu0 0.0
        %2901 = vmatprep.subr.mxu0 0.0
        %2902 = vmatpush1.msra.mxu0 0.0
        %2903 = vmatprep.subr.mxu0 0.0
        %2904 = vmatpush1.msra.mxu0 0.0
        %2905 = vmatprep.subr.mxu0 0.0
        %2906 = vmatpush1.msra.mxu0 0.0
        %2907 = vmatprep.subr.mxu0 0.0
        %2908 = vmatpush1.msra.mxu0 0.0
        %2909 = vmatprep.subr.mxu0 0.0
        %2910 = vmatpush1.msra.mxu0 0.0
        %2911 = vmatprep.mubr.f32.mxu0 0.0
        %2912 = vmatmul.mubr.f32.gmra.mrb[0].mxu0 %v2837
        %v2913 = vpop.f32.mrb[0].mxu0
        %v2914 = vadd.f32 0.0, %v2913
        %v2915 = vpop.f32.mrb[0].mxu0
        %2916 = vmatprep.mubr.f32.mxu0 0.0
        %2917 = vmatmul.mubr.f32.gmra.mrb[0].mxu0 %v2840
        %v2918 = vpop.f32.mrb[0].mxu0
        %v2919 = vadd.f32 0.0, %v2918
        %v2920 = vpop.f32.mrb[0].mxu0
        %2921 = vmatprep.mubr.f32.mxu0 0.0
        %2922 = vmatmul.mubr.f32.gmra.mrb[0].mxu0 %v2843
        %v2923 = vpop.f32.mrb[0].mxu0
        %v2924 = vadd.f32 0.0, %v2923
        %v2925 = vpop.f32.mrb[0].mxu0
        %2926 = vdwg.mxu0
        %2927 = vrot.lane.b32.xlu0 %v2452, 112
        %v2928 = vpop.permute.xlu0 %2927
        %2929 = vrot.lane.b32.xlu0 %v2453, 112
        %v2930 = vpop.permute.xlu0 %2929
        %2931 = vrot.lane.b32.xlu0 %v2454, 112
        %v2932 = vpop.permute.xlu0 %2931
        %2933 = vrot.lane.b32.xlu0 %v2439, 80
        %v2934 = vpop.permute.xlu0 %2933
        %2935 = vrot.lane.b32.xlu0 %v2444, 80
        %v2936 = vpop.permute.xlu0 %2935
        %2937 = vrot.lane.b32.xlu0 %v2449, 80
        %v2938 = vpop.permute.xlu0 %2937
        %v2939 = vsel %vm932, %v2928, 0
        %v2941 = vsel %vm932, %v2930, 0
        %v2943 = vsel %vm932, %v2932, 0
        %v2945 = vsel %vm932, %v2934, 0
        %v2947 = vsel %vm932, %v2936, 0
        %v2949 = vsel %vm932, %v2938, 0
        %2951 = vmatprep.subr.mxu0 0.0
        %2952 = vmatpush1.xpose.msra.mxu0 %v2945
        %2953 = vmatprep.subr.mxu0 0.0
        %2954 = vmatpush1.xpose.msra.mxu0 %v2947
        %2955 = vmatprep.subr.mxu0 0.0
        %2956 = vmatpush1.xpose.msra.mxu0 %v2949
        %2957 = vmatprep.subr.mxu0 0.0
        %2958 = vmatpush1.xpose.msra.mxu0 0.0
        %2959 = vmatprep.subr.mxu0 0.0
        %2960 = vmatpush1.xpose.msra.mxu0 0.0
        %2961 = vmatprep.subr.mxu0 0.0
        %2962 = vmatpush1.xpose.msra.mxu0 0.0
        %2963 = vmatprep.subr.mxu0 0.0
        %2964 = vmatpush1.xpose.msra.mxu0 0.0
        %2965 = vmatprep.subr.mxu0 0.0
        %2966 = vmatpush1.xpose.msra.mxu0 0.0
        %2967 = vmatprep.subr.mxu0 0.0
        %2968 = vmatpush1.xpose.msra.mxu0 0.0
        %2969 = vmatprep.subr.mxu0 0.0
        %2970 = vmatpush1.xpose.msra.mxu0 0.0
        %2971 = vmatprep.subr.mxu0 0.0
        %2972 = vmatpush1.xpose.msra.mxu0 0.0
        %2973 = vmatprep.subr.mxu0 0.0
        %2974 = vmatpush1.xpose.msra.mxu0 0.0
        %2975 = vmatprep.subr.mxu0 0.0
        %2976 = vmatpush1.xpose.msra.mxu0 0.0
        %2977 = vmatprep.subr.mxu0 0.0
        %2978 = vmatpush1.xpose.msra.mxu0 0.0
        %2979 = vmatprep.subr.mxu0 0.0
        %2980 = vmatpush1.xpose.msra.mxu0 0.0
        %2981 = vmatprep.subr.mxu0 0.0
        %2982 = vmatpush1.xpose.msra.mxu0 0.0
        %2983 = vmatprep.subr.mxu0 0.0
        %2984 = vmatpush1.xpose.msra.mxu0 0.0
        %2985 = vmatprep.subr.mxu0 0.0
        %2986 = vmatpush1.xpose.msra.mxu0 0.0
        %2987 = vmatprep.subr.mxu0 0.0
        %2988 = vmatpush1.xpose.msra.mxu0 0.0
        %2989 = vmatprep.subr.mxu0 0.0
        %2990 = vmatpush1.xpose.msra.mxu0 0.0
        %2991 = vmatprep.subr.mxu0 0.0
        %2992 = vmatpush1.xpose.msra.mxu0 0.0
        %2993 = vmatprep.subr.mxu0 0.0
        %2994 = vmatpush1.xpose.msra.mxu0 0.0
        %2995 = vmatprep.subr.mxu0 0.0
        %2996 = vmatpush1.xpose.msra.mxu0 0.0
        %2997 = vmatprep.subr.mxu0 0.0
        %2998 = vmatpush1.xpose.msra.mxu0 0.0
        %2999 = vmatprep.subr.mxu0 0.0
        %3000 = vmatpush1.xpose.msra.mxu0 0.0
        %3001 = vmatprep.subr.mxu0 0.0
        %3002 = vmatpush1.xpose.msra.mxu0 0.0
        %3003 = vmatprep.subr.mxu0 0.0
        %3004 = vmatpush1.xpose.msra.mxu0 0.0
        %3005 = vmatprep.subr.mxu0 0.0
        %3006 = vmatpush1.xpose.msra.mxu0 0.0
        %3007 = vmatprep.subr.mxu0 0.0
        %3008 = vmatpush1.xpose.msra.mxu0 0.0
        %3009 = vmatprep.subr.mxu0 0.0
        %3010 = vmatpush1.xpose.msra.mxu0 0.0
        %3011 = vmatprep.subr.mxu0 0.0
        %3012 = vmatpush1.xpose.msra.mxu0 0.0
        %3013 = vmatprep.subr.mxu0 0.0
        %3014 = vmatpush1.xpose.msra.mxu0 0.0
        %3015 = vmatprep.mubr.f32.mxu0 0.0
        %3016 = vmatmul.mubr.f32.gmra.mrb[0].mxu0 %v2939
        %v3017 = vpop.f32.mrb[0].mxu0
        %v3018 = vadd.f32 0.0, %v3017
        %v3019 = vpop.f32.mrb[0].mxu0
        %3020 = vmatprep.mubr.f32.mxu0 0.0
        %3021 = vmatmul.mubr.f32.gmra.mrb[0].mxu0 %v2941
        %v3022 = vpop.f32.mrb[0].mxu0
        %v3023 = vadd.f32 0.0, %v3022
        %v3024 = vpop.f32.mrb[0].mxu0
        %3025 = vmatprep.mubr.f32.mxu0 0.0
        %3026 = vmatmul.mubr.f32.gmra.mrb[0].mxu0 %v2943
        %v3027 = vpop.f32.mrb[0].mxu0
        %v3028 = vadd.f32 0.0, %v3027
        %v3029 = vpop.f32.mrb[0].mxu0
        %3030 = vdwg.mxu0
        %v3031 = vsel %vm1028, %v3018, -inf
        %3032 = vmax.xlane.f32.xlu0 %v3031
        %v3033 = vpop.xlane.xlu0 %3032
        %v3034 = vsel %vm1028, %v3023, -inf
        %3035 = vmax.xlane.f32.xlu0 %v3034
        %v3036 = vpop.xlane.xlu0 %3035
        %v3037 = vsel %vm1035, %v3028, -inf
        %3038 = vmax.xlane.f32.xlu0 %v3037
        %v3039 = vpop.xlane.xlu0 %3038
        %v3040 = vsub.f32 %v3018, %v3033
        %v3041 = vsub.f32 %v3023, %v3036
        %v3042 = vsub.f32 %v3028, %v3039
        %v3043 = vmul.f32 %v3040, 1.442695
        %v3044 = vpow.pop %v3043
        %v3045 = vmul.f32 %v3041, 1.442695
        %v3046 = vpow.pop %v3045
        %v3047 = vmul.f32 %v3042, 1.442695
        %v3048 = vpow.pop %v3047
        %v3049 = vsel %vm1028, %v3044, 0.0
        %3050 = vadd.xlane.f32.xlu0 %v3049
        %v3051 = vpop.xlane.xlu0 %3050
        %v3052 = vsel %vm1028, %v3046, 0.0
        %3053 = vadd.xlane.f32.xlu0 %v3052
        %v3054 = vpop.xlane.xlu0 %3053
        %v3055 = vsel %vm1035, %v3048, 0.0
        %3056 = vadd.xlane.f32.xlu0 %v3055
        %v3057 = vpop.xlane.xlu0 %3056
        %v3058 = vrcp.pop %v3051
        %v3059 = vrcp.pop %v3054
        %v3060 = vrcp.pop %v3057
        %v3061 = vmul.f32 %v3044, %v3058
        %v3062 = vmul.f32 %v3046, %v3059
        %v3063 = vmul.f32 %v3048, %v3060
        %3064 = vrot.lane.b32.xlu0 %v2439, 48
        %v3065 = vpop.permute.xlu0 %3064
        %3066 = vrot.lane.b32.xlu0 %v2444, 48
        %v3067 = vpop.permute.xlu0 %3066
        %3068 = vrot.lane.b32.xlu0 %v2449, 48
        %v3069 = vpop.permute.xlu0 %3068
        %v3073 = vsel %vm1028, %v3061, 0
        %v3076 = vsel %vm1028, %v3062, 0
        %v3079 = vsel %vm1028, %v3063, 0
        %v3081 = vsel %vm1080, %v3069, 0
        %3083 = vmatprep.subr.mxu0 0.0
        %3084 = vmatpush1.msra.mxu0 %v3065
        %3085 = vmatprep.subr.mxu0 0.0
        %3086 = vmatpush1.msra.mxu0 %v3067
        %3087 = vmatprep.subr.mxu0 0.0
        %3088 = vmatpush1.msra.mxu0 %v3081
        %3089 = vmatprep.subr.mxu0 0.0
        %3090 = vmatpush1.msra.mxu0 0.0
        %3091 = vmatprep.subr.mxu0 0.0
        %3092 = vmatpush1.msra.mxu0 0.0
        %3093 = vmatprep.subr.mxu0 0.0
        %3094 = vmatpush1.msra.mxu0 0.0
        %3095 = vmatprep.subr.mxu0 0.0
        %3096 = vmatpush1.msra.mxu0 0.0
        %3097 = vmatprep.subr.mxu0 0.0
        %3098 = vmatpush1.msra.mxu0 0.0
        %3099 = vmatprep.subr.mxu0 0.0
        %3100 = vmatpush1.msra.mxu0 0.0
        %3101 = vmatprep.subr.mxu0 0.0
        %3102 = vmatpush1.msra.mxu0 0.0
        %3103 = vmatprep.subr.mxu0 0.0
        %3104 = vmatpush1.msra.mxu0 0.0
        %3105 = vmatprep.subr.mxu0 0.0
        %3106 = vmatpush1.msra.mxu0 0.0
        %3107 = vmatprep.subr.mxu0 0.0
        %3108 = vmatpush1.msra.mxu0 0.0
        %3109 = vmatprep.subr.mxu0 0.0
        %3110 = vmatpush1.msra.mxu0 0.0
        %3111 = vmatprep.subr.mxu0 0.0
        %3112 = vmatpush1.msra.mxu0 0.0
        %3113 = vmatprep.subr.mxu0 0.0
        %3114 = vmatpush1.msra.mxu0 0.0
        %3115 = vmatprep.subr.mxu0 0.0
        %3116 = vmatpush1.msra.mxu0 0.0
        %3117 = vmatprep.subr.mxu0 0.0
        %3118 = vmatpush1.msra.mxu0 0.0
        %3119 = vmatprep.subr.mxu0 0.0
        %3120 = vmatpush1.msra.mxu0 0.0
        %3121 = vmatprep.subr.mxu0 0.0
        %3122 = vmatpush1.msra.mxu0 0.0
        %3123 = vmatprep.subr.mxu0 0.0
        %3124 = vmatpush1.msra.mxu0 0.0
        %3125 = vmatprep.subr.mxu0 0.0
        %3126 = vmatpush1.msra.mxu0 0.0
        %3127 = vmatprep.subr.mxu0 0.0
        %3128 = vmatpush1.msra.mxu0 0.0
        %3129 = vmatprep.subr.mxu0 0.0
        %3130 = vmatpush1.msra.mxu0 0.0
        %3131 = vmatprep.subr.mxu0 0.0
        %3132 = vmatpush1.msra.mxu0 0.0
        %3133 = vmatprep.subr.mxu0 0.0
        %3134 = vmatpush1.msra.mxu0 0.0
        %3135 = vmatprep.subr.mxu0 0.0
        %3136 = vmatpush1.msra.mxu0 0.0
        %3137 = vmatprep.subr.mxu0 0.0
        %3138 = vmatpush1.msra.mxu0 0.0
        %3139 = vmatprep.subr.mxu0 0.0
        %3140 = vmatpush1.msra.mxu0 0.0
        %3141 = vmatprep.subr.mxu0 0.0
        %3142 = vmatpush1.msra.mxu0 0.0
        %3143 = vmatprep.subr.mxu0 0.0
        %3144 = vmatpush1.msra.mxu0 0.0
        %3145 = vmatprep.subr.mxu0 0.0
        %3146 = vmatpush1.msra.mxu0 0.0
        %3147 = vmatprep.mubr.f32.mxu0 0.0
        %3148 = vmatmul.mubr.f32.gmra.mrb[0].mxu0 %v3073
        %v3149 = vpop.f32.mrb[0].mxu0
        %v3150 = vadd.f32 0.0, %v3149
        %v3151 = vpop.f32.mrb[0].mxu0
        %3152 = vmatprep.mubr.f32.mxu0 0.0
        %3153 = vmatmul.mubr.f32.gmra.mrb[0].mxu0 %v3076
        %v3154 = vpop.f32.mrb[0].mxu0
        %v3155 = vadd.f32 0.0, %v3154
        %v3156 = vpop.f32.mrb[0].mxu0
        %3157 = vmatprep.mubr.f32.mxu0 0.0
        %3158 = vmatmul.mubr.f32.gmra.mrb[0].mxu0 %v3079
        %v3159 = vpop.f32.mrb[0].mxu0
        %v3160 = vadd.f32 0.0, %v3159
        %v3161 = vpop.f32.mrb[0].mxu0
        %3162 = vdwg.mxu0
        %3163 = vrot.lane.b32.xlu0 %v2452, 104
        %v3164 = vpop.permute.xlu0 %3163
        %3165 = vrot.lane.b32.xlu0 %v2453, 104
        %v3166 = vpop.permute.xlu0 %3165
        %3167 = vrot.lane.b32.xlu0 %v2454, 104
        %v3168 = vpop.permute.xlu0 %3167
        %3169 = vrot.lane.b32.xlu0 %v2439, 72
        %v3170 = vpop.permute.xlu0 %3169
        %3171 = vrot.lane.b32.xlu0 %v2444, 72
        %v3172 = vpop.permute.xlu0 %3171
        %3173 = vrot.lane.b32.xlu0 %v2449, 72
        %v3174 = vpop.permute.xlu0 %3173
        %v3175 = vsel %vm932, %v3164, 0
        %v3177 = vsel %vm932, %v3166, 0
        %v3179 = vsel %vm932, %v3168, 0
        %v3181 = vsel %vm932, %v3170, 0
        %v3183 = vsel %vm932, %v3172, 0
        %v3185 = vsel %vm932, %v3174, 0
        %3187 = vmatprep.subr.mxu0 0.0
        %3188 = vmatpush1.xpose.msra.mxu0 %v3181
        %3189 = vmatprep.subr.mxu0 0.0
        %3190 = vmatpush1.xpose.msra.mxu0 %v3183
        %3191 = vmatprep.subr.mxu0 0.0
        %3192 = vmatpush1.xpose.msra.mxu0 %v3185
        %3193 = vmatprep.subr.mxu0 0.0
        %3194 = vmatpush1.xpose.msra.mxu0 0.0
        %3195 = vmatprep.subr.mxu0 0.0
        %3196 = vmatpush1.xpose.msra.mxu0 0.0
        %3197 = vmatprep.subr.mxu0 0.0
        %3198 = vmatpush1.xpose.msra.mxu0 0.0
        %3199 = vmatprep.subr.mxu0 0.0
        %3200 = vmatpush1.xpose.msra.mxu0 0.0
        %3201 = vmatprep.subr.mxu0 0.0
        %3202 = vmatpush1.xpose.msra.mxu0 0.0
        %3203 = vmatprep.subr.mxu0 0.0
        %3204 = vmatpush1.xpose.msra.mxu0 0.0
        %3205 = vmatprep.subr.mxu0 0.0
        %3206 = vmatpush1.xpose.msra.mxu0 0.0
        %3207 = vmatprep.subr.mxu0 0.0
        %3208 = vmatpush1.xpose.msra.mxu0 0.0
        %3209 = vmatprep.subr.mxu0 0.0
        %3210 = vmatpush1.xpose.msra.mxu0 0.0
        %3211 = vmatprep.subr.mxu0 0.0
        %3212 = vmatpush1.xpose.msra.mxu0 0.0
        %3213 = vmatprep.subr.mxu0 0.0
        %3214 = vmatpush1.xpose.msra.mxu0 0.0
        %3215 = vmatprep.subr.mxu0 0.0
        %3216 = vmatpush1.xpose.msra.mxu0 0.0
        %3217 = vmatprep.subr.mxu0 0.0
        %3218 = vmatpush1.xpose.msra.mxu0 0.0
        %3219 = vmatprep.subr.mxu0 0.0
        %3220 = vmatpush1.xpose.msra.mxu0 0.0
        %3221 = vmatprep.subr.mxu0 0.0
        %3222 = vmatpush1.xpose.msra.mxu0 0.0
        %3223 = vmatprep.subr.mxu0 0.0
        %3224 = vmatpush1.xpose.msra.mxu0 0.0
        %3225 = vmatprep.subr.mxu0 0.0
        %3226 = vmatpush1.xpose.msra.mxu0 0.0
        %3227 = vmatprep.subr.mxu0 0.0
        %3228 = vmatpush1.xpose.msra.mxu0 0.0
        %3229 = vmatprep.subr.mxu0 0.0
        %3230 = vmatpush1.xpose.msra.mxu0 0.0
        %3231 = vmatprep.subr.mxu0 0.0
        %3232 = vmatpush1.xpose.msra.mxu0 0.0
        %3233 = vmatprep.subr.mxu0 0.0
        %3234 = vmatpush1.xpose.msra.mxu0 0.0
        %3235 = vmatprep.subr.mxu0 0.0
        %3236 = vmatpush1.xpose.msra.mxu0 0.0
        %3237 = vmatprep.subr.mxu0 0.0
        %3238 = vmatpush1.xpose.msra.mxu0 0.0
        %3239 = vmatprep.subr.mxu0 0.0
        %3240 = vmatpush1.xpose.msra.mxu0 0.0
        %3241 = vmatprep.subr.mxu0 0.0
        %3242 = vmatpush1.xpose.msra.mxu0 0.0
        %3243 = vmatprep.subr.mxu0 0.0
        %3244 = vmatpush1.xpose.msra.mxu0 0.0
        %3245 = vmatprep.subr.mxu0 0.0
        %3246 = vmatpush1.xpose.msra.mxu0 0.0
        %3247 = vmatprep.subr.mxu0 0.0
        %3248 = vmatpush1.xpose.msra.mxu0 0.0
        %3249 = vmatprep.subr.mxu0 0.0
        %3250 = vmatpush1.xpose.msra.mxu0 0.0
        %3251 = vmatprep.mubr.f32.mxu0 0.0
        %3252 = vmatmul.mubr.f32.gmra.mrb[0].mxu0 %v3175
        %v3253 = vpop.f32.mrb[0].mxu0
        %v3254 = vadd.f32 0.0, %v3253
        %v3255 = vpop.f32.mrb[0].mxu0
        %3256 = vmatprep.mubr.f32.mxu0 0.0
        %3257 = vmatmul.mubr.f32.gmra.mrb[0].mxu0 %v3177
        %v3258 = vpop.f32.mrb[0].mxu0
        %v3259 = vadd.f32 0.0, %v3258
        %v3260 = vpop.f32.mrb[0].mxu0
        %3261 = vmatprep.mubr.f32.mxu0 0.0
        %3262 = vmatmul.mubr.f32.gmra.mrb[0].mxu0 %v3179
        %v3263 = vpop.f32.mrb[0].mxu0
        %v3264 = vadd.f32 0.0, %v3263
        %v3265 = vpop.f32.mrb[0].mxu0
        %3266 = vdwg.mxu0
        %v3267 = vsel %vm1028, %v3254, -inf
        %3268 = vmax.xlane.f32.xlu0 %v3267
        %v3269 = vpop.xlane.xlu0 %3268
        %v3270 = vsel %vm1028, %v3259, -inf
        %3271 = vmax.xlane.f32.xlu0 %v3270
        %v3272 = vpop.xlane.xlu0 %3271
        %v3273 = vsel %vm1035, %v3264, -inf
        %3274 = vmax.xlane.f32.xlu0 %v3273
        %v3275 = vpop.xlane.xlu0 %3274
        %v3276 = vsub.f32 %v3254, %v3269
        %v3277 = vsub.f32 %v3259, %v3272
        %v3278 = vsub.f32 %v3264, %v3275
        %v3279 = vmul.f32 %v3276, 1.442695
        %v3280 = vpow.pop %v3279
        %v3281 = vmul.f32 %v3277, 1.442695
        %v3282 = vpow.pop %v3281
        %v3283 = vmul.f32 %v3278, 1.442695
        %v3284 = vpow.pop %v3283
        %v3285 = vsel %vm1028, %v3280, 0.0
        %3286 = vadd.xlane.f32.xlu0 %v3285
        %v3287 = vpop.xlane.xlu0 %3286
        %v3288 = vsel %vm1028, %v3282, 0.0
        %3289 = vadd.xlane.f32.xlu0 %v3288
        %v3290 = vpop.xlane.xlu0 %3289
        %v3291 = vsel %vm1035, %v3284, 0.0
        %3292 = vadd.xlane.f32.xlu0 %v3291
        %v3293 = vpop.xlane.xlu0 %3292
        %v3294 = vrcp.pop %v3287
        %v3295 = vrcp.pop %v3290
        %v3296 = vrcp.pop %v3293
        %v3297 = vmul.f32 %v3280, %v3294
        %v3298 = vmul.f32 %v3282, %v3295
        %v3299 = vmul.f32 %v3284, %v3296
        %3300 = vrot.lane.b32.xlu0 %v2439, 40
        %v3301 = vpop.permute.xlu0 %3300
        %3302 = vrot.lane.b32.xlu0 %v2444, 40
        %v3303 = vpop.permute.xlu0 %3302
        %3304 = vrot.lane.b32.xlu0 %v2449, 40
        %v3305 = vpop.permute.xlu0 %3304
        %v3309 = vsel %vm1028, %v3297, 0
        %v3312 = vsel %vm1028, %v3298, 0
        %v3315 = vsel %vm1028, %v3299, 0
        %v3317 = vsel %vm1080, %v3305, 0
        %3319 = vmatprep.subr.mxu0 0.0
        %3320 = vmatpush1.msra.mxu0 %v3301
        %3321 = vmatprep.subr.mxu0 0.0
        %3322 = vmatpush1.msra.mxu0 %v3303
        %3323 = vmatprep.subr.mxu0 0.0
        %3324 = vmatpush1.msra.mxu0 %v3317
        %3325 = vmatprep.subr.mxu0 0.0
        %3326 = vmatpush1.msra.mxu0 0.0
        %3327 = vmatprep.subr.mxu0 0.0
        %3328 = vmatpush1.msra.mxu0 0.0
        %3329 = vmatprep.subr.mxu0 0.0
        %3330 = vmatpush1.msra.mxu0 0.0
        %3331 = vmatprep.subr.mxu0 0.0
        %3332 = vmatpush1.msra.mxu0 0.0
        %3333 = vmatprep.subr.mxu0 0.0
        %3334 = vmatpush1.msra.mxu0 0.0
        %3335 = vmatprep.subr.mxu0 0.0
        %3336 = vmatpush1.msra.mxu0 0.0
        %3337 = vmatprep.subr.mxu0 0.0
        %3338 = vmatpush1.msra.mxu0 0.0
        %3339 = vmatprep.subr.mxu0 0.0
        %3340 = vmatpush1.msra.mxu0 0.0
        %3341 = vmatprep.subr.mxu0 0.0
        %3342 = vmatpush1.msra.mxu0 0.0
        %3343 = vmatprep.subr.mxu0 0.0
        %3344 = vmatpush1.msra.mxu0 0.0
        %3345 = vmatprep.subr.mxu0 0.0
        %3346 = vmatpush1.msra.mxu0 0.0
        %3347 = vmatprep.subr.mxu0 0.0
        %3348 = vmatpush1.msra.mxu0 0.0
        %3349 = vmatprep.subr.mxu0 0.0
        %3350 = vmatpush1.msra.mxu0 0.0
        %3351 = vmatprep.subr.mxu0 0.0
        %3352 = vmatpush1.msra.mxu0 0.0
        %3353 = vmatprep.subr.mxu0 0.0
        %3354 = vmatpush1.msra.mxu0 0.0
        %3355 = vmatprep.subr.mxu0 0.0
        %3356 = vmatpush1.msra.mxu0 0.0
        %3357 = vmatprep.subr.mxu0 0.0
        %3358 = vmatpush1.msra.mxu0 0.0
        %3359 = vmatprep.subr.mxu0 0.0
        %3360 = vmatpush1.msra.mxu0 0.0
        %3361 = vmatprep.subr.mxu0 0.0
        %3362 = vmatpush1.msra.mxu0 0.0
        %3363 = vmatprep.subr.mxu0 0.0
        %3364 = vmatpush1.msra.mxu0 0.0
        %3365 = vmatprep.subr.mxu0 0.0
        %3366 = vmatpush1.msra.mxu0 0.0
        %3367 = vmatprep.subr.mxu0 0.0
        %3368 = vmatpush1.msra.mxu0 0.0
        %3369 = vmatprep.subr.mxu0 0.0
        %3370 = vmatpush1.msra.mxu0 0.0
        %3371 = vmatprep.subr.mxu0 0.0
        %3372 = vmatpush1.msra.mxu0 0.0
        %3373 = vmatprep.subr.mxu0 0.0
        %3374 = vmatpush1.msra.mxu0 0.0
        %3375 = vmatprep.subr.mxu0 0.0
        %3376 = vmatpush1.msra.mxu0 0.0
        %3377 = vmatprep.subr.mxu0 0.0
        %3378 = vmatpush1.msra.mxu0 0.0
        %3379 = vmatprep.subr.mxu0 0.0
        %3380 = vmatpush1.msra.mxu0 0.0
        %3381 = vmatprep.subr.mxu0 0.0
        %3382 = vmatpush1.msra.mxu0 0.0
        %3383 = vmatprep.mubr.f32.mxu0 0.0
        %3384 = vmatmul.mubr.f32.gmra.mrb[0].mxu0 %v3309
        %v3385 = vpop.f32.mrb[0].mxu0
        %v3386 = vadd.f32 0.0, %v3385
        %v3387 = vpop.f32.mrb[0].mxu0
        %3388 = vmatprep.mubr.f32.mxu0 0.0
        %3389 = vmatmul.mubr.f32.gmra.mrb[0].mxu0 %v3312
        %v3390 = vpop.f32.mrb[0].mxu0
        %v3391 = vadd.f32 0.0, %v3390
        %v3392 = vpop.f32.mrb[0].mxu0
        %3393 = vmatprep.mubr.f32.mxu0 0.0
        %3394 = vmatmul.mubr.f32.gmra.mrb[0].mxu0 %v3315
        %v3395 = vpop.f32.mrb[0].mxu0
        %v3396 = vadd.f32 0.0, %v3395
        %v3397 = vpop.f32.mrb[0].mxu0
        %3398 = vdwg.mxu0
        %3402 = vrot.lane.b32.xlu0 %v2914, 8
        %v3403 = vpop.permute.xlu0 %3402
        %3404 = vrot.lane.b32.xlu0 %v2919, 8
        %v3405 = vpop.permute.xlu0 %3404
        %3406 = vrot.lane.b32.xlu0 %v2924, 8
        %v3407 = vpop.permute.xlu0 %3406
        %3414 = vrot.lane.b32.xlu0 %v3150, 16
        %v3415 = vpop.permute.xlu0 %3414
        %3416 = vrot.lane.b32.xlu0 %v3155, 16
        %v3417 = vpop.permute.xlu0 %3416
        %3418 = vrot.lane.b32.xlu0 %v3160, 16
        %v3419 = vpop.permute.xlu0 %3418
        %3426 = vrot.lane.b32.xlu0 %v3386, 24
        %v3427 = vpop.permute.xlu0 %3426
        %3428 = vrot.lane.b32.xlu0 %v3391, 24
        %v3429 = vpop.permute.xlu0 %3428
        %3430 = vrot.lane.b32.xlu0 %v3396, 24
        %v3431 = vpop.permute.xlu0 %3430
        %v3435 = vsel %vm932, %v2678, %v3403
        %v3436 = vsel %vm932, %v2683, %v3405
        %v3437 = vsel %vm932, %v2688, %v3407
        %v3438 = vsel %vm1910, %v3435, %v3415
        %v3439 = vsel %vm1910, %v3436, %v3417
        %v3440 = vsel %vm1910, %v3437, %v3419
        %v3441 = vsel %vm1914, %v3438, %v3427
        %v3442 = vsel %vm1914, %v3439, %v3429
        %v3443 = vsel %vm1914, %v3440, %v3431
        %s3444 = scalar_lea.vmem %s7, 32
        %v3445 = vld [vmem:[%s3444] sm:$0xff]
        %v3446 = vld [vmem:[%s3444 + $0x8] sm:$0xff]
        %v3447 = vld [vmem:[%s3444 + $0x10] sm:$0xff]
        %v3448 = vld [vmem:[%s3444 + $0x18] sm:$0xff]
        %s3449 = scalar_lea.vmem %s8, 1
        %v3450 = vld [vmem:[%s3449] sm:$0x1]
        %v3452 = vlaneseq
        %v3453 = vshrl.u32 %v3452, 7
        %v3454 = vsub.s32 0, %v3453
        %v3455 = vrot.slane %v3450, %v3454
        %v3458 = vsel %vm760, %v3441, 0
        %v3461 = vsel %vm760, %v3442, 0
        %v3464 = vsel %vm760, %v3443, 0
        %3466 = vmatprep.subr.mxu0 0.0
        %3467 = vmatpush1.msra.mxu0 %v3445
        %3468 = vmatprep.subr.mxu0 0.0
        %3469 = vmatpush1.msra.mxu0 %v3446
        %3470 = vmatprep.subr.mxu0 0.0
        %3471 = vmatpush1.msra.mxu0 %v3447
        %3472 = vmatprep.subr.mxu0 0.0
        %3473 = vmatpush1.msra.mxu0 %v3448
        %3474 = vmatprep.subr.mxu0 0.0
        %3475 = vmatpush1.msra.mxu0 0.0
        %3476 = vmatprep.subr.mxu0 0.0
        %3477 = vmatpush1.msra.mxu0 0.0
        %3478 = vmatprep.subr.mxu0 0.0
        %3479 = vmatpush1.msra.mxu0 0.0
        %3480 = vmatprep.subr.mxu0 0.0
        %3481 = vmatpush1.msra.mxu0 0.0
        %3482 = vmatprep.subr.mxu0 0.0
        %3483 = vmatpush1.msra.mxu0 0.0
        %3484 = vmatprep.subr.mxu0 0.0
        %3485 = vmatpush1.msra.mxu0 0.0
        %3486 = vmatprep.subr.mxu0 0.0
        %3487 = vmatpush1.msra.mxu0 0.0
        %3488 = vmatprep.subr.mxu0 0.0
        %3489 = vmatpush1.msra.mxu0 0.0
        %3490 = vmatprep.subr.mxu0 0.0
        %3491 = vmatpush1.msra.mxu0 0.0
        %3492 = vmatprep.subr.mxu0 0.0
        %3493 = vmatpush1.msra.mxu0 0.0
        %3494 = vmatprep.subr.mxu0 0.0
        %3495 = vmatpush1.msra.mxu0 0.0
        %3496 = vmatprep.subr.mxu0 0.0
        %3497 = vmatpush1.msra.mxu0 0.0
        %3498 = vmatprep.subr.mxu0 0.0
        %3499 = vmatpush1.msra.mxu0 0.0
        %3500 = vmatprep.subr.mxu0 0.0
        %3501 = vmatpush1.msra.mxu0 0.0
        %3502 = vmatprep.subr.mxu0 0.0
        %3503 = vmatpush1.msra.mxu0 0.0
        %3504 = vmatprep.subr.mxu0 0.0
        %3505 = vmatpush1.msra.mxu0 0.0
        %3506 = vmatprep.subr.mxu0 0.0
        %3507 = vmatpush1.msra.mxu0 0.0
        %3508 = vmatprep.subr.mxu0 0.0
        %3509 = vmatpush1.msra.mxu0 0.0
        %3510 = vmatprep.subr.mxu0 0.0
        %3511 = vmatpush1.msra.mxu0 0.0
        %3512 = vmatprep.subr.mxu0 0.0
        %3513 = vmatpush1.msra.mxu0 0.0
        %3514 = vmatprep.subr.mxu0 0.0
        %3515 = vmatpush1.msra.mxu0 0.0
        %3516 = vmatprep.subr.mxu0 0.0
        %3517 = vmatpush1.msra.mxu0 0.0
        %3518 = vmatprep.subr.mxu0 0.0
        %3519 = vmatpush1.msra.mxu0 0.0
        %3520 = vmatprep.subr.mxu0 0.0
        %3521 = vmatpush1.msra.mxu0 0.0
        %3522 = vmatprep.subr.mxu0 0.0
        %3523 = vmatpush1.msra.mxu0 0.0
        %3524 = vmatprep.subr.mxu0 0.0
        %3525 = vmatpush1.msra.mxu0 0.0
        %3526 = vmatprep.subr.mxu0 0.0
        %3527 = vmatpush1.msra.mxu0 0.0
        %3528 = vmatprep.subr.mxu0 0.0
        %3529 = vmatpush1.msra.mxu0 0.0
        %3530 = vmatprep.mubr.f32.mxu0 0.0
        %3531 = vmatmul.mubr.f32.gmra.mrb[0].mxu0 %v3458
        %v3532 = vpop.f32.mrb[0].mxu0
        %v3533 = vadd.f32 %v3455, %v3532
        %v3534 = vpop.f32.mrb[0].mxu0
        %3535 = vmatprep.mubr.f32.mxu0 0.0
        %3536 = vmatmul.mubr.f32.gmra.mrb[0].mxu0 %v3461
        %v3537 = vpop.f32.mrb[0].mxu0
        %v3538 = vadd.f32 %v3455, %v3537
        %v3539 = vpop.f32.mrb[0].mxu0
        %3540 = vmatprep.mubr.f32.mxu0 0.0
        %3541 = vmatmul.mubr.f32.gmra.mrb[0].mxu0 %v3464
        %v3542 = vpop.f32.mrb[0].mxu0
        %v3543 = vadd.f32 %v3455, %v3542
        %v3544 = vpop.f32.mrb[0].mxu0
        %3545 = vdwg.mxu0
        %v3546 = vadd.f32 %v2286, %v3533
        %v3547 = vadd.f32 %v2287, %v3538
        %v3548 = vadd.f32 %v2288, %v3543
        %s3549 = scalar_lea.vmem %s9, 1
        %v3550 = vld [vmem:[%s3549] sm:$0x1]
        %s3551 = scalar_lea.vmem %s10, 1
        %v3552 = vld [vmem:[%s3551] sm:$0x1]
        %v3553 = vsel %vm760, %v3546, 0.0
        %3554 = vadd.xlane.f32.xlu0 %v3553
        %v3555 = vpop.xlane.xlu0 %3554
        %v3556 = vsel %vm760, %v3547, 0.0
        %3557 = vadd.xlane.f32.xlu0 %v3556
        %v3558 = vpop.xlane.xlu0 %3557
        %v3559 = vsel %vm767, %v3548, 0.0
        %3560 = vadd.xlane.f32.xlu0 %v3559
        %v3561 = vpop.xlane.xlu0 %3560
        %v3562 = vmul.f32 %v3555, %v771
        %v3563 = vmul.f32 %v3558, %v771
        %v3564 = vmul.f32 %v3561, %v771
        %v3565 = vsub.f32 %v3546, %v3562
        %v3566 = vsub.f32 %v3547, %v3563
        %v3567 = vsub.f32 %v3548, %v3564
        %v3568 = vmul.f32 %v3565, %v3565
        %v3569 = vmul.f32 %v3566, %v3566
        %v3570 = vmul.f32 %v3567, %v3567
        %v3571 = vsel %vm760, %v3568, 0.0
        %3572 = vadd.xlane.f32.xlu0 %v3571
        %v3573 = vpop.xlane.xlu0 %3572
        %v3574 = vsel %vm760, %v3569, 0.0
        %3575 = vadd.xlane.f32.xlu0 %v3574
        %v3576 = vpop.xlane.xlu0 %3575
        %v3577 = vsel %vm767, %v3570, 0.0
        %3578 = vadd.xlane.f32.xlu0 %v3577
        %v3579 = vpop.xlane.xlu0 %3578
        %v3580 = vmul.f32 %v3573, %v771
        %v3581 = vmul.f32 %v3576, %v771
        %v3582 = vmul.f32 %v3579, %v771
        %v3583 = vadd.f32 %v3580, 1e-05
        %v3584 = vadd.f32 %v3581, 1e-05
        %v3585 = vadd.f32 %v3582, 1e-05
        %v3586 = vrsqrt.pop %v3583
        %v3587 = vrsqrt.pop %v3584
        %v3588 = vrsqrt.pop %v3585
        %v3589 = vmul.f32 %v3565, %v3586
        %v3590 = vmul.f32 %v3566, %v3587
        %v3591 = vmul.f32 %v3567, %v3588
        %v3593 = vlaneseq
        %v3594 = vshrl.u32 %v3593, 7
        %v3595 = vsub.s32 0, %v3594
        %v3596 = vrot.slane %v3550, %v3595
        %v3598 = vmul.f32 %v3589, %v3596
        %v3599 = vmul.f32 %v3590, %v3596
        %v3600 = vmul.f32 %v3591, %v3596
        %v3602 = vlaneseq
        %v3603 = vshrl.u32 %v3602, 7
        %v3604 = vsub.s32 0, %v3603
        %v3605 = vrot.slane %v3552, %v3604
        %v3607 = vadd.f32 %v3598, %v3605
        %v3608 = vadd.f32 %v3599, %v3605
        %v3609 = vadd.f32 %v3600, %v3605
        %s3610 = scalar_lea.vmem %s11, 32
        %v3611 = vld [vmem:[%s3610] sm:$0xff]
        %v3612 = vld [vmem:[%s3610 + $0x8] sm:$0xff]
        %v3613 = vld [vmem:[%s3610 + $0x10] sm:$0xff]
        %v3614 = vld [vmem:[%s3610 + $0x18] sm:$0xff]
        %s3615 = scalar_lea.vmem %s12, 1
        %v3616 = vld [vmem:[%s3615] sm:$0x1]
        %v3618 = vlaneseq
        %v3619 = vshrl.u32 %v3618, 7
        %v3620 = vsub.s32 0, %v3619
        %v3621 = vrot.slane %v3616, %v3620
        %v3624 = vsel %vm760, %v3607, 0
        %v3627 = vsel %vm760, %v3608, 0
        %v3630 = vsel %vm760, %v3609, 0
        %3632 = vmatprep.subr.mxu0 0.0
        %3633 = vmatpush1.msra.mxu0 %v3611
        %3634 = vmatprep.subr.mxu0 0.0
        %3635 = vmatpush1.msra.mxu0 %v3612
        %3636 = vmatprep.subr.mxu0 0.0
        %3637 = vmatpush1.msra.mxu0 %v3613
        %3638 = vmatprep.subr.mxu0 0.0
        %3639 = vmatpush1.msra.mxu0 %v3614
        %3640 = vmatprep.subr.mxu0 0.0
        %3641 = vmatpush1.msra.mxu0 0.0
        %3642 = vmatprep.subr.mxu0 0.0
        %3643 = vmatpush1.msra.mxu0 0.0
        %3644 = vmatprep.subr.mxu0 0.0
        %3645 = vmatpush1.msra.mxu0 0.0
        %3646 = vmatprep.subr.mxu0 0.0
        %3647 = vmatpush1.msra.mxu0 0.0
        %3648 = vmatprep.subr.mxu0 0.0
        %3649 = vmatpush1.msra.mxu0 0.0
        %3650 = vmatprep.subr.mxu0 0.0
        %3651 = vmatpush1.msra.mxu0 0.0
        %3652 = vmatprep.subr.mxu0 0.0
        %3653 = vmatpush1.msra.mxu0 0.0
        %3654 = vmatprep.subr.mxu0 0.0
        %3655 = vmatpush1.msra.mxu0 0.0
        %3656 = vmatprep.subr.mxu0 0.0
        %3657 = vmatpush1.msra.mxu0 0.0
        %3658 = vmatprep.subr.mxu0 0.0
        %3659 = vmatpush1.msra.mxu0 0.0
        %3660 = vmatprep.subr.mxu0 0.0
        %3661 = vmatpush1.msra.mxu0 0.0
        %3662 = vmatprep.subr.mxu0 0.0
        %3663 = vmatpush1.msra.mxu0 0.0
        %3664 = vmatprep.subr.mxu0 0.0
        %3665 = vmatpush1.msra.mxu0 0.0
        %3666 = vmatprep.subr.mxu0 0.0
        %3667 = vmatpush1.msra.mxu0 0.0
        %3668 = vmatprep.subr.mxu0 0.0
        %3669 = vmatpush1.msra.mxu0 0.0
        %3670 = vmatprep.subr.mxu0 0.0
        %3671 = vmatpush1.msra.mxu0 0.0
        %3672 = vmatprep.subr.mxu0 0.0
        %3673 = vmatpush1.msra.mxu0 0.0
        %3674 = vmatprep.subr.mxu0 0.0
        %3675 = vmatpush1.msra.mxu0 0.0
        %3676 = vmatprep.subr.mxu0 0.0
        %3677 = vmatpush1.msra.mxu0 0.0
        %3678 = vmatprep.subr.mxu0 0.0
        %3679 = vmatpush1.msra.mxu0 0.0
        %3680 = vmatprep.subr.mxu0 0.0
        %3681 = vmatpush1.msra.mxu0 0.0
        %3682 = vmatprep.subr.mxu0 0.0
        %3683 = vmatpush1.msra.mxu0 0.0
        %3684 = vmatprep.subr.mxu0 0.0
        %3685 = vmatpush1.msra.mxu0 0.0
        %3686 = vmatprep.subr.mxu0 0.0
        %3687 = vmatpush1.msra.mxu0 0.0
        %3688 = vmatprep.subr.mxu0 0.0
        %3689 = vmatpush1.msra.mxu0 0.0
        %3690 = vmatprep.subr.mxu0 0.0
        %3691 = vmatpush1.msra.mxu0 0.0
        %3692 = vmatprep.subr.mxu0 0.0
        %3693 = vmatpush1.msra.mxu0 0.0
        %3694 = vmatprep.subr.mxu0 0.0
        %3695 = vmatpush1.msra.mxu0 0.0
        %3696 = vmatprep.mubr.f32.mxu0 0.0
        %3697 = vmatmul.mubr.f32.gmra.mrb[0].mxu0 %v3624
        %v3698 = vpop.f32.mrb[0].mxu0
        %v3699 = vadd.f32 %v3621, %v3698
        %v3700 = vpop.f32.mrb[0].mxu0
        %3701 = vmatprep.mubr.f32.mxu0 0.0
        %3702 = vmatmul.mubr.f32.gmra.mrb[0].mxu0 %v3627
        %v3703 = vpop.f32.mrb[0].mxu0
        %v3704 = vadd.f32 %v3621, %v3703
        %v3705 = vpop.f32.mrb[0].mxu0
        %3706 = vmatprep.mubr.f32.mxu0 0.0
        %3707 = vmatmul.mubr.f32.gmra.mrb[0].mxu0 %v3630
        %v3708 = vpop.f32.mrb[0].mxu0
        %v3709 = vadd.f32 %v3621, %v3708
        %v3710 = vpop.f32.mrb[0].mxu0
        %3711 = vdwg.mxu0
        %v3712 = vmax.f32 %v3699, 0.0
        %v3713 = vmax.f32 %v3704, 0.0
        %v3714 = vmax.f32 %v3709, 0.0
        %s3715 = scalar_lea.vmem %s13, 128
        %v3716 = vld [vmem:[%s3715] sm:$0xff]
        %v3717 = vld [vmem:[%s3715 + $0x8] sm:$0xff]
        %v3718 = vld [vmem:[%s3715 + $0x10] sm:$0xff]
        %v3719 = vld [vmem:[%s3715 + $0x18] sm:$0xff]
        %v3720 = vld [vmem:[%s3715 + $0x20] sm:$0xff]
        %v3721 = vld [vmem:[%s3715 + $0x28] sm:$0xff]
        %v3722 = vld [vmem:[%s3715 + $0x30] sm:$0xff]
        %v3723 = vld [vmem:[%s3715 + $0x38] sm:$0xff]
        %v3724 = vld [vmem:[%s3715 + $0x40] sm:$0xff]
        %v3725 = vld [vmem:[%s3715 + $0x48] sm:$0xff]
        %v3726 = vld [vmem:[%s3715 + $0x50] sm:$0xff]
        %v3727 = vld [vmem:[%s3715 + $0x58] sm:$0xff]
        %v3728 = vld [vmem:[%s3715 + $0x60] sm:$0xff]
        %v3729 = vld [vmem:[%s3715 + $0x68] sm:$0xff]
        %v3730 = vld [vmem:[%s3715 + $0x70] sm:$0xff]
        %v3731 = vld [vmem:[%s3715 + $0x78] sm:$0xff]
        %s3732 = scalar_lea.vmem %s14, 1
        %v3733 = vld [vmem:[%s3732] sm:$0x1]
        %v3735 = vlaneseq
        %v3736 = vshrl.u32 %v3735, 7
        %v3737 = vsub.s32 0, %v3736
        %v3738 = vrot.slane %v3733, %v3737
        %3740 = vmatprep.subr.mxu0 0.0
        %3741 = vmatpush1.msra.mxu0 %v3716
        %3742 = vmatprep.subr.mxu0 0.0
        %3743 = vmatpush1.msra.mxu0 %v3717
        %3744 = vmatprep.subr.mxu0 0.0
        %3745 = vmatpush1.msra.mxu0 %v3718
        %3746 = vmatprep.subr.mxu0 0.0
        %3747 = vmatpush1.msra.mxu0 %v3719
        %3748 = vmatprep.subr.mxu0 0.0
        %3749 = vmatpush1.msra.mxu0 %v3720
        %3750 = vmatprep.subr.mxu0 0.0
        %3751 = vmatpush1.msra.mxu0 %v3721
        %3752 = vmatprep.subr.mxu0 0.0
        %3753 = vmatpush1.msra.mxu0 %v3722
        %3754 = vmatprep.subr.mxu0 0.0
        %3755 = vmatpush1.msra.mxu0 %v3723
        %3756 = vmatprep.subr.mxu0 0.0
        %3757 = vmatpush1.msra.mxu0 %v3724
        %3758 = vmatprep.subr.mxu0 0.0
        %3759 = vmatpush1.msra.mxu0 %v3725
        %3760 = vmatprep.subr.mxu0 0.0
        %3761 = vmatpush1.msra.mxu0 %v3726
        %3762 = vmatprep.subr.mxu0 0.0
        %3763 = vmatpush1.msra.mxu0 %v3727
        %3764 = vmatprep.subr.mxu0 0.0
        %3765 = vmatpush1.msra.mxu0 %v3728
        %3766 = vmatprep.subr.mxu0 0.0
        %3767 = vmatpush1.msra.mxu0 %v3729
        %3768 = vmatprep.subr.mxu0 0.0
        %3769 = vmatpush1.msra.mxu0 %v3730
        %3770 = vmatprep.subr.mxu0 0.0
        %3771 = vmatpush1.msra.mxu0 %v3731
        %3772 = vmatprep.subr.mxu0 0.0
        %3773 = vmatpush1.msra.mxu0 0.0
        %3774 = vmatprep.subr.mxu0 0.0
        %3775 = vmatpush1.msra.mxu0 0.0
        %3776 = vmatprep.subr.mxu0 0.0
        %3777 = vmatpush1.msra.mxu0 0.0
        %3778 = vmatprep.subr.mxu0 0.0
        %3779 = vmatpush1.msra.mxu0 0.0
        %3780 = vmatprep.subr.mxu0 0.0
        %3781 = vmatpush1.msra.mxu0 0.0
        %3782 = vmatprep.subr.mxu0 0.0
        %3783 = vmatpush1.msra.mxu0 0.0
        %3784 = vmatprep.subr.mxu0 0.0
        %3785 = vmatpush1.msra.mxu0 0.0
        %3786 = vmatprep.subr.mxu0 0.0
        %3787 = vmatpush1.msra.mxu0 0.0
        %3788 = vmatprep.subr.mxu0 0.0
        %3789 = vmatpush1.msra.mxu0 0.0
        %3790 = vmatprep.subr.mxu0 0.0
        %3791 = vmatpush1.msra.mxu0 0.0
        %3792 = vmatprep.subr.mxu0 0.0
        %3793 = vmatpush1.msra.mxu0 0.0
        %3794 = vmatprep.subr.mxu0 0.0
        %3795 = vmatpush1.msra.mxu0 0.0
        %3796 = vmatprep.subr.mxu0 0.0
        %3797 = vmatpush1.msra.mxu0 0.0
        %3798 = vmatprep.subr.mxu0 0.0
        %3799 = vmatpush1.msra.mxu0 0.0
        %3800 = vmatprep.subr.mxu0 0.0
        %3801 = vmatpush1.msra.mxu0 0.0
        %3802 = vmatprep.subr.mxu0 0.0
        %3803 = vmatpush1.msra.mxu0 0.0
        %3804 = vmatprep.mubr.f32.mxu0 0.0
        %3805 = vmatmul.mubr.f32.gmra.mrb[0].mxu0 %v3712
        %v3806 = vpop.f32.mrb[0].mxu0
        %v3807 = vadd.f32 %v3738, %v3806
        %v3808 = vpop.f32.mrb[0].mxu0
        %3809 = vmatprep.mubr.f32.mxu0 0.0
        %3810 = vmatmul.mubr.f32.gmra.mrb[0].mxu0 %v3713
        %v3811 = vpop.f32.mrb[0].mxu0
        %v3812 = vadd.f32 %v3738, %v3811
        %v3813 = vpop.f32.mrb[0].mxu0
        %3814 = vmatprep.mubr.f32.mxu0 0.0
        %3815 = vmatmul.mubr.f32.gmra.mrb[0].mxu0 %v3714
        %v3816 = vpop.f32.mrb[0].mxu0
        %v3817 = vadd.f32 %v3738, %v3816
        %v3818 = vpop.f32.mrb[0].mxu0
        %3819 = vdwg.mxu0
        %v3820 = vadd.f32 %v3546, %v3807
        %v3821 = vadd.f32 %v3547, %v3812
        %v3822 = vadd.f32 %v3548, %v3817
        %v3823 = vld [vmem:[%s15] sm:$0x1]
        %v3824 = vld [vmem:[%s16] sm:$0x1]
        %v3825 = vsel %vm760, %v3820, 0.0
        %3826 = vadd.xlane.f32.xlu0 %v3825
        %v3827 = vpop.xlane.xlu0 %3826
        %v3828 = vsel %vm760, %v3821, 0.0
        %3829 = vadd.xlane.f32.xlu0 %v3828
        %v3830 = vpop.xlane.xlu0 %3829
        %v3831 = vsel %vm767, %v3822, 0.0
        %3832 = vadd.xlane.f32.xlu0 %v3831
        %v3833 = vpop.xlane.xlu0 %3832
        %v3834 = vmul.f32 %v3827, %v771
        %v3835 = vmul.f32 %v3830, %v771
        %v3836 = vmul.f32 %v3833, %v771
        %v3837 = vsub.f32 %v3820, %v3834
        %v3838 = vsub.f32 %v3821, %v3835
        %v3839 = vsub.f32 %v3822, %v3836
        %v3840 = vmul.f32 %v3837, %v3837
        %v3841 = vmul.f32 %v3838, %v3838
        %v3842 = vmul.f32 %v3839, %v3839
        %v3843 = vsel %vm760, %v3840, 0.0
        %3844 = vadd.xlane.f32.xlu0 %v3843
        %v3845 = vpop.xlane.xlu0 %3844
        %v3846 = vsel %vm760, %v3841, 0.0
        %3847 = vadd.xlane.f32.xlu0 %v3846
        %v3848 = vpop.xlane.xlu0 %3847
        %v3849 = vsel %vm767, %v3842, 0.0
        %3850 = vadd.xlane.f32.xlu0 %v3849
        %v3851 = vpop.xlane.xlu0 %3850
        %v3852 = vmul.f32 %v3845, %v771
        %v3853 = vmul.f32 %v3848, %v771
        %v3854 = vmul.f32 %v3851, %v771
        %v3855 = vadd.f32 %v3852, 1e-05
        %v3856 = vadd.f32 %v3853, 1e-05
        %v3857 = vadd.f32 %v3854, 1e-05
        %v3858 = vrsqrt.pop %v3855
        %v3859 = vrsqrt.pop %v3856
        %v3860 = vrsqrt.pop %v3857
        %v3861 = vmul.f32 %v3837, %v3858
        %v3862 = vmul.f32 %v3838, %v3859
        %v3863 = vmul.f32 %v3839, %v3860
        %v3865 = vlaneseq
        %v3866 = vshrl.u32 %v3865, 7
        %v3867 = vsub.s32 0, %v3866
        %v3868 = vrot.slane %v3823, %v3867
        %v3870 = vmul.f32 %v3861, %v3868
        %v3871 = vmul.f32 %v3862, %v3868
        %v3872 = vmul.f32 %v3863, %v3868
        %v3874 = vlaneseq
        %v3875 = vshrl.u32 %v3874, 7
        %v3876 = vsub.s32 0, %v3875
        %v3877 = vrot.slane %v3824, %v3876
        %v3879 = vadd.f32 %v3870, %v3877
        %v3880 = vadd.f32 %v3871, %v3877
        %v3881 = vadd.f32 %v3872, %v3877
        %vm3885 = vcmask 1046528
        %v3886 = vrot.slane %v3879, 1
        %v3887 = vrot.slane %v3880, 1
        %v3888 = vsel %vm3885, %v3886, %v3887
        %v3889 = vrot.slane %v3881, 1
        %v3890 = vsel %vm3885, %v3887, %v3889
        %v3893 = vsel %vm760, %v3888, 0.0
        %v3894 = vsel %vm760, %v3890, 0.0
        %v3895 = vadd.f32 %v3893, %v3894
        %v3896 = vrot.slane %v3895, 4
        %v3897 = vadd.f32 %v3895, %v3896
        %v3898 = vrot.slane %v3897, 2
        %v3899 = vadd.f32 %v3897, %v3898
        %v3900 = vrot.slane %v3899, 1
        %v3901 = vadd.f32 %v3899, %v3900
        %v3902 = vmul.f32 %v3901, 0.0625
        %v3903 = vld [vmem:[%s17] sm:$0x1]
        %v3904 = vld [vmem:[%s18] sm:$0x1]
        %v3905 = vsel %vm760, %v3902, 0.0
        %3906 = vadd.xlane.f32.xlu0 %v3905
        %v3907 = vpop.xlane.xlu0 %3906
        %v3908 = vmul.f32 %v3907, %v771
        %v3909 = vsub.f32 %v3902, %v3908
        %v3910 = vmul.f32 %v3909, %v3909
        %v3911 = vsel %vm760, %v3910, 0.0
        %3912 = vadd.xlane.f32.xlu0 %v3911
        %v3913 = vpop.xlane.xlu0 %3912
        %v3914 = vmul.f32 %v3913, %v771
        %v3915 = vadd.f32 %v3914, 1e-05
        %v3916 = vrsqrt.pop %v3915
        %v3917 = vmul.f32 %v3909, %v3916
        %v3918 = vmul.f32 %v3917, %v3903
        %v3919 = vadd.f32 %v3918, %v3904
        %v3920 = vld [vmem:[%s19] sm:$0xff]
        %v3921 = vld [vmem:[%s19 + $0x8] sm:$0xff]
        %v3922 = vld [vmem:[%s19 + $0x10] sm:$0xff]
        %v3923 = vld [vmem:[%s19 + $0x18] sm:$0xff]
        %v3924 = vld [vmem:[%s20] sm:$0x1]
        %v3926 = vsel %vm760, %v3919, 0
        %3928 = vmatprep.subr.mxu0 0.0
        %3929 = vmatpush1.msra.mxu0 %v3920
        %3930 = vmatprep.subr.mxu0 0.0
        %3931 = vmatpush1.msra.mxu0 %v3921
        %3932 = vmatprep.subr.mxu0 0.0
        %3933 = vmatpush1.msra.mxu0 %v3922
        %3934 = vmatprep.subr.mxu0 0.0
        %3935 = vmatpush1.msra.mxu0 %v3923
        %3936 = vmatprep.subr.mxu0 0.0
        %3937 = vmatpush1.msra.mxu0 0.0
        %3938 = vmatprep.subr.mxu0 0.0
        %3939 = vmatpush1.msra.mxu0 0.0
        %3940 = vmatprep.subr.mxu0 0.0
        %3941 = vmatpush1.msra.mxu0 0.0
        %3942 = vmatprep.subr.mxu0 0.0
        %3943 = vmatpush1.msra.mxu0 0.0
        %3944 = vmatprep.subr.mxu0 0.0
        %3945 = vmatpush1.msra.mxu0 0.0
        %3946 = vmatprep.subr.mxu0 0.0
        %3947 = vmatpush1.msra.mxu0 0.0
        %3948 = vmatprep.subr.mxu0 0.0
        %3949 = vmatpush1.msra.mxu0 0.0
        %3950 = vmatprep.subr.mxu0 0.0
        %3951 = vmatpush1.msra.mxu0 0.0
        %3952 = vmatprep.subr.mxu0 0.0
        %3953 = vmatpush1.msra.mxu0 0.0
        %3954 = vmatprep.subr.mxu0 0.0
        %3955 = vmatpush1.msra.mxu0 0.0
        %3956 = vmatprep.subr.mxu0 0.0
        %3957 = vmatpush1.msra.mxu0 0.0
        %3958 = vmatprep.subr.mxu0 0.0
        %3959 = vmatpush1.msra.mxu0 0.0
        %3960 = vmatprep.subr.mxu0 0.0
        %3961 = vmatpush1.msra.mxu0 0.0
        %3962 = vmatprep.subr.mxu0 0.0
        %3963 = vmatpush1.msra.mxu0 0.0
        %3964 = vmatprep.subr.mxu0 0.0
        %3965 = vmatpush1.msra.mxu0 0.0
        %3966 = vmatprep.subr.mxu0 0.0
        %3967 = vmatpush1.msra.mxu0 0.0
        %3968 = vmatprep.subr.mxu0 0.0
        %3969 = vmatpush1.msra.mxu0 0.0
        %3970 = vmatprep.subr.mxu0 0.0
        %3971 = vmatpush1.msra.mxu0 0.0
        %3972 = vmatprep.subr.mxu0 0.0
        %3973 = vmatpush1.msra.mxu0 0.0
        %3974 = vmatprep.subr.mxu0 0.0
        %3975 = vmatpush1.msra.mxu0 0.0
        %3976 = vmatprep.subr.mxu0 0.0
        %3977 = vmatpush1.msra.mxu0 0.0
        %3978 = vmatprep.subr.mxu0 0.0
        %3979 = vmatpush1.msra.mxu0 0.0
        %3980 = vmatprep.subr.mxu0 0.0
        %3981 = vmatpush1.msra.mxu0 0.0
        %3982 = vmatprep.subr.mxu0 0.0
        %3983 = vmatpush1.msra.mxu0 0.0
        %3984 = vmatprep.subr.mxu0 0.0
        %3985 = vmatpush1.msra.mxu0 0.0
        %3986 = vmatprep.subr.mxu0 0.0
        %3987 = vmatpush1.msra.mxu0 0.0
        %3988 = vmatprep.subr.mxu0 0.0
        %3989 = vmatpush1.msra.mxu0 0.0
        %3990 = vmatprep.subr.mxu0 0.0
        %3991 = vmatpush1.msra.mxu0 0.0
        %3992 = vmatprep.mubr.f32.mxu0 0.0
        %3993 = vmatmul.mubr.f32.gmra.mrb[0].mxu0 %v3926
        %v3994 = vpop.f32.mrb[0].mxu0
        %v3995 = vadd.f32 %v3924, %v3994
        %v3996 = vpop.f32.mrb[0].mxu0
        %3997 = vdwg.mxu0
        %v3998 = vlaneseq
        %v3999 = vshrl.u32 %v3998, 7
        %v4000 = vsub.s32 0, %v3999
        %v4001 = vrot.slane %v3995, %v4000
        %4002 = vst [vmem:[%s649] sm:$0xff] %v4001
        %s4003 = sand.u32 %s489, 1
        %s4004 = scalar_lea.sflag [#allocation3], %s4003
        %s4005 = sand.u32 %s489, 1
        %s4006 = smul.addr %s4005, 8
        %s4007 = scalar_lea.vmem [#allocation2], %s4006
        // Predicated region
        $region105: #{tpu_custom_call.1} parent=103 // pred_check
          %p4008 = pneg %p499
        $region106: #{tpu_custom_call.1} parent=103 // pred_check_branch
          %4010 = sbr.rel (%p4008) target = $region108
        $region107: #{tpu_custom_call.1} parent=103 // pred_region
          %s4012 = ssub.s32 128, 128
          %4013 = vsyncadd %s4004, %s4012
          %s4014 = smul.addr %s35, 128
          %s4015 = scalar_lea.hbm %s21, %s4014
          %s4017 = sshll.u32 %s4007, 4
          %s4018 = int_to_ptr.vmem [resolvable:$true] %s4017
          %4020 = dma.vmem_to_hbm [thread:$0]  %s4018, 128, %s4015, %s4004
        $region108: #{tpu_custom_call.1} parent=103 // pred_fallthru
          _
      $region104: #{tpu_custom_call.1} parent=5 // pred_fallthru
        _
      %p4021 = scmp.le.s32.totalorder 2, %s30
      // Predicated region
      $region109: #{tpu_custom_call.1} parent=5 // pred_check
        %p4022 = pneg %p4021
      $region110: #{tpu_custom_call.1} parent=5 // pred_check_branch
        %4024 = sbr.rel (%p4022) target = $region112
      $region111: #{tpu_custom_call.1} parent=5 // pred_region
        %s4025 = ssub.s32 %s30, 2
        // Predicated region
        $region113: #{tpu_custom_call.1} parent=111 // pred_check
          %p4026 = pneg %p505
        $region114: #{tpu_custom_call.1} parent=111 // pred_check_branch
          %4028 = sbr.rel (%p4026) target = $region116
        $region115: #{tpu_custom_call.1} parent=111 // pred_region
          %s4029 = sand.u32 %s490, 1
          %s4030 = scalar_lea.sflag [#allocation3], %s4029
          %s4031 = sand.u32 %s490, 1
          %s4032 = smul.addr %s4031, 8
          %s4033 = scalar_lea.vmem [#allocation2], %s4032
          %4034 = dma.done %s4030, 128
        $region116: #{tpu_custom_call.1} parent=111 // pred_fallthru
          _
      $region112: #{tpu_custom_call.1} parent=5 // pred_fallthru
        _
    $region6: #{tpu_custom_call.1} parent=1 // loop_footer
      %s34 = sadd.s32 1, %s30
    $region7: #{tpu_custom_call.1} parent=1 // loop_footer_branch
      %29 = sbr.rel target = $region3
    $region8: #{tpu_custom_call.1} parent=1 // loop_exit
      _
    %4035 = vsyncpa [#allocation3], 1
    %s4036 = scalar_lea.sflag [#allocation3], 1
    %4037 = vsyncpa %s4036, 1

</llo_original>
